<compile_context>
chip_gen: v7x
topology: tpu7x:2x2x1
jax: 0.10.0
libtpu: 0.0.40
codegen_flags: <defaults>
</compile_context>

<pallas_src>
import math

import jax
import jax.numpy as jnp
import numpy as np
from jax import lax
from jax.experimental import pallas as pl
from jax.experimental.pallas import tpu as pltpu


# -----------------------------------------------------------------------------
# Parameter preparation (PyTorch Linear convention W: (out, in), y = x @ W^T + b)
#   - pre-transpose every weight (pass W^T so the kernel does x @ W directly)
#   - fold the 1/sqrt(head_dim) attention scale into Wq and bq
#   - cast weights to bf16 (MXU inputs), keep biases in f32
# -----------------------------------------------------------------------------
def prepare_decoder_params(layer_params, num_heads, weight_dtype=jnp.bfloat16):
    depth = len(layer_params)
    E = layer_params[0][0].shape[0]
    assert E % num_heads == 0
    scale = 1.0 / math.sqrt(E // num_heads)

    wqT = jnp.stack([jnp.asarray(p[0]).T * scale for p in layer_params]).astype(weight_dtype)
    bq = jnp.stack([jnp.asarray(p[1]) * scale for p in layer_params]).astype(jnp.float32)
    wkT = jnp.stack([jnp.asarray(p[2]).T for p in layer_params]).astype(weight_dtype)
    bk = jnp.stack([jnp.asarray(p[3]) for p in layer_params]).astype(jnp.float32)
    wvT = jnp.stack([jnp.asarray(p[4]).T for p in layer_params]).astype(weight_dtype)
    bv = jnp.stack([jnp.asarray(p[5]) for p in layer_params]).astype(jnp.float32)
    woT = jnp.stack([jnp.asarray(p[6]).T for p in layer_params]).astype(weight_dtype)
    bo = jnp.stack([jnp.asarray(p[7]) for p in layer_params]).astype(jnp.float32)

    return (wqT, bq.reshape(depth, 1, E), wkT, bk.reshape(depth, 1, E),
            wvT, bv.reshape(depth, 1, E), woT, bo.reshape(depth, 1, E))


# -----------------------------------------------------------------------------
# Depth-fused decoder kernel: one batch element per grid step, all layers and
# all heads computed inside the kernel. No transposes / reshapes / concats /
# value slices -> nothing for Mosaic to relayout.
# -----------------------------------------------------------------------------
def _make_decoder_kernel(depth, num_heads, head_dim, has_xpos, has_mpos, has_mask):
    bf16 = jnp.bfloat16
    f32 = jnp.float32

    def kernel(*refs):
        i = 0
        x_ref = refs[i]; i += 1
        xpos_ref = None
        if has_xpos:
            xpos_ref = refs[i]; i += 1
        mem_ref = refs[i]; i += 1
        mpos_ref = None
        if has_mpos:
            mpos_ref = refs[i]; i += 1
        bias_ref = None
        if has_mask:
            bias_ref = refs[i]; i += 1
        wq_ref, bq_ref, wk_ref, bk_ref, wv_ref, bv_ref, wo_ref, bo_ref = refs[i:i + 8]
        out_ref = refs[i + 8]

        # ---- layer-invariant prep (hoisted out of the depth loop) ----
        cur = x_ref[0]                                    # (L, E) f32, lives in vregs
        xpos = xpos_ref[0] if has_xpos else None          # (L, E) f32
        k_in = mem_ref[0]                                 # (S, E) f32
        if has_mpos:
            k_in = k_in + mpos_ref[0]
        kb = k_in.astype(bf16)                            # (S, E) bf16
        vb = mem_ref[0].astype(bf16)                      # (S, E) bf16
        bias = bias_ref[0] if has_mask else None          # (1, S) f32, additive -1e30

        for d in range(depth):                            # static unroll over layers
            q_in = cur + xpos if has_xpos else cur
            qb = q_in.astype(bf16)                        # (L, E) bf16
            out = jnp.zeros_like(cur)                     # (L, E) f32 accumulator

            for h in range(num_heads):                    # static unroll over heads
                lo = h * head_dim
                hi = lo + head_dim
                # per-head projections via static ref slices of the pre-transposed
                # (and pre-scaled, for Q) bf16 weights -> bf16 MXU matmuls, f32 acc
                q_h = jnp.dot(qb, wq_ref[d, :, lo:hi],
                              preferred_element_type=f32) + bq_ref[d, :, lo:hi]   # (L, D)
                k_h = jnp.dot(kb, wk_ref[d, :, lo:hi],
                              preferred_element_type=f32) + bk_ref[d, :, lo:hi]   # (S, D)
                v_h = jnp.dot(vb, wv_ref[d, :, lo:hi],
                              preferred_element_type=f32) + bv_ref[d, :, lo:hi]   # (S, D)

                # scores: contract head_dim of both operands (no explicit .T)
                s = lax.dot_general(q_h.astype(bf16), k_h.astype(bf16),
                                    dimension_numbers=(((1,), (1,)), ((), ())),
                                    preferred_element_type=f32)                   # (L, S)
                if has_mask:
                    s = s + bias                          # additive key-padding bias

                # f32 softmax (numerically safe even for fully-masked rows)
                p = jnp.exp(s - jnp.max(s, axis=-1, keepdims=True))
                p = p / jnp.sum(p, axis=-1, keepdims=True)

                o_h = jnp.dot(p.astype(bf16), v_h.astype(bf16),
                              preferred_element_type=f32)                         # (L, D)
                # fold head merge into the output projection (no concatenate):
                out = out + jnp.dot(o_h.astype(bf16), wo_ref[d, lo:hi, :],
                                    preferred_element_type=f32)                   # (L, E)

            out = out + bo_ref[d, 0]
            out_ref[0, d] = out.astype(out_ref.dtype)     # per-layer output
            cur = out                                     # chain to next layer (stays on-chip)

    return kernel


def _decoder_pallas(x_bf, xpos_bf, mem_bf, mpos_bf, bias, prep, num_heads, depth):
    """x_bf:(B,L,E)  mem_bf:(B,S,E)  bias:(B,1,S) or None  ->  (B, depth, L, E)"""
    B, L, E = x_bf.shape
    S = mem_bf.shape[1]
    D = E // num_heads

    has_xpos = xpos_bf is not None
    has_mpos = mpos_bf is not None
    has_mask = bias is not None

    inputs = [x_bf]
    in_specs = [pl.BlockSpec((1, L, E), lambda b: (b, 0, 0))]
    if has_xpos:
        inputs.append(xpos_bf)
        in_specs.append(pl.BlockSpec((1, L, E), lambda b: (b, 0, 0)))
    inputs.append(mem_bf)
    in_specs.append(pl.BlockSpec((1, S, E), lambda b: (b, 0, 0)))
    if has_mpos:
        inputs.append(mpos_bf)
        in_specs.append(pl.BlockSpec((1, S, E), lambda b: (b, 0, 0)))
    if has_mask:
        inputs.append(bias)
        in_specs.append(pl.BlockSpec((1, 1, S), lambda b: (b, 0, 0)))

    # Stacked per-layer weights/biases; constant index maps -> DMA'd once
    # (block index never changes across the batch grid). At this E (32) the
    # default double-buffering of these tiny blocks is negligible; at large E
    # they could additionally be marked pipeline_mode=pl.Buffered(1).
    for w in prep:
        inputs.append(w)
        in_specs.append(pl.BlockSpec(w.shape, lambda b: (0, 0, 0)))

    kernel = _make_decoder_kernel(depth, num_heads, D, has_xpos, has_mpos, has_mask)

    return pl.pallas_call(
        kernel,
        out_shape=jax.ShapeDtypeStruct((B, depth, L, E), jnp.float32),
        grid=(B,),
        in_specs=in_specs,
        out_specs=pl.BlockSpec((1, depth, L, E), lambda b: (b, 0, 0, 0)),
        compiler_params=pltpu.CompilerParams(dimension_semantics=("parallel",)),
    )(*inputs)


# -----------------------------------------------------------------------------
# Decoder wrapper (seq-first API, like the PyTorch module)
# -----------------------------------------------------------------------------
def decoder_forward(x, mem, layer_params, num_heads,
                    x_pos=None, mem_pos=None, mem_mask=None):
    L, B, E = x.shape
    depth = len(layer_params)
    prep = prepare_decoder_params(layer_params, num_heads)

    x_bf = jnp.transpose(x, (1, 0, 2)).astype(jnp.float32)
    mem_bf = jnp.transpose(mem, (1, 0, 2)).astype(jnp.float32)
    xpos_bf = None if x_pos is None else jnp.transpose(x_pos, (1, 0, 2)).astype(jnp.float32)
    mpos_bf = None if mem_pos is None else jnp.transpose(mem_pos, (1, 0, 2)).astype(jnp.float32)
    bias = None if mem_mask is None else \
        jnp.where(mem_mask, -1e30, 0.0).astype(jnp.float32)[:, None, :]      # (B,1,S)

    out = _decoder_pallas(x_bf, xpos_bf, mem_bf, mpos_bf, bias, prep, num_heads, depth)
    # (B, depth, L, E) -> list of depth arrays, each (L, B, E)
    return [jnp.transpose(out[:, d], (1, 0, 2)) for d in range(depth)]


# -----------------------------------------------------------------------------
# Pure-JAX reference: same math at the same precision (pre-transposed +
# scale-folded bf16 weights, bf16 matmul inputs, f32 accumulation & softmax).
# -----------------------------------------------------------------------------
def _ref_decoder(x, mem, layer_params, num_heads,
                 x_pos=None, mem_pos=None, mem_mask=None):
    bf16, f32 = jnp.bfloat16, jnp.float32
    wqT, bq, wkT, bk, wvT, bv, woT, bo = prepare_decoder_params(layer_params, num_heads)
    depth = wqT.shape[0]
    E = x.shape[-1]
    D = E // num_heads

    cur = jnp.transpose(x, (1, 0, 2)).astype(f32)            # (B, L, E)
    memb = jnp.transpose(mem, (1, 0, 2)).astype(f32)         # (B, S, E)
    xpos = None if x_pos is None else jnp.transpose(x_pos, (1, 0, 2)).astype(f32)
    k_in = memb if mem_pos is None else memb + jnp.transpose(mem_pos, (1, 0, 2)).astype(f32)
    kb, vb = k_in.astype(bf16), memb.astype(bf16)
    bias = None if mem_mask is None else \
        jnp.where(mem_mask, -1e30, 0.0).astype(f32)[:, None, :]

    res = []
    for d in range(depth):
        q_in = cur if xpos is None else cur + xpos
        qb = q_in.astype(bf16)
        out = jnp.zeros_like(cur)
        for h in range(num_heads):
            lo, hi = h * D, (h + 1) * D
            q_h = jnp.einsum("ble,ed->bld", qb, wqT[d, :, lo:hi],
                             preferred_element_type=f32) + bq[d, :, lo:hi]
            k_h = jnp.einsum("bse,ed->bsd", kb, wkT[d, :, lo:hi],
                             preferred_element_type=f32) + bk[d, :, lo:hi]
            v_h = jnp.einsum("bse,ed->bsd", vb, wvT[d, :, lo:hi],
                             preferred_element_type=f32) + bv[d, :, lo:hi]
            s = jnp.einsum("bld,bsd->bls", q_h.astype(bf16), k_h.astype(bf16),
                           preferred_element_type=f32)
            if bias is not None:
                s = s + bias
            p = jnp.exp(s - jnp.max(s, axis=-1, keepdims=True))
            p = p / jnp.sum(p, axis=-1, keepdims=True)
            o_h = jnp.einsum("bls,bsd->bld", p.astype(bf16), v_h.astype(bf16),
                             preferred_element_type=f32)
            out = out + jnp.einsum("bld,de->ble", o_h.astype(bf16), woT[d, lo:hi, :],
                                   preferred_element_type=f32)
        out = out + bo[d, :, :]
        res.append(jnp.transpose(out, (1, 0, 2)))
        cur = out
    return res


# -----------------------------------------------------------------------------
if __name__ == "__main__":
    L, S, B, E, H, DEPTH = 8, 16, 2, 32, 4, 2

    key = jax.random.PRNGKey(0)
    ks = jax.random.split(key, 12)

    x = jax.random.normal(ks[0], (L, B, E), jnp.float32)
    mem = jax.random.normal(ks[1], (S, B, E), jnp.float32)
    x_pos = 0.1 * jax.random.normal(ks[2], (L, B, E), jnp.float32)
    mem_pos = 0.1 * jax.random.normal(ks[3], (S, B, E), jnp.float32)
    # key padding mask: batch 0 unmasked, batch 1 has last 3 keys padded
    mem_mask = jnp.zeros((B, S), bool).at[1, S - 3:].set(True)

    # Deterministic synthetic weights for one MultiheadAttention layer.
    scale = 1.0 / math.sqrt(E)
    params = (
        scale * jax.random.normal(ks[4], (E, E), jnp.float32),   # Wq
        0.01 * jax.random.normal(ks[5], (E,), jnp.float32),      # bq
        scale * jax.random.normal(ks[6], (E, E), jnp.float32),   # Wk
        0.01 * jax.random.normal(ks[7], (E,), jnp.float32),      # bk
        scale * jax.random.normal(ks[8], (E, E), jnp.float32),   # Wv
        0.01 * jax.random.normal(ks[9], (E,), jnp.float32),      # bv
        scale * jax.random.normal(ks[10], (E, E), jnp.float32),  # Wo
        0.01 * jax.random.normal(ks[11], (E,), jnp.float32),     # bo
    )
    # get_clones() deep-copies the same layer -> identical weights per depth.
    layer_params = [params] * DEPTH

    res = decoder_forward(x, mem, layer_params, H,
                          x_pos=x_pos, mem_pos=mem_pos, mem_mask=mem_mask)
    res = [jax.block_until_ready(r) for r in res]

    ref = _ref_decoder(x, mem, layer_params, H,
                       x_pos=x_pos, mem_pos=mem_pos, mem_mask=mem_mask)
    for got, want in zip(res, ref):
        np.testing.assert_allclose(np.asarray(got), np.asarray(want),
                                   rtol=2e-3, atol=2e-3)

    print("KERNEL_OK")
</pallas_src>

<mosaic_0001>
module attributes {stable_mosaic.version = 11 : i64} {
  func.func @kernel(%arg0: i32, %arg1: memref<1x8x32xf32, #tpu.memory_space<vmem>>, %arg2: memref<1x8x32xf32, #tpu.memory_space<vmem>>, %arg3: memref<1x16x32xf32, #tpu.memory_space<vmem>>, %arg4: memref<1x16x32xf32, #tpu.memory_space<vmem>>, %arg5: memref<1x1x16xf32, #tpu.memory_space<vmem>>, %arg6: memref<2x32x32xbf16, #tpu.memory_space<vmem>>, %arg7: memref<2x1x32xf32, #tpu.memory_space<vmem>>, %arg8: memref<2x32x32xbf16, #tpu.memory_space<vmem>>, %arg9: memref<2x1x32xf32, #tpu.memory_space<vmem>>, %arg10: memref<2x32x32xbf16, #tpu.memory_space<vmem>>, %arg11: memref<2x1x32xf32, #tpu.memory_space<vmem>>, %arg12: memref<2x32x32xbf16, #tpu.memory_space<vmem>>, %arg13: memref<2x1x32xf32, #tpu.memory_space<vmem>>, %arg14: memref<1x2x8x32xf32, #tpu.memory_space<vmem>>) attributes {dimension_semantics = [#tpu.dimension_semantics<parallel>], iteration_bounds = array<i64: 2>, scalar_prefetch = 0 : i64, scratch_operands = 0 : i64, tpu.core_type = #tpu.core_type<tc>, window_params = [{transform_indices = @transform_0, window_bounds = array<i64: 1, 8, 32>}, {transform_indices = @transform_1, window_bounds = array<i64: 1, 8, 32>}, {transform_indices = @transform_2, window_bounds = array<i64: 1, 16, 32>}, {transform_indices = @transform_3, window_bounds = array<i64: 1, 16, 32>}, {transform_indices = @transform_4, window_bounds = array<i64: 1, 1, 16>}, {pipeline_mode = #tpu.pipeline_mode<synchronous>, transform_indices = @transform_5, window_bounds = array<i64: 2, 32, 32>}, {pipeline_mode = #tpu.pipeline_mode<synchronous>, transform_indices = @transform_6, window_bounds = array<i64: 2, 1, 32>}, {pipeline_mode = #tpu.pipeline_mode<synchronous>, transform_indices = @transform_7, window_bounds = array<i64: 2, 32, 32>}, {pipeline_mode = #tpu.pipeline_mode<synchronous>, transform_indices = @transform_8, window_bounds = array<i64: 2, 1, 32>}, {pipeline_mode = #tpu.pipeline_mode<synchronous>, transform_indices = @transform_9, window_bounds = array<i64: 2, 32, 32>}, {pipeline_mode = #tpu.pipeline_mode<synchronous>, transform_indices = @transform_10, window_bounds = array<i64: 2, 1, 32>}, {pipeline_mode = #tpu.pipeline_mode<synchronous>, transform_indices = @transform_11, window_bounds = array<i64: 2, 32, 32>}, {pipeline_mode = #tpu.pipeline_mode<synchronous>, transform_indices = @transform_12, window_bounds = array<i64: 2, 1, 32>}, {transform_indices = @transform_13, window_bounds = array<i64: 1, 2, 8, 32>}]} {
    %c0 = arith.constant 0 : index
    %c0_0 = arith.constant 0 : index
    %c0_1 = arith.constant 0 : index
    %0 = vector.load %arg1[%c0, %c0_0, %c0_1] : memref<1x8x32xf32, #tpu.memory_space<vmem>>, vector<1x8x32xf32>
    %1 = vector.shape_cast %0 : vector<1x8x32xf32> to vector<8x32xf32>
    %c0_2 = arith.constant 0 : index
    %c0_3 = arith.constant 0 : index
    %c0_4 = arith.constant 0 : index
    %2 = vector.load %arg2[%c0_2, %c0_3, %c0_4] : memref<1x8x32xf32, #tpu.memory_space<vmem>>, vector<1x8x32xf32>
    %3 = vector.shape_cast %2 : vector<1x8x32xf32> to vector<8x32xf32>
    %c0_5 = arith.constant 0 : index
    %c0_6 = arith.constant 0 : index
    %c0_7 = arith.constant 0 : index
    %4 = vector.load %arg3[%c0_5, %c0_6, %c0_7] : memref<1x16x32xf32, #tpu.memory_space<vmem>>, vector<1x16x32xf32>
    %5 = vector.shape_cast %4 : vector<1x16x32xf32> to vector<16x32xf32>
    %c0_8 = arith.constant 0 : index
    %c0_9 = arith.constant 0 : index
    %c0_10 = arith.constant 0 : index
    %6 = vector.load %arg4[%c0_8, %c0_9, %c0_10] : memref<1x16x32xf32, #tpu.memory_space<vmem>>, vector<1x16x32xf32>
    %7 = vector.shape_cast %6 : vector<1x16x32xf32> to vector<16x32xf32>
    %8 = arith.addf %5, %7 : vector<16x32xf32>
    %9 = arith.truncf %8 : vector<16x32xf32> to vector<16x32xbf16>
    %c0_11 = arith.constant 0 : index
    %c0_12 = arith.constant 0 : index
    %c0_13 = arith.constant 0 : index
    %10 = vector.load %arg3[%c0_11, %c0_12, %c0_13] : memref<1x16x32xf32, #tpu.memory_space<vmem>>, vector<1x16x32xf32>
    %11 = vector.shape_cast %10 : vector<1x16x32xf32> to vector<16x32xf32>
    %12 = arith.truncf %11 : vector<16x32xf32> to vector<16x32xbf16>
    %c0_14 = arith.constant 0 : index
    %c0_15 = arith.constant 0 : index
    %c0_16 = arith.constant 0 : index
    %13 = vector.load %arg5[%c0_14, %c0_15, %c0_16] : memref<1x1x16xf32, #tpu.memory_space<vmem>>, vector<1x1x16xf32>
    %14 = vector.shape_cast %13 : vector<1x1x16xf32> to vector<1x16xf32>
    %15 = arith.addf %1, %3 : vector<8x32xf32>
    %16 = arith.truncf %15 : vector<8x32xf32> to vector<8x32xbf16>
    %cst = arith.constant 0.000000e+00 : f32
    %17 = vector.broadcast %cst : f32 to vector<8x32xf32>
    %c0_17 = arith.constant 0 : index
    %c0_18 = arith.constant 0 : index
    %c0_19 = arith.constant 0 : index
    %18 = vector.load %arg6[%c0_17, %c0_18, %c0_19] : memref<2x32x32xbf16, #tpu.memory_space<vmem>>, vector<1x32x8xbf16>
    %19 = vector.shape_cast %18 : vector<1x32x8xbf16> to vector<32x8xbf16>
    %cst_20 = arith.constant dense<0.000000e+00> : vector<8x8xf32>
    %20 = tpu.matmul %16, %19, %cst_20 {dimension_numbers = #tpu.dot_dimension_numbers<[1], [0], [0], [1], [0, 0, 1, 1], [], []>} : vector<8x32xbf16>, vector<32x8xbf16>, vector<8x8xf32> -> vector<8x8xf32>
    %c0_21 = arith.constant 0 : index
    %c0_22 = arith.constant 0 : index
    %c0_23 = arith.constant 0 : index
    %21 = vector.load %arg7[%c0_21, %c0_22, %c0_23] : memref<2x1x32xf32, #tpu.memory_space<vmem>>, vector<1x1x8xf32>
    %22 = vector.shape_cast %21 : vector<1x1x8xf32> to vector<1x8xf32>
    %23 = vector.broadcast %22 : vector<1x8xf32> to vector<8x8xf32>
    %24 = arith.addf %20, %23 : vector<8x8xf32>
    %c0_24 = arith.constant 0 : index
    %c0_25 = arith.constant 0 : index
    %c0_26 = arith.constant 0 : index
    %25 = vector.load %arg8[%c0_24, %c0_25, %c0_26] : memref<2x32x32xbf16, #tpu.memory_space<vmem>>, vector<1x32x8xbf16>
    %26 = vector.shape_cast %25 : vector<1x32x8xbf16> to vector<32x8xbf16>
    %cst_27 = arith.constant dense<0.000000e+00> : vector<16x8xf32>
    %27 = tpu.matmul %9, %26, %cst_27 {dimension_numbers = #tpu.dot_dimension_numbers<[1], [0], [0], [1], [0, 0, 1, 1], [], []>} : vector<16x32xbf16>, vector<32x8xbf16>, vector<16x8xf32> -> vector<16x8xf32>
    %c0_28 = arith.constant 0 : index
    %c0_29 = arith.constant 0 : index
    %c0_30 = arith.constant 0 : index
    %28 = vector.load %arg9[%c0_28, %c0_29, %c0_30] : memref<2x1x32xf32, #tpu.memory_space<vmem>>, vector<1x1x8xf32>
    %29 = vector.shape_cast %28 : vector<1x1x8xf32> to vector<1x8xf32>
    %30 = vector.broadcast %29 : vector<1x8xf32> to vector<16x8xf32>
    %31 = arith.addf %27, %30 : vector<16x8xf32>
    %c0_31 = arith.constant 0 : index
    %c0_32 = arith.constant 0 : index
    %c0_33 = arith.constant 0 : index
    %32 = vector.load %arg10[%c0_31, %c0_32, %c0_33] : memref<2x32x32xbf16, #tpu.memory_space<vmem>>, vector<1x32x8xbf16>
    %33 = vector.shape_cast %32 : vector<1x32x8xbf16> to vector<32x8xbf16>
    %cst_34 = arith.constant dense<0.000000e+00> : vector<16x8xf32>
    %34 = tpu.matmul %12, %33, %cst_34 {dimension_numbers = #tpu.dot_dimension_numbers<[1], [0], [0], [1], [0, 0, 1, 1], [], []>} : vector<16x32xbf16>, vector<32x8xbf16>, vector<16x8xf32> -> vector<16x8xf32>
    %c0_35 = arith.constant 0 : index
    %c0_36 = arith.constant 0 : index
    %c0_37 = arith.constant 0 : index
    %35 = vector.load %arg11[%c0_35, %c0_36, %c0_37] : memref<2x1x32xf32, #tpu.memory_space<vmem>>, vector<1x1x8xf32>
    %36 = vector.shape_cast %35 : vector<1x1x8xf32> to vector<1x8xf32>
    %37 = vector.broadcast %36 : vector<1x8xf32> to vector<16x8xf32>
    %38 = arith.addf %34, %37 : vector<16x8xf32>
    %39 = arith.truncf %24 : vector<8x8xf32> to vector<8x8xbf16>
    %40 = arith.truncf %31 : vector<16x8xf32> to vector<16x8xbf16>
    %cst_38 = arith.constant dense<0.000000e+00> : vector<8x16xf32>
    %41 = tpu.matmul %39, %40, %cst_38 {dimension_numbers = #tpu.dot_dimension_numbers<[1], [1], [0], [0], [0, 0, 1, 0], [], []>} : vector<8x8xbf16>, vector<16x8xbf16>, vector<8x16xf32> -> vector<8x16xf32>
    %42 = vector.broadcast %14 : vector<1x16xf32> to vector<8x16xf32>
    %43 = arith.addf %41, %42 : vector<8x16xf32>
    %cst_39 = arith.constant dense<0xFF800000> : vector<8xf32>
    %44 = vector.multi_reduction <maximumf>, %43, %cst_39 [1] : vector<8x16xf32> to vector<8xf32>
    %45 = vector.shape_cast %44 : vector<8xf32> to vector<8x1xf32>
    %46 = vector.broadcast %45 : vector<8x1xf32> to vector<8x16xf32>
    %47 = arith.subf %43, %46 : vector<8x16xf32>
    %48 = math.exp %47 : vector<8x16xf32>
    %cst_40 = arith.constant dense<0.000000e+00> : vector<8xf32>
    %49 = vector.multi_reduction <add>, %48, %cst_40 [1] : vector<8x16xf32> to vector<8xf32>
    %50 = vector.shape_cast %49 : vector<8xf32> to vector<8x1xf32>
    %51 = vector.broadcast %50 : vector<8x1xf32> to vector<8x16xf32>
    %52 = arith.divf %48, %51 : vector<8x16xf32>
    %53 = arith.truncf %52 : vector<8x16xf32> to vector<8x16xbf16>
    %54 = arith.truncf %38 : vector<16x8xf32> to vector<16x8xbf16>
    %cst_41 = arith.constant dense<0.000000e+00> : vector<8x8xf32>
    %55 = tpu.matmul %53, %54, %cst_41 {dimension_numbers = #tpu.dot_dimension_numbers<[1], [0], [0], [1], [0, 0, 1, 1], [], []>} : vector<8x16xbf16>, vector<16x8xbf16>, vector<8x8xf32> -> vector<8x8xf32>
    %56 = arith.truncf %55 : vector<8x8xf32> to vector<8x8xbf16>
    %c0_42 = arith.constant 0 : index
    %c0_43 = arith.constant 0 : index
    %c0_44 = arith.constant 0 : index
    %57 = vector.load %arg12[%c0_42, %c0_43, %c0_44] : memref<2x32x32xbf16, #tpu.memory_space<vmem>>, vector<1x8x32xbf16>
    %58 = vector.shape_cast %57 : vector<1x8x32xbf16> to vector<8x32xbf16>
    %cst_45 = arith.constant dense<0.000000e+00> : vector<8x32xf32>
    %59 = tpu.matmul %56, %58, %cst_45 {dimension_numbers = #tpu.dot_dimension_numbers<[1], [0], [0], [1], [0, 0, 1, 1], [], []>} : vector<8x8xbf16>, vector<8x32xbf16>, vector<8x32xf32> -> vector<8x32xf32>
    %60 = arith.addf %17, %59 : vector<8x32xf32>
    %c0_46 = arith.constant 0 : index
    %c0_47 = arith.constant 0 : index
    %c8 = arith.constant 8 : index
    %61 = vector.load %arg6[%c0_46, %c0_47, %c8] : memref<2x32x32xbf16, #tpu.memory_space<vmem>>, vector<1x32x8xbf16>
    %62 = vector.shape_cast %61 : vector<1x32x8xbf16> to vector<32x8xbf16>
    %cst_48 = arith.constant dense<0.000000e+00> : vector<8x8xf32>
    %63 = tpu.matmul %16, %62, %cst_48 {dimension_numbers = #tpu.dot_dimension_numbers<[1], [0], [0], [1], [0, 0, 1, 1], [], []>} : vector<8x32xbf16>, vector<32x8xbf16>, vector<8x8xf32> -> vector<8x8xf32>
    %c0_49 = arith.constant 0 : index
    %c0_50 = arith.constant 0 : index
    %c8_51 = arith.constant 8 : index
    %64 = vector.load %arg7[%c0_49, %c0_50, %c8_51] : memref<2x1x32xf32, #tpu.memory_space<vmem>>, vector<1x1x8xf32>
    %65 = vector.shape_cast %64 : vector<1x1x8xf32> to vector<1x8xf32>
    %66 = vector.broadcast %65 : vector<1x8xf32> to vector<8x8xf32>
    %67 = arith.addf %63, %66 : vector<8x8xf32>
    %c0_52 = arith.constant 0 : index
    %c0_53 = arith.constant 0 : index
    %c8_54 = arith.constant 8 : index
    %68 = vector.load %arg8[%c0_52, %c0_53, %c8_54] : memref<2x32x32xbf16, #tpu.memory_space<vmem>>, vector<1x32x8xbf16>
    %69 = vector.shape_cast %68 : vector<1x32x8xbf16> to vector<32x8xbf16>
    %cst_55 = arith.constant dense<0.000000e+00> : vector<16x8xf32>
    %70 = tpu.matmul %9, %69, %cst_55 {dimension_numbers = #tpu.dot_dimension_numbers<[1], [0], [0], [1], [0, 0, 1, 1], [], []>} : vector<16x32xbf16>, vector<32x8xbf16>, vector<16x8xf32> -> vector<16x8xf32>
    %c0_56 = arith.constant 0 : index
    %c0_57 = arith.constant 0 : index
    %c8_58 = arith.constant 8 : index
    %71 = vector.load %arg9[%c0_56, %c0_57, %c8_58] : memref<2x1x32xf32, #tpu.memory_space<vmem>>, vector<1x1x8xf32>
    %72 = vector.shape_cast %71 : vector<1x1x8xf32> to vector<1x8xf32>
    %73 = vector.broadcast %72 : vector<1x8xf32> to vector<16x8xf32>
    %74 = arith.addf %70, %73 : vector<16x8xf32>
    %c0_59 = arith.constant 0 : index
    %c0_60 = arith.constant 0 : index
    %c8_61 = arith.constant 8 : index
    %75 = vector.load %arg10[%c0_59, %c0_60, %c8_61] : memref<2x32x32xbf16, #tpu.memory_space<vmem>>, vector<1x32x8xbf16>
    %76 = vector.shape_cast %75 : vector<1x32x8xbf16> to vector<32x8xbf16>
    %cst_62 = arith.constant dense<0.000000e+00> : vector<16x8xf32>
    %77 = tpu.matmul %12, %76, %cst_62 {dimension_numbers = #tpu.dot_dimension_numbers<[1], [0], [0], [1], [0, 0, 1, 1], [], []>} : vector<16x32xbf16>, vector<32x8xbf16>, vector<16x8xf32> -> vector<16x8xf32>
    %c0_63 = arith.constant 0 : index
    %c0_64 = arith.constant 0 : index
    %c8_65 = arith.constant 8 : index
    %78 = vector.load %arg11[%c0_63, %c0_64, %c8_65] : memref<2x1x32xf32, #tpu.memory_space<vmem>>, vector<1x1x8xf32>
    %79 = vector.shape_cast %78 : vector<1x1x8xf32> to vector<1x8xf32>
    %80 = vector.broadcast %79 : vector<1x8xf32> to vector<16x8xf32>
    %81 = arith.addf %77, %80 : vector<16x8xf32>
    %82 = arith.truncf %67 : vector<8x8xf32> to vector<8x8xbf16>
    %83 = arith.truncf %74 : vector<16x8xf32> to vector<16x8xbf16>
    %cst_66 = arith.constant dense<0.000000e+00> : vector<8x16xf32>
    %84 = tpu.matmul %82, %83, %cst_66 {dimension_numbers = #tpu.dot_dimension_numbers<[1], [1], [0], [0], [0, 0, 1, 0], [], []>} : vector<8x8xbf16>, vector<16x8xbf16>, vector<8x16xf32> -> vector<8x16xf32>
    %85 = vector.broadcast %14 : vector<1x16xf32> to vector<8x16xf32>
    %86 = arith.addf %84, %85 : vector<8x16xf32>
    %cst_67 = arith.constant dense<0xFF800000> : vector<8xf32>
    %87 = vector.multi_reduction <maximumf>, %86, %cst_67 [1] : vector<8x16xf32> to vector<8xf32>
    %88 = vector.shape_cast %87 : vector<8xf32> to vector<8x1xf32>
    %89 = vector.broadcast %88 : vector<8x1xf32> to vector<8x16xf32>
    %90 = arith.subf %86, %89 : vector<8x16xf32>
    %91 = math.exp %90 : vector<8x16xf32>
    %cst_68 = arith.constant dense<0.000000e+00> : vector<8xf32>
    %92 = vector.multi_reduction <add>, %91, %cst_68 [1] : vector<8x16xf32> to vector<8xf32>
    %93 = vector.shape_cast %92 : vector<8xf32> to vector<8x1xf32>
    %94 = vector.broadcast %93 : vector<8x1xf32> to vector<8x16xf32>
    %95 = arith.divf %91, %94 : vector<8x16xf32>
    %96 = arith.truncf %95 : vector<8x16xf32> to vector<8x16xbf16>
    %97 = arith.truncf %81 : vector<16x8xf32> to vector<16x8xbf16>
    %cst_69 = arith.constant dense<0.000000e+00> : vector<8x8xf32>
    %98 = tpu.matmul %96, %97, %cst_69 {dimension_numbers = #tpu.dot_dimension_numbers<[1], [0], [0], [1], [0, 0, 1, 1], [], []>} : vector<8x16xbf16>, vector<16x8xbf16>, vector<8x8xf32> -> vector<8x8xf32>
    %99 = arith.truncf %98 : vector<8x8xf32> to vector<8x8xbf16>
    %c0_70 = arith.constant 0 : index
    %c8_71 = arith.constant 8 : index
    %c0_72 = arith.constant 0 : index
    %100 = vector.load %arg12[%c0_70, %c8_71, %c0_72] : memref<2x32x32xbf16, #tpu.memory_space<vmem>>, vector<1x8x32xbf16>
    %101 = vector.shape_cast %100 : vector<1x8x32xbf16> to vector<8x32xbf16>
    %cst_73 = arith.constant dense<0.000000e+00> : vector<8x32xf32>
    %102 = tpu.matmul %99, %101, %cst_73 {dimension_numbers = #tpu.dot_dimension_numbers<[1], [0], [0], [1], [0, 0, 1, 1], [], []>} : vector<8x8xbf16>, vector<8x32xbf16>, vector<8x32xf32> -> vector<8x32xf32>
    %103 = arith.addf %60, %102 : vector<8x32xf32>
    %c0_74 = arith.constant 0 : index
    %c0_75 = arith.constant 0 : index
    %c16 = arith.constant 16 : index
    %104 = vector.load %arg6[%c0_74, %c0_75, %c16] : memref<2x32x32xbf16, #tpu.memory_space<vmem>>, vector<1x32x8xbf16>
    %105 = vector.shape_cast %104 : vector<1x32x8xbf16> to vector<32x8xbf16>
    %cst_76 = arith.constant dense<0.000000e+00> : vector<8x8xf32>
    %106 = tpu.matmul %16, %105, %cst_76 {dimension_numbers = #tpu.dot_dimension_numbers<[1], [0], [0], [1], [0, 0, 1, 1], [], []>} : vector<8x32xbf16>, vector<32x8xbf16>, vector<8x8xf32> -> vector<8x8xf32>
    %c0_77 = arith.constant 0 : index
    %c0_78 = arith.constant 0 : index
    %c16_79 = arith.constant 16 : index
    %107 = vector.load %arg7[%c0_77, %c0_78, %c16_79] : memref<2x1x32xf32, #tpu.memory_space<vmem>>, vector<1x1x8xf32>
    %108 = vector.shape_cast %107 : vector<1x1x8xf32> to vector<1x8xf32>
    %109 = vector.broadcast %108 : vector<1x8xf32> to vector<8x8xf32>
    %110 = arith.addf %106, %109 : vector<8x8xf32>
    %c0_80 = arith.constant 0 : index
    %c0_81 = arith.constant 0 : index
    %c16_82 = arith.constant 16 : index
    %111 = vector.load %arg8[%c0_80, %c0_81, %c16_82] : memref<2x32x32xbf16, #tpu.memory_space<vmem>>, vector<1x32x8xbf16>
    %112 = vector.shape_cast %111 : vector<1x32x8xbf16> to vector<32x8xbf16>
    %cst_83 = arith.constant dense<0.000000e+00> : vector<16x8xf32>
    %113 = tpu.matmul %9, %112, %cst_83 {dimension_numbers = #tpu.dot_dimension_numbers<[1], [0], [0], [1], [0, 0, 1, 1], [], []>} : vector<16x32xbf16>, vector<32x8xbf16>, vector<16x8xf32> -> vector<16x8xf32>
    %c0_84 = arith.constant 0 : index
    %c0_85 = arith.constant 0 : index
    %c16_86 = arith.constant 16 : index
    %114 = vector.load %arg9[%c0_84, %c0_85, %c16_86] : memref<2x1x32xf32, #tpu.memory_space<vmem>>, vector<1x1x8xf32>
    %115 = vector.shape_cast %114 : vector<1x1x8xf32> to vector<1x8xf32>
    %116 = vector.broadcast %115 : vector<1x8xf32> to vector<16x8xf32>
    %117 = arith.addf %113, %116 : vector<16x8xf32>
    %c0_87 = arith.constant 0 : index
    %c0_88 = arith.constant 0 : index
    %c16_89 = arith.constant 16 : index
    %118 = vector.load %arg10[%c0_87, %c0_88, %c16_89] : memref<2x32x32xbf16, #tpu.memory_space<vmem>>, vector<1x32x8xbf16>
    %119 = vector.shape_cast %118 : vector<1x32x8xbf16> to vector<32x8xbf16>
    %cst_90 = arith.constant dense<0.000000e+00> : vector<16x8xf32>
    %120 = tpu.matmul %12, %119, %cst_90 {dimension_numbers = #tpu.dot_dimension_numbers<[1], [0], [0], [1], [0, 0, 1, 1], [], []>} : vector<16x32xbf16>, vector<32x8xbf16>, vector<16x8xf32> -> vector<16x8xf32>
    %c0_91 = arith.constant 0 : index
    %c0_92 = arith.constant 0 : index
    %c16_93 = arith.constant 16 : index
    %121 = vector.load %arg11[%c0_91, %c0_92, %c16_93] : memref<2x1x32xf32, #tpu.memory_space<vmem>>, vector<1x1x8xf32>
    %122 = vector.shape_cast %121 : vector<1x1x8xf32> to vector<1x8xf32>
    %123 = vector.broadcast %122 : vector<1x8xf32> to vector<16x8xf32>
    %124 = arith.addf %120, %123 : vector<16x8xf32>
    %125 = arith.truncf %110 : vector<8x8xf32> to vector<8x8xbf16>
    %126 = arith.truncf %117 : vector<16x8xf32> to vector<16x8xbf16>
    %cst_94 = arith.constant dense<0.000000e+00> : vector<8x16xf32>
    %127 = tpu.matmul %125, %126, %cst_94 {dimension_numbers = #tpu.dot_dimension_numbers<[1], [1], [0], [0], [0, 0, 1, 0], [], []>} : vector<8x8xbf16>, vector<16x8xbf16>, vector<8x16xf32> -> vector<8x16xf32>
    %128 = vector.broadcast %14 : vector<1x16xf32> to vector<8x16xf32>
    %129 = arith.addf %127, %128 : vector<8x16xf32>
    %cst_95 = arith.constant dense<0xFF800000> : vector<8xf32>
    %130 = vector.multi_reduction <maximumf>, %129, %cst_95 [1] : vector<8x16xf32> to vector<8xf32>
    %131 = vector.shape_cast %130 : vector<8xf32> to vector<8x1xf32>
    %132 = vector.broadcast %131 : vector<8x1xf32> to vector<8x16xf32>
    %133 = arith.subf %129, %132 : vector<8x16xf32>
    %134 = math.exp %133 : vector<8x16xf32>
    %cst_96 = arith.constant dense<0.000000e+00> : vector<8xf32>
    %135 = vector.multi_reduction <add>, %134, %cst_96 [1] : vector<8x16xf32> to vector<8xf32>
    %136 = vector.shape_cast %135 : vector<8xf32> to vector<8x1xf32>
    %137 = vector.broadcast %136 : vector<8x1xf32> to vector<8x16xf32>
    %138 = arith.divf %134, %137 : vector<8x16xf32>
    %139 = arith.truncf %138 : vector<8x16xf32> to vector<8x16xbf16>
    %140 = arith.truncf %124 : vector<16x8xf32> to vector<16x8xbf16>
    %cst_97 = arith.constant dense<0.000000e+00> : vector<8x8xf32>
    %141 = tpu.matmul %139, %140, %cst_97 {dimension_numbers = #tpu.dot_dimension_numbers<[1], [0], [0], [1], [0, 0, 1, 1], [], []>} : vector<8x16xbf16>, vector<16x8xbf16>, vector<8x8xf32> -> vector<8x8xf32>
    %142 = arith.truncf %141 : vector<8x8xf32> to vector<8x8xbf16>
    %c0_98 = arith.constant 0 : index
    %c16_99 = arith.constant 16 : index
    %c0_100 = arith.constant 0 : index
    %143 = vector.load %arg12[%c0_98, %c16_99, %c0_100] : memref<2x32x32xbf16, #tpu.memory_space<vmem>>, vector<1x8x32xbf16>
    %144 = vector.shape_cast %143 : vector<1x8x32xbf16> to vector<8x32xbf16>
    %cst_101 = arith.constant dense<0.000000e+00> : vector<8x32xf32>
    %145 = tpu.matmul %142, %144, %cst_101 {dimension_numbers = #tpu.dot_dimension_numbers<[1], [0], [0], [1], [0, 0, 1, 1], [], []>} : vector<8x8xbf16>, vector<8x32xbf16>, vector<8x32xf32> -> vector<8x32xf32>
    %146 = arith.addf %103, %145 : vector<8x32xf32>
    %c0_102 = arith.constant 0 : index
    %c0_103 = arith.constant 0 : index
    %c24 = arith.constant 24 : index
    %147 = vector.load %arg6[%c0_102, %c0_103, %c24] : memref<2x32x32xbf16, #tpu.memory_space<vmem>>, vector<1x32x8xbf16>
    %148 = vector.shape_cast %147 : vector<1x32x8xbf16> to vector<32x8xbf16>
    %cst_104 = arith.constant dense<0.000000e+00> : vector<8x8xf32>
    %149 = tpu.matmul %16, %148, %cst_104 {dimension_numbers = #tpu.dot_dimension_numbers<[1], [0], [0], [1], [0, 0, 1, 1], [], []>} : vector<8x32xbf16>, vector<32x8xbf16>, vector<8x8xf32> -> vector<8x8xf32>
    %c0_105 = arith.constant 0 : index
    %c0_106 = arith.constant 0 : index
    %c24_107 = arith.constant 24 : index
    %150 = vector.load %arg7[%c0_105, %c0_106, %c24_107] : memref<2x1x32xf32, #tpu.memory_space<vmem>>, vector<1x1x8xf32>
    %151 = vector.shape_cast %150 : vector<1x1x8xf32> to vector<1x8xf32>
    %152 = vector.broadcast %151 : vector<1x8xf32> to vector<8x8xf32>
    %153 = arith.addf %149, %152 : vector<8x8xf32>
    %c0_108 = arith.constant 0 : index
    %c0_109 = arith.constant 0 : index
    %c24_110 = arith.constant 24 : index
    %154 = vector.load %arg8[%c0_108, %c0_109, %c24_110] : memref<2x32x32xbf16, #tpu.memory_space<vmem>>, vector<1x32x8xbf16>
    %155 = vector.shape_cast %154 : vector<1x32x8xbf16> to vector<32x8xbf16>
    %cst_111 = arith.constant dense<0.000000e+00> : vector<16x8xf32>
    %156 = tpu.matmul %9, %155, %cst_111 {dimension_numbers = #tpu.dot_dimension_numbers<[1], [0], [0], [1], [0, 0, 1, 1], [], []>} : vector<16x32xbf16>, vector<32x8xbf16>, vector<16x8xf32> -> vector<16x8xf32>
    %c0_112 = arith.constant 0 : index
    %c0_113 = arith.constant 0 : index
    %c24_114 = arith.constant 24 : index
    %157 = vector.load %arg9[%c0_112, %c0_113, %c24_114] : memref<2x1x32xf32, #tpu.memory_space<vmem>>, vector<1x1x8xf32>
    %158 = vector.shape_cast %157 : vector<1x1x8xf32> to vector<1x8xf32>
    %159 = vector.broadcast %158 : vector<1x8xf32> to vector<16x8xf32>
    %160 = arith.addf %156, %159 : vector<16x8xf32>
    %c0_115 = arith.constant 0 : index
    %c0_116 = arith.constant 0 : index
    %c24_117 = arith.constant 24 : index
    %161 = vector.load %arg10[%c0_115, %c0_116, %c24_117] : memref<2x32x32xbf16, #tpu.memory_space<vmem>>, vector<1x32x8xbf16>
    %162 = vector.shape_cast %161 : vector<1x32x8xbf16> to vector<32x8xbf16>
    %cst_118 = arith.constant dense<0.000000e+00> : vector<16x8xf32>
    %163 = tpu.matmul %12, %162, %cst_118 {dimension_numbers = #tpu.dot_dimension_numbers<[1], [0], [0], [1], [0, 0, 1, 1], [], []>} : vector<16x32xbf16>, vector<32x8xbf16>, vector<16x8xf32> -> vector<16x8xf32>
    %c0_119 = arith.constant 0 : index
    %c0_120 = arith.constant 0 : index
    %c24_121 = arith.constant 24 : index
    %164 = vector.load %arg11[%c0_119, %c0_120, %c24_121] : memref<2x1x32xf32, #tpu.memory_space<vmem>>, vector<1x1x8xf32>
    %165 = vector.shape_cast %164 : vector<1x1x8xf32> to vector<1x8xf32>
    %166 = vector.broadcast %165 : vector<1x8xf32> to vector<16x8xf32>
    %167 = arith.addf %163, %166 : vector<16x8xf32>
    %168 = arith.truncf %153 : vector<8x8xf32> to vector<8x8xbf16>
    %169 = arith.truncf %160 : vector<16x8xf32> to vector<16x8xbf16>
    %cst_122 = arith.constant dense<0.000000e+00> : vector<8x16xf32>
    %170 = tpu.matmul %168, %169, %cst_122 {dimension_numbers = #tpu.dot_dimension_numbers<[1], [1], [0], [0], [0, 0, 1, 0], [], []>} : vector<8x8xbf16>, vector<16x8xbf16>, vector<8x16xf32> -> vector<8x16xf32>
    %171 = vector.broadcast %14 : vector<1x16xf32> to vector<8x16xf32>
    %172 = arith.addf %170, %171 : vector<8x16xf32>
    %cst_123 = arith.constant dense<0xFF800000> : vector<8xf32>
    %173 = vector.multi_reduction <maximumf>, %172, %cst_123 [1] : vector<8x16xf32> to vector<8xf32>
    %174 = vector.shape_cast %173 : vector<8xf32> to vector<8x1xf32>
    %175 = vector.broadcast %174 : vector<8x1xf32> to vector<8x16xf32>
    %176 = arith.subf %172, %175 : vector<8x16xf32>
    %177 = math.exp %176 : vector<8x16xf32>
    %cst_124 = arith.constant dense<0.000000e+00> : vector<8xf32>
    %178 = vector.multi_reduction <add>, %177, %cst_124 [1] : vector<8x16xf32> to vector<8xf32>
    %179 = vector.shape_cast %178 : vector<8xf32> to vector<8x1xf32>
    %180 = vector.broadcast %179 : vector<8x1xf32> to vector<8x16xf32>
    %181 = arith.divf %177, %180 : vector<8x16xf32>
    %182 = arith.truncf %181 : vector<8x16xf32> to vector<8x16xbf16>
    %183 = arith.truncf %167 : vector<16x8xf32> to vector<16x8xbf16>
    %cst_125 = arith.constant dense<0.000000e+00> : vector<8x8xf32>
    %184 = tpu.matmul %182, %183, %cst_125 {dimension_numbers = #tpu.dot_dimension_numbers<[1], [0], [0], [1], [0, 0, 1, 1], [], []>} : vector<8x16xbf16>, vector<16x8xbf16>, vector<8x8xf32> -> vector<8x8xf32>
    %185 = arith.truncf %184 : vector<8x8xf32> to vector<8x8xbf16>
    %c0_126 = arith.constant 0 : index
    %c24_127 = arith.constant 24 : index
    %c0_128 = arith.constant 0 : index
    %186 = vector.load %arg12[%c0_126, %c24_127, %c0_128] : memref<2x32x32xbf16, #tpu.memory_space<vmem>>, vector<1x8x32xbf16>
    %187 = vector.shape_cast %186 : vector<1x8x32xbf16> to vector<8x32xbf16>
    %cst_129 = arith.constant dense<0.000000e+00> : vector<8x32xf32>
    %188 = tpu.matmul %185, %187, %cst_129 {dimension_numbers = #tpu.dot_dimension_numbers<[1], [0], [0], [1], [0, 0, 1, 1], [], []>} : vector<8x8xbf16>, vector<8x32xbf16>, vector<8x32xf32> -> vector<8x32xf32>
    %189 = arith.addf %146, %188 : vector<8x32xf32>
    %c0_130 = arith.constant 0 : index
    %c0_131 = arith.constant 0 : index
    %c0_132 = arith.constant 0 : index
    %190 = vector.load %arg13[%c0_130, %c0_131, %c0_132] : memref<2x1x32xf32, #tpu.memory_space<vmem>>, vector<1x1x32xf32>
    %191 = vector.shape_cast %190 : vector<1x1x32xf32> to vector<32xf32>
    %192 = vector.shape_cast %191 : vector<32xf32> to vector<1x32xf32>
    %193 = vector.broadcast %192 : vector<1x32xf32> to vector<8x32xf32>
    %194 = arith.addf %189, %193 : vector<8x32xf32>
    %c0_133 = arith.constant 0 : index
    %c0_134 = arith.constant 0 : index
    %c0_135 = arith.constant 0 : index
    %c0_136 = arith.constant 0 : index
    %195 = vector.load %arg14[%c0_133, %c0_134, %c0_135, %c0_136] : memref<1x2x8x32xf32, #tpu.memory_space<vmem>>, vector<1x1x8x32xf32>
    %196 = vector.shape_cast %195 : vector<1x1x8x32xf32> to vector<8x32xf32>
    %197 = vector.shape_cast %194 : vector<8x32xf32> to vector<1x1x8x32xf32>
    tpu.vector_store %arg14[%c0_133, %c0_134, %c0_135, %c0_136], %197 {strides = array<i32>} : memref<1x2x8x32xf32, #tpu.memory_space<vmem>>, vector<1x1x8x32xf32>,
    %198 = arith.addf %194, %3 : vector<8x32xf32>
    %199 = arith.truncf %198 : vector<8x32xf32> to vector<8x32xbf16>
    %cst_137 = arith.constant 0.000000e+00 : f32
    %200 = vector.broadcast %cst_137 : f32 to vector<8x32xf32>
    %c1 = arith.constant 1 : index
    %c0_138 = arith.constant 0 : index
    %c0_139 = arith.constant 0 : index
    %201 = vector.load %arg6[%c1, %c0_138, %c0_139] : memref<2x32x32xbf16, #tpu.memory_space<vmem>>, vector<1x32x8xbf16>
    %202 = vector.shape_cast %201 : vector<1x32x8xbf16> to vector<32x8xbf16>
    %cst_140 = arith.constant dense<0.000000e+00> : vector<8x8xf32>
    %203 = tpu.matmul %199, %202, %cst_140 {dimension_numbers = #tpu.dot_dimension_numbers<[1], [0], [0], [1], [0, 0, 1, 1], [], []>} : vector<8x32xbf16>, vector<32x8xbf16>, vector<8x8xf32> -> vector<8x8xf32>
    %c1_141 = arith.constant 1 : index
    %c0_142 = arith.constant 0 : index
    %c0_143 = arith.constant 0 : index
    %204 = vector.load %arg7[%c1_141, %c0_142, %c0_143] : memref<2x1x32xf32, #tpu.memory_space<vmem>>, vector<1x1x8xf32>
    %205 = vector.shape_cast %204 : vector<1x1x8xf32> to vector<1x8xf32>
    %206 = vector.broadcast %205 : vector<1x8xf32> to vector<8x8xf32>
    %207 = arith.addf %203, %206 : vector<8x8xf32>
    %c1_144 = arith.constant 1 : index
    %c0_145 = arith.constant 0 : index
    %c0_146 = arith.constant 0 : index
    %208 = vector.load %arg8[%c1_144, %c0_145, %c0_146] : memref<2x32x32xbf16, #tpu.memory_space<vmem>>, vector<1x32x8xbf16>
    %209 = vector.shape_cast %208 : vector<1x32x8xbf16> to vector<32x8xbf16>
    %cst_147 = arith.constant dense<0.000000e+00> : vector<16x8xf32>
    %210 = tpu.matmul %9, %209, %cst_147 {dimension_numbers = #tpu.dot_dimension_numbers<[1], [0], [0], [1], [0, 0, 1, 1], [], []>} : vector<16x32xbf16>, vector<32x8xbf16>, vector<16x8xf32> -> vector<16x8xf32>
    %c1_148 = arith.constant 1 : index
    %c0_149 = arith.constant 0 : index
    %c0_150 = arith.constant 0 : index
    %211 = vector.load %arg9[%c1_148, %c0_149, %c0_150] : memref<2x1x32xf32, #tpu.memory_space<vmem>>, vector<1x1x8xf32>
    %212 = vector.shape_cast %211 : vector<1x1x8xf32> to vector<1x8xf32>
    %213 = vector.broadcast %212 : vector<1x8xf32> to vector<16x8xf32>
    %214 = arith.addf %210, %213 : vector<16x8xf32>
    %c1_151 = arith.constant 1 : index
    %c0_152 = arith.constant 0 : index
    %c0_153 = arith.constant 0 : index
    %215 = vector.load %arg10[%c1_151, %c0_152, %c0_153] : memref<2x32x32xbf16, #tpu.memory_space<vmem>>, vector<1x32x8xbf16>
    %216 = vector.shape_cast %215 : vector<1x32x8xbf16> to vector<32x8xbf16>
    %cst_154 = arith.constant dense<0.000000e+00> : vector<16x8xf32>
    %217 = tpu.matmul %12, %216, %cst_154 {dimension_numbers = #tpu.dot_dimension_numbers<[1], [0], [0], [1], [0, 0, 1, 1], [], []>} : vector<16x32xbf16>, vector<32x8xbf16>, vector<16x8xf32> -> vector<16x8xf32>
    %c1_155 = arith.constant 1 : index
    %c0_156 = arith.constant 0 : index
    %c0_157 = arith.constant 0 : index
    %218 = vector.load %arg11[%c1_155, %c0_156, %c0_157] : memref<2x1x32xf32, #tpu.memory_space<vmem>>, vector<1x1x8xf32>
    %219 = vector.shape_cast %218 : vector<1x1x8xf32> to vector<1x8xf32>
    %220 = vector.broadcast %219 : vector<1x8xf32> to vector<16x8xf32>
    %221 = arith.addf %217, %220 : vector<16x8xf32>
    %222 = arith.truncf %207 : vector<8x8xf32> to vector<8x8xbf16>
    %223 = arith.truncf %214 : vector<16x8xf32> to vector<16x8xbf16>
    %cst_158 = arith.constant dense<0.000000e+00> : vector<8x16xf32>
    %224 = tpu.matmul %222, %223, %cst_158 {dimension_numbers = #tpu.dot_dimension_numbers<[1], [1], [0], [0], [0, 0, 1, 0], [], []>} : vector<8x8xbf16>, vector<16x8xbf16>, vector<8x16xf32> -> vector<8x16xf32>
    %225 = vector.broadcast %14 : vector<1x16xf32> to vector<8x16xf32>
    %226 = arith.addf %224, %225 : vector<8x16xf32>
    %cst_159 = arith.constant dense<0xFF800000> : vector<8xf32>
    %227 = vector.multi_reduction <maximumf>, %226, %cst_159 [1] : vector<8x16xf32> to vector<8xf32>
    %228 = vector.shape_cast %227 : vector<8xf32> to vector<8x1xf32>
    %229 = vector.broadcast %228 : vector<8x1xf32> to vector<8x16xf32>
    %230 = arith.subf %226, %229 : vector<8x16xf32>
    %231 = math.exp %230 : vector<8x16xf32>
    %cst_160 = arith.constant dense<0.000000e+00> : vector<8xf32>
    %232 = vector.multi_reduction <add>, %231, %cst_160 [1] : vector<8x16xf32> to vector<8xf32>
    %233 = vector.shape_cast %232 : vector<8xf32> to vector<8x1xf32>
    %234 = vector.broadcast %233 : vector<8x1xf32> to vector<8x16xf32>
    %235 = arith.divf %231, %234 : vector<8x16xf32>
    %236 = arith.truncf %235 : vector<8x16xf32> to vector<8x16xbf16>
    %237 = arith.truncf %221 : vector<16x8xf32> to vector<16x8xbf16>
    %cst_161 = arith.constant dense<0.000000e+00> : vector<8x8xf32>
    %238 = tpu.matmul %236, %237, %cst_161 {dimension_numbers = #tpu.dot_dimension_numbers<[1], [0], [0], [1], [0, 0, 1, 1], [], []>} : vector<8x16xbf16>, vector<16x8xbf16>, vector<8x8xf32> -> vector<8x8xf32>
    %239 = arith.truncf %238 : vector<8x8xf32> to vector<8x8xbf16>
    %c1_162 = arith.constant 1 : index
    %c0_163 = arith.constant 0 : index
    %c0_164 = arith.constant 0 : index
    %240 = vector.load %arg12[%c1_162, %c0_163, %c0_164] : memref<2x32x32xbf16, #tpu.memory_space<vmem>>, vector<1x8x32xbf16>
    %241 = vector.shape_cast %240 : vector<1x8x32xbf16> to vector<8x32xbf16>
    %cst_165 = arith.constant dense<0.000000e+00> : vector<8x32xf32>
    %242 = tpu.matmul %239, %241, %cst_165 {dimension_numbers = #tpu.dot_dimension_numbers<[1], [0], [0], [1], [0, 0, 1, 1], [], []>} : vector<8x8xbf16>, vector<8x32xbf16>, vector<8x32xf32> -> vector<8x32xf32>
    %243 = arith.addf %200, %242 : vector<8x32xf32>
    %c1_166 = arith.constant 1 : index
    %c0_167 = arith.constant 0 : index
    %c8_168 = arith.constant 8 : index
    %244 = vector.load %arg6[%c1_166, %c0_167, %c8_168] : memref<2x32x32xbf16, #tpu.memory_space<vmem>>, vector<1x32x8xbf16>
    %245 = vector.shape_cast %244 : vector<1x32x8xbf16> to vector<32x8xbf16>
    %cst_169 = arith.constant dense<0.000000e+00> : vector<8x8xf32>
    %246 = tpu.matmul %199, %245, %cst_169 {dimension_numbers = #tpu.dot_dimension_numbers<[1], [0], [0], [1], [0, 0, 1, 1], [], []>} : vector<8x32xbf16>, vector<32x8xbf16>, vector<8x8xf32> -> vector<8x8xf32>
    %c1_170 = arith.constant 1 : index
    %c0_171 = arith.constant 0 : index
    %c8_172 = arith.constant 8 : index
    %247 = vector.load %arg7[%c1_170, %c0_171, %c8_172] : memref<2x1x32xf32, #tpu.memory_space<vmem>>, vector<1x1x8xf32>
    %248 = vector.shape_cast %247 : vector<1x1x8xf32> to vector<1x8xf32>
    %249 = vector.broadcast %248 : vector<1x8xf32> to vector<8x8xf32>
    %250 = arith.addf %246, %249 : vector<8x8xf32>
    %c1_173 = arith.constant 1 : index
    %c0_174 = arith.constant 0 : index
    %c8_175 = arith.constant 8 : index
    %251 = vector.load %arg8[%c1_173, %c0_174, %c8_175] : memref<2x32x32xbf16, #tpu.memory_space<vmem>>, vector<1x32x8xbf16>
    %252 = vector.shape_cast %251 : vector<1x32x8xbf16> to vector<32x8xbf16>
    %cst_176 = arith.constant dense<0.000000e+00> : vector<16x8xf32>
    %253 = tpu.matmul %9, %252, %cst_176 {dimension_numbers = #tpu.dot_dimension_numbers<[1], [0], [0], [1], [0, 0, 1, 1], [], []>} : vector<16x32xbf16>, vector<32x8xbf16>, vector<16x8xf32> -> vector<16x8xf32>
    %c1_177 = arith.constant 1 : index
    %c0_178 = arith.constant 0 : index
    %c8_179 = arith.constant 8 : index
    %254 = vector.load %arg9[%c1_177, %c0_178, %c8_179] : memref<2x1x32xf32, #tpu.memory_space<vmem>>, vector<1x1x8xf32>
    %255 = vector.shape_cast %254 : vector<1x1x8xf32> to vector<1x8xf32>
    %256 = vector.broadcast %255 : vector<1x8xf32> to vector<16x8xf32>
    %257 = arith.addf %253, %256 : vector<16x8xf32>
    %c1_180 = arith.constant 1 : index
    %c0_181 = arith.constant 0 : index
    %c8_182 = arith.constant 8 : index
    %258 = vector.load %arg10[%c1_180, %c0_181, %c8_182] : memref<2x32x32xbf16, #tpu.memory_space<vmem>>, vector<1x32x8xbf16>
    %259 = vector.shape_cast %258 : vector<1x32x8xbf16> to vector<32x8xbf16>
    %cst_183 = arith.constant dense<0.000000e+00> : vector<16x8xf32>
    %260 = tpu.matmul %12, %259, %cst_183 {dimension_numbers = #tpu.dot_dimension_numbers<[1], [0], [0], [1], [0, 0, 1, 1], [], []>} : vector<16x32xbf16>, vector<32x8xbf16>, vector<16x8xf32> -> vector<16x8xf32>
    %c1_184 = arith.constant 1 : index
    %c0_185 = arith.constant 0 : index
    %c8_186 = arith.constant 8 : index
    %261 = vector.load %arg11[%c1_184, %c0_185, %c8_186] : memref<2x1x32xf32, #tpu.memory_space<vmem>>, vector<1x1x8xf32>
    %262 = vector.shape_cast %261 : vector<1x1x8xf32> to vector<1x8xf32>
    %263 = vector.broadcast %262 : vector<1x8xf32> to vector<16x8xf32>
    %264 = arith.addf %260, %263 : vector<16x8xf32>
    %265 = arith.truncf %250 : vector<8x8xf32> to vector<8x8xbf16>
    %266 = arith.truncf %257 : vector<16x8xf32> to vector<16x8xbf16>
    %cst_187 = arith.constant dense<0.000000e+00> : vector<8x16xf32>
    %267 = tpu.matmul %265, %266, %cst_187 {dimension_numbers = #tpu.dot_dimension_numbers<[1], [1], [0], [0], [0, 0, 1, 0], [], []>} : vector<8x8xbf16>, vector<16x8xbf16>, vector<8x16xf32> -> vector<8x16xf32>
    %268 = vector.broadcast %14 : vector<1x16xf32> to vector<8x16xf32>
    %269 = arith.addf %267, %268 : vector<8x16xf32>
    %cst_188 = arith.constant dense<0xFF800000> : vector<8xf32>
    %270 = vector.multi_reduction <maximumf>, %269, %cst_188 [1] : vector<8x16xf32> to vector<8xf32>
    %271 = vector.shape_cast %270 : vector<8xf32> to vector<8x1xf32>
    %272 = vector.broadcast %271 : vector<8x1xf32> to vector<8x16xf32>
    %273 = arith.subf %269, %272 : vector<8x16xf32>
    %274 = math.exp %273 : vector<8x16xf32>
    %cst_189 = arith.constant dense<0.000000e+00> : vector<8xf32>
    %275 = vector.multi_reduction <add>, %274, %cst_189 [1] : vector<8x16xf32> to vector<8xf32>
    %276 = vector.shape_cast %275 : vector<8xf32> to vector<8x1xf32>
    %277 = vector.broadcast %276 : vector<8x1xf32> to vector<8x16xf32>
    %278 = arith.divf %274, %277 : vector<8x16xf32>
    %279 = arith.truncf %278 : vector<8x16xf32> to vector<8x16xbf16>
    %280 = arith.truncf %264 : vector<16x8xf32> to vector<16x8xbf16>
    %cst_190 = arith.constant dense<0.000000e+00> : vector<8x8xf32>
    %281 = tpu.matmul %279, %280, %cst_190 {dimension_numbers = #tpu.dot_dimension_numbers<[1], [0], [0], [1], [0, 0, 1, 1], [], []>} : vector<8x16xbf16>, vector<16x8xbf16>, vector<8x8xf32> -> vector<8x8xf32>
    %282 = arith.truncf %281 : vector<8x8xf32> to vector<8x8xbf16>
    %c1_191 = arith.constant 1 : index
    %c8_192 = arith.constant 8 : index
    %c0_193 = arith.constant 0 : index
    %283 = vector.load %arg12[%c1_191, %c8_192, %c0_193] : memref<2x32x32xbf16, #tpu.memory_space<vmem>>, vector<1x8x32xbf16>
    %284 = vector.shape_cast %283 : vector<1x8x32xbf16> to vector<8x32xbf16>
    %cst_194 = arith.constant dense<0.000000e+00> : vector<8x32xf32>
    %285 = tpu.matmul %282, %284, %cst_194 {dimension_numbers = #tpu.dot_dimension_numbers<[1], [0], [0], [1], [0, 0, 1, 1], [], []>} : vector<8x8xbf16>, vector<8x32xbf16>, vector<8x32xf32> -> vector<8x32xf32>
    %286 = arith.addf %243, %285 : vector<8x32xf32>
    %c1_195 = arith.constant 1 : index
    %c0_196 = arith.constant 0 : index
    %c16_197 = arith.constant 16 : index
    %287 = vector.load %arg6[%c1_195, %c0_196, %c16_197] : memref<2x32x32xbf16, #tpu.memory_space<vmem>>, vector<1x32x8xbf16>
    %288 = vector.shape_cast %287 : vector<1x32x8xbf16> to vector<32x8xbf16>
    %cst_198 = arith.constant dense<0.000000e+00> : vector<8x8xf32>
    %289 = tpu.matmul %199, %288, %cst_198 {dimension_numbers = #tpu.dot_dimension_numbers<[1], [0], [0], [1], [0, 0, 1, 1], [], []>} : vector<8x32xbf16>, vector<32x8xbf16>, vector<8x8xf32> -> vector<8x8xf32>
    %c1_199 = arith.constant 1 : index
    %c0_200 = arith.constant 0 : index
    %c16_201 = arith.constant 16 : index
    %290 = vector.load %arg7[%c1_199, %c0_200, %c16_201] : memref<2x1x32xf32, #tpu.memory_space<vmem>>, vector<1x1x8xf32>
    %291 = vector.shape_cast %290 : vector<1x1x8xf32> to vector<1x8xf32>
    %292 = vector.broadcast %291 : vector<1x8xf32> to vector<8x8xf32>
    %293 = arith.addf %289, %292 : vector<8x8xf32>
    %c1_202 = arith.constant 1 : index
    %c0_203 = arith.constant 0 : index
    %c16_204 = arith.constant 16 : index
    %294 = vector.load %arg8[%c1_202, %c0_203, %c16_204] : memref<2x32x32xbf16, #tpu.memory_space<vmem>>, vector<1x32x8xbf16>
    %295 = vector.shape_cast %294 : vector<1x32x8xbf16> to vector<32x8xbf16>
    %cst_205 = arith.constant dense<0.000000e+00> : vector<16x8xf32>
    %296 = tpu.matmul %9, %295, %cst_205 {dimension_numbers = #tpu.dot_dimension_numbers<[1], [0], [0], [1], [0, 0, 1, 1], [], []>} : vector<16x32xbf16>, vector<32x8xbf16>, vector<16x8xf32> -> vector<16x8xf32>
    %c1_206 = arith.constant 1 : index
    %c0_207 = arith.constant 0 : index
    %c16_208 = arith.constant 16 : index
    %297 = vector.load %arg9[%c1_206, %c0_207, %c16_208] : memref<2x1x32xf32, #tpu.memory_space<vmem>>, vector<1x1x8xf32>
    %298 = vector.shape_cast %297 : vector<1x1x8xf32> to vector<1x8xf32>
    %299 = vector.broadcast %298 : vector<1x8xf32> to vector<16x8xf32>
    %300 = arith.addf %296, %299 : vector<16x8xf32>
    %c1_209 = arith.constant 1 : index
    %c0_210 = arith.constant 0 : index
    %c16_211 = arith.constant 16 : index
    %301 = vector.load %arg10[%c1_209, %c0_210, %c16_211] : memref<2x32x32xbf16, #tpu.memory_space<vmem>>, vector<1x32x8xbf16>
    %302 = vector.shape_cast %301 : vector<1x32x8xbf16> to vector<32x8xbf16>
    %cst_212 = arith.constant dense<0.000000e+00> : vector<16x8xf32>
    %303 = tpu.matmul %12, %302, %cst_212 {dimension_numbers = #tpu.dot_dimension_numbers<[1], [0], [0], [1], [0, 0, 1, 1], [], []>} : vector<16x32xbf16>, vector<32x8xbf16>, vector<16x8xf32> -> vector<16x8xf32>
    %c1_213 = arith.constant 1 : index
    %c0_214 = arith.constant 0 : index
    %c16_215 = arith.constant 16 : index
    %304 = vector.load %arg11[%c1_213, %c0_214, %c16_215] : memref<2x1x32xf32, #tpu.memory_space<vmem>>, vector<1x1x8xf32>
    %305 = vector.shape_cast %304 : vector<1x1x8xf32> to vector<1x8xf32>
    %306 = vector.broadcast %305 : vector<1x8xf32> to vector<16x8xf32>
    %307 = arith.addf %303, %306 : vector<16x8xf32>
    %308 = arith.truncf %293 : vector<8x8xf32> to vector<8x8xbf16>
    %309 = arith.truncf %300 : vector<16x8xf32> to vector<16x8xbf16>
    %cst_216 = arith.constant dense<0.000000e+00> : vector<8x16xf32>
    %310 = tpu.matmul %308, %309, %cst_216 {dimension_numbers = #tpu.dot_dimension_numbers<[1], [1], [0], [0], [0, 0, 1, 0], [], []>} : vector<8x8xbf16>, vector<16x8xbf16>, vector<8x16xf32> -> vector<8x16xf32>
    %311 = vector.broadcast %14 : vector<1x16xf32> to vector<8x16xf32>
    %312 = arith.addf %310, %311 : vector<8x16xf32>
    %cst_217 = arith.constant dense<0xFF800000> : vector<8xf32>
    %313 = vector.multi_reduction <maximumf>, %312, %cst_217 [1] : vector<8x16xf32> to vector<8xf32>
    %314 = vector.shape_cast %313 : vector<8xf32> to vector<8x1xf32>
    %315 = vector.broadcast %314 : vector<8x1xf32> to vector<8x16xf32>
    %316 = arith.subf %312, %315 : vector<8x16xf32>
    %317 = math.exp %316 : vector<8x16xf32>
    %cst_218 = arith.constant dense<0.000000e+00> : vector<8xf32>
    %318 = vector.multi_reduction <add>, %317, %cst_218 [1] : vector<8x16xf32> to vector<8xf32>
    %319 = vector.shape_cast %318 : vector<8xf32> to vector<8x1xf32>
    %320 = vector.broadcast %319 : vector<8x1xf32> to vector<8x16xf32>
    %321 = arith.divf %317, %320 : vector<8x16xf32>
    %322 = arith.truncf %321 : vector<8x16xf32> to vector<8x16xbf16>
    %323 = arith.truncf %307 : vector<16x8xf32> to vector<16x8xbf16>
    %cst_219 = arith.constant dense<0.000000e+00> : vector<8x8xf32>
    %324 = tpu.matmul %322, %323, %cst_219 {dimension_numbers = #tpu.dot_dimension_numbers<[1], [0], [0], [1], [0, 0, 1, 1], [], []>} : vector<8x16xbf16>, vector<16x8xbf16>, vector<8x8xf32> -> vector<8x8xf32>
    %325 = arith.truncf %324 : vector<8x8xf32> to vector<8x8xbf16>
    %c1_220 = arith.constant 1 : index
    %c16_221 = arith.constant 16 : index
    %c0_222 = arith.constant 0 : index
    %326 = vector.load %arg12[%c1_220, %c16_221, %c0_222] : memref<2x32x32xbf16, #tpu.memory_space<vmem>>, vector<1x8x32xbf16>
    %327 = vector.shape_cast %326 : vector<1x8x32xbf16> to vector<8x32xbf16>
    %cst_223 = arith.constant dense<0.000000e+00> : vector<8x32xf32>
    %328 = tpu.matmul %325, %327, %cst_223 {dimension_numbers = #tpu.dot_dimension_numbers<[1], [0], [0], [1], [0, 0, 1, 1], [], []>} : vector<8x8xbf16>, vector<8x32xbf16>, vector<8x32xf32> -> vector<8x32xf32>
    %329 = arith.addf %286, %328 : vector<8x32xf32>
    %c1_224 = arith.constant 1 : index
    %c0_225 = arith.constant 0 : index
    %c24_226 = arith.constant 24 : index
    %330 = vector.load %arg6[%c1_224, %c0_225, %c24_226] : memref<2x32x32xbf16, #tpu.memory_space<vmem>>, vector<1x32x8xbf16>
    %331 = vector.shape_cast %330 : vector<1x32x8xbf16> to vector<32x8xbf16>
    %cst_227 = arith.constant dense<0.000000e+00> : vector<8x8xf32>
    %332 = tpu.matmul %199, %331, %cst_227 {dimension_numbers = #tpu.dot_dimension_numbers<[1], [0], [0], [1], [0, 0, 1, 1], [], []>} : vector<8x32xbf16>, vector<32x8xbf16>, vector<8x8xf32> -> vector<8x8xf32>
    %c1_228 = arith.constant 1 : index
    %c0_229 = arith.constant 0 : index
    %c24_230 = arith.constant 24 : index
    %333 = vector.load %arg7[%c1_228, %c0_229, %c24_230] : memref<2x1x32xf32, #tpu.memory_space<vmem>>, vector<1x1x8xf32>
    %334 = vector.shape_cast %333 : vector<1x1x8xf32> to vector<1x8xf32>
    %335 = vector.broadcast %334 : vector<1x8xf32> to vector<8x8xf32>
    %336 = arith.addf %332, %335 : vector<8x8xf32>
    %c1_231 = arith.constant 1 : index
    %c0_232 = arith.constant 0 : index
    %c24_233 = arith.constant 24 : index
    %337 = vector.load %arg8[%c1_231, %c0_232, %c24_233] : memref<2x32x32xbf16, #tpu.memory_space<vmem>>, vector<1x32x8xbf16>
    %338 = vector.shape_cast %337 : vector<1x32x8xbf16> to vector<32x8xbf16>
    %cst_234 = arith.constant dense<0.000000e+00> : vector<16x8xf32>
    %339 = tpu.matmul %9, %338, %cst_234 {dimension_numbers = #tpu.dot_dimension_numbers<[1], [0], [0], [1], [0, 0, 1, 1], [], []>} : vector<16x32xbf16>, vector<32x8xbf16>, vector<16x8xf32> -> vector<16x8xf32>
    %c1_235 = arith.constant 1 : index
    %c0_236 = arith.constant 0 : index
    %c24_237 = arith.constant 24 : index
    %340 = vector.load %arg9[%c1_235, %c0_236, %c24_237] : memref<2x1x32xf32, #tpu.memory_space<vmem>>, vector<1x1x8xf32>
    %341 = vector.shape_cast %340 : vector<1x1x8xf32> to vector<1x8xf32>
    %342 = vector.broadcast %341 : vector<1x8xf32> to vector<16x8xf32>
    %343 = arith.addf %339, %342 : vector<16x8xf32>
    %c1_238 = arith.constant 1 : index
    %c0_239 = arith.constant 0 : index
    %c24_240 = arith.constant 24 : index
    %344 = vector.load %arg10[%c1_238, %c0_239, %c24_240] : memref<2x32x32xbf16, #tpu.memory_space<vmem>>, vector<1x32x8xbf16>
    %345 = vector.shape_cast %344 : vector<1x32x8xbf16> to vector<32x8xbf16>
    %cst_241 = arith.constant dense<0.000000e+00> : vector<16x8xf32>
    %346 = tpu.matmul %12, %345, %cst_241 {dimension_numbers = #tpu.dot_dimension_numbers<[1], [0], [0], [1], [0, 0, 1, 1], [], []>} : vector<16x32xbf16>, vector<32x8xbf16>, vector<16x8xf32> -> vector<16x8xf32>
    %c1_242 = arith.constant 1 : index
    %c0_243 = arith.constant 0 : index
    %c24_244 = arith.constant 24 : index
    %347 = vector.load %arg11[%c1_242, %c0_243, %c24_244] : memref<2x1x32xf32, #tpu.memory_space<vmem>>, vector<1x1x8xf32>
    %348 = vector.shape_cast %347 : vector<1x1x8xf32> to vector<1x8xf32>
    %349 = vector.broadcast %348 : vector<1x8xf32> to vector<16x8xf32>
    %350 = arith.addf %346, %349 : vector<16x8xf32>
    %351 = arith.truncf %336 : vector<8x8xf32> to vector<8x8xbf16>
    %352 = arith.truncf %343 : vector<16x8xf32> to vector<16x8xbf16>
    %cst_245 = arith.constant dense<0.000000e+00> : vector<8x16xf32>
    %353 = tpu.matmul %351, %352, %cst_245 {dimension_numbers = #tpu.dot_dimension_numbers<[1], [1], [0], [0], [0, 0, 1, 0], [], []>} : vector<8x8xbf16>, vector<16x8xbf16>, vector<8x16xf32> -> vector<8x16xf32>
    %354 = vector.broadcast %14 : vector<1x16xf32> to vector<8x16xf32>
    %355 = arith.addf %353, %354 : vector<8x16xf32>
    %cst_246 = arith.constant dense<0xFF800000> : vector<8xf32>
    %356 = vector.multi_reduction <maximumf>, %355, %cst_246 [1] : vector<8x16xf32> to vector<8xf32>
    %357 = vector.shape_cast %356 : vector<8xf32> to vector<8x1xf32>
    %358 = vector.broadcast %357 : vector<8x1xf32> to vector<8x16xf32>
    %359 = arith.subf %355, %358 : vector<8x16xf32>
    %360 = math.exp %359 : vector<8x16xf32>
    %cst_247 = arith.constant dense<0.000000e+00> : vector<8xf32>
    %361 = vector.multi_reduction <add>, %360, %cst_247 [1] : vector<8x16xf32> to vector<8xf32>
    %362 = vector.shape_cast %361 : vector<8xf32> to vector<8x1xf32>
    %363 = vector.broadcast %362 : vector<8x1xf32> to vector<8x16xf32>
    %364 = arith.divf %360, %363 : vector<8x16xf32>
    %365 = arith.truncf %364 : vector<8x16xf32> to vector<8x16xbf16>
    %366 = arith.truncf %350 : vector<16x8xf32> to vector<16x8xbf16>
    %cst_248 = arith.constant dense<0.000000e+00> : vector<8x8xf32>
    %367 = tpu.matmul %365, %366, %cst_248 {dimension_numbers = #tpu.dot_dimension_numbers<[1], [0], [0], [1], [0, 0, 1, 1], [], []>} : vector<8x16xbf16>, vector<16x8xbf16>, vector<8x8xf32> -> vector<8x8xf32>
    %368 = arith.truncf %367 : vector<8x8xf32> to vector<8x8xbf16>
    %c1_249 = arith.constant 1 : index
    %c24_250 = arith.constant 24 : index
    %c0_251 = arith.constant 0 : index
    %369 = vector.load %arg12[%c1_249, %c24_250, %c0_251] : memref<2x32x32xbf16, #tpu.memory_space<vmem>>, vector<1x8x32xbf16>
    %370 = vector.shape_cast %369 : vector<1x8x32xbf16> to vector<8x32xbf16>
    %cst_252 = arith.constant dense<0.000000e+00> : vector<8x32xf32>
    %371 = tpu.matmul %368, %370, %cst_252 {dimension_numbers = #tpu.dot_dimension_numbers<[1], [0], [0], [1], [0, 0, 1, 1], [], []>} : vector<8x8xbf16>, vector<8x32xbf16>, vector<8x32xf32> -> vector<8x32xf32>
    %372 = arith.addf %329, %371 : vector<8x32xf32>
    %c1_253 = arith.constant 1 : index
    %c0_254 = arith.constant 0 : index
    %c0_255 = arith.constant 0 : index
    %373 = vector.load %arg13[%c1_253, %c0_254, %c0_255] : memref<2x1x32xf32, #tpu.memory_space<vmem>>, vector<1x1x32xf32>
    %374 = vector.shape_cast %373 : vector<1x1x32xf32> to vector<32xf32>
    %375 = vector.shape_cast %374 : vector<32xf32> to vector<1x32xf32>
    %376 = vector.broadcast %375 : vector<1x32xf32> to vector<8x32xf32>
    %377 = arith.addf %372, %376 : vector<8x32xf32>
    %c0_256 = arith.constant 0 : index
    %c1_257 = arith.constant 1 : index
    %c0_258 = arith.constant 0 : index
    %c0_259 = arith.constant 0 : index
    %378 = vector.load %arg14[%c0_256, %c1_257, %c0_258, %c0_259] : memref<1x2x8x32xf32, #tpu.memory_space<vmem>>, vector<1x1x8x32xf32>
    %379 = vector.shape_cast %378 : vector<1x1x8x32xf32> to vector<8x32xf32>
    %380 = vector.shape_cast %377 : vector<8x32xf32> to vector<1x1x8x32xf32>
    tpu.vector_store %arg14[%c0_256, %c1_257, %c0_258, %c0_259], %380 {strides = array<i32>} : memref<1x2x8x32xf32, #tpu.memory_space<vmem>>, vector<1x1x8x32xf32>,
    return
  }
  func.func @transform_0(%arg0: i32) -> (i32, i32, i32) {
    %c0_i32 = arith.constant 0 : i32
    %c0_i32_0 = arith.constant 0 : i32
    %c0_i32_1 = arith.constant 0 : i32
    return %arg0, %c0_i32, %c0_i32_0 : i32, i32, i32
  }
  func.func @transform_1(%arg0: i32) -> (i32, i32, i32) {
    %c0_i32 = arith.constant 0 : i32
    %c0_i32_0 = arith.constant 0 : i32
    %c0_i32_1 = arith.constant 0 : i32
    return %arg0, %c0_i32, %c0_i32_0 : i32, i32, i32
  }
  func.func @transform_2(%arg0: i32) -> (i32, i32, i32) {
    %c0_i32 = arith.constant 0 : i32
    %c0_i32_0 = arith.constant 0 : i32
    %c0_i32_1 = arith.constant 0 : i32
    return %arg0, %c0_i32, %c0_i32_0 : i32, i32, i32
  }
  func.func @transform_3(%arg0: i32) -> (i32, i32, i32) {
    %c0_i32 = arith.constant 0 : i32
    %c0_i32_0 = arith.constant 0 : i32
    %c0_i32_1 = arith.constant 0 : i32
    return %arg0, %c0_i32, %c0_i32_0 : i32, i32, i32
  }
  func.func @transform_4(%arg0: i32) -> (i32, i32, i32) {
    %c0_i32 = arith.constant 0 : i32
    %c0_i32_0 = arith.constant 0 : i32
    %c0_i32_1 = arith.constant 0 : i32
    return %arg0, %c0_i32, %c0_i32_0 : i32, i32, i32
  }
  func.func @transform_5(%arg0: i32) -> (i32, i32, i32) {
    %c0_i32 = arith.constant 0 : i32
    %c0_i32_0 = arith.constant 0 : i32
    %c0_i32_1 = arith.constant 0 : i32
    %c0_i32_2 = arith.constant 0 : i32
    return %c0_i32, %c0_i32_0, %c0_i32_1 : i32, i32, i32
  }
  func.func @transform_6(%arg0: i32) -> (i32, i32, i32) {
    %c0_i32 = arith.constant 0 : i32
    %c0_i32_0 = arith.constant 0 : i32
    %c0_i32_1 = arith.constant 0 : i32
    %c0_i32_2 = arith.constant 0 : i32
    return %c0_i32, %c0_i32_0, %c0_i32_1 : i32, i32, i32
  }
  func.func @transform_7(%arg0: i32) -> (i32, i32, i32) {
    %c0_i32 = arith.constant 0 : i32
    %c0_i32_0 = arith.constant 0 : i32
    %c0_i32_1 = arith.constant 0 : i32
    %c0_i32_2 = arith.constant 0 : i32
    return %c0_i32, %c0_i32_0, %c0_i32_1 : i32, i32, i32
  }
  func.func @transform_8(%arg0: i32) -> (i32, i32, i32) {
    %c0_i32 = arith.constant 0 : i32
    %c0_i32_0 = arith.constant 0 : i32
    %c0_i32_1 = arith.constant 0 : i32
    %c0_i32_2 = arith.constant 0 : i32
    return %c0_i32, %c0_i32_0, %c0_i32_1 : i32, i32, i32
  }
  func.func @transform_9(%arg0: i32) -> (i32, i32, i32) {
    %c0_i32 = arith.constant 0 : i32
    %c0_i32_0 = arith.constant 0 : i32
    %c0_i32_1 = arith.constant 0 : i32
    %c0_i32_2 = arith.constant 0 : i32
    return %c0_i32, %c0_i32_0, %c0_i32_1 : i32, i32, i32
  }
  func.func @transform_10(%arg0: i32) -> (i32, i32, i32) {
    %c0_i32 = arith.constant 0 : i32
    %c0_i32_0 = arith.constant 0 : i32
    %c0_i32_1 = arith.constant 0 : i32
    %c0_i32_2 = arith.constant 0 : i32
    return %c0_i32, %c0_i32_0, %c0_i32_1 : i32, i32, i32
  }
  func.func @transform_11(%arg0: i32) -> (i32, i32, i32) {
    %c0_i32 = arith.constant 0 : i32
    %c0_i32_0 = arith.constant 0 : i32
    %c0_i32_1 = arith.constant 0 : i32
    %c0_i32_2 = arith.constant 0 : i32
    return %c0_i32, %c0_i32_0, %c0_i32_1 : i32, i32, i32
  }
  func.func @transform_12(%arg0: i32) -> (i32, i32, i32) {
    %c0_i32 = arith.constant 0 : i32
    %c0_i32_0 = arith.constant 0 : i32
    %c0_i32_1 = arith.constant 0 : i32
    %c0_i32_2 = arith.constant 0 : i32
    return %c0_i32, %c0_i32_0, %c0_i32_1 : i32, i32, i32
  }
  func.func @transform_13(%arg0: i32) -> (i32, i32, i32, i32) {
    %c0_i32 = arith.constant 0 : i32
    %c0_i32_0 = arith.constant 0 : i32
    %c0_i32_1 = arith.constant 0 : i32
    %c0_i32_2 = arith.constant 0 : i32
    return %arg0, %c0_i32, %c0_i32_0, %c0_i32_1 : i32, i32, i32, i32
  }
}

</mosaic_0001>

<llo_original>
// kernel: tpu_custom_call.1
$region0: #{tpu_custom_call.1}
  #allocation0 [shape = 'u32[]', space=smem, size = 0x4, offset = 0x4, fixed_abs, tag = 'smem constant byte address 0x4 - core index']
  #allocation1 [shape = 'u32[144,128]{1,0:T(1,128)}', space=vmem, size = 0x12000, scoped, tag = 'internal scratch']
  %s0 = inlined_call_operand.hbm [shape: f32[2,8,32], index: 0, kind: input, shape index: {}]
  %s1 = inlined_call_operand.hbm [shape: f32[2,8,32], index: 1, kind: input, shape index: {}]
  %s2 = inlined_call_operand.hbm [shape: f32[2,16,32], index: 2, kind: input, shape index: {}]
  %s3 = inlined_call_operand.hbm [shape: f32[2,16,32], index: 3, kind: input, shape index: {}]
  %s4 = inlined_call_operand.vmem [shape: f32[2,1,16], index: 4, kind: input, shape index: {}]
  %s5 = inlined_call_operand.hbm [shape: bf16[2,32,32], index: 5, kind: input, shape index: {}]
  %s6 = inlined_call_operand.hbm [shape: f32[2,1,32], index: 6, kind: input, shape index: {}]
  %s7 = inlined_call_operand.hbm [shape: bf16[2,32,32], index: 7, kind: input, shape index: {}]
  %s8 = inlined_call_operand.hbm [shape: f32[2,1,32], index: 8, kind: input, shape index: {}]
  %s9 = inlined_call_operand.vmem [shape: bf16[2,32,32], index: 9, kind: input, shape index: {}]
  %s10 = inlined_call_operand.vmem [shape: f32[2,1,32], index: 10, kind: input, shape index: {}]
  %s11 = inlined_call_operand.hbm [shape: bf16[2,32,32], index: 11, kind: input, shape index: {}]
  %s12 = inlined_call_operand.vmem [shape: f32[2,1,32], index: 12, kind: input, shape index: {}]
  %s13 = inlined_call_operand.hbm [shape: f32[2,2,8,32], index: 13, kind: output, shape index: {}]
  %s14 = sld [smem:[#allocation0]]
  $region121: #{tpu_custom_call.1} parent=0
    _
  %s16 = ssub.s32 1, %s14
  %s17 = scalar_select 0, %s16, %s14
  $region1: #{tpu_custom_call.1} parent=0
    #allocation2 [shape = 'u8[8192]{0}', space=vmem, size = 0x2000, scoped, tag = 'input window, operand 0']
    #allocation3 [shape = 's32[2]{0}', space=sflag, size = 0x8, scoped, tag = 'scoped memory for tpu_custom_call.1']
    #allocation4 [shape = 's32[2]{0}', space=sflag, size = 0x8, scoped, tag = 'scoped memory for tpu_custom_call.1']
    #allocation5 [shape = 'u8[8192]{0}', space=vmem, size = 0x2000, scoped, tag = 'input window, operand 1']
    #allocation6 [shape = 's32[2]{0}', space=sflag, size = 0x8, scoped, tag = 'scoped memory for tpu_custom_call.1']
    #allocation7 [shape = 'u8[16384]{0}', space=vmem, size = 0x4000, scoped, tag = 'input window, operand 2']
    #allocation8 [shape = 'u8[16384]{0}', space=vmem, size = 0x4000, scoped, tag = 'input window, operand 3']
    #allocation9 [shape = 's32[2]{0}', space=sflag, size = 0x8, scoped, tag = 'scoped memory for tpu_custom_call.1']
    #allocation10 [shape = 'u8[16384]{0}', space=vmem, size = 0x4000, scoped, tag = 'input window, operand 5, single buffered']
    #allocation11 [shape = 'u8[1024]{0}', space=vmem, size = 0x400, scoped, tag = 'input window, operand 6, single buffered']
    #allocation12 [shape = 's32[1]{0}', space=sflag, size = 0x4, scoped, tag = 'scoped memory for tpu_custom_call.1']
    #allocation13 [shape = 'u8[16384]{0}', space=vmem, size = 0x4000, scoped, tag = 'input window, operand 7, single buffered']
    #allocation14 [shape = 'u8[1024]{0}', space=vmem, size = 0x400, scoped, tag = 'input window, operand 8, single buffered']
    #allocation15 [shape = 's32[1]{0}', space=sflag, size = 0x4, scoped, tag = 'scoped memory for tpu_custom_call.1']
    #allocation16 [shape = 'u8[16384]{0}', space=vmem, size = 0x4000, scoped, tag = 'input window, operand 11, single buffered']
    #allocation17 [shape = 'u8[16384]{0}', space=vmem, size = 0x4000, scoped, tag = 'output window, operand 0']
    %18 = vsyncpa [#allocation3], 0
    %s19 = scalar_lea.sflag [#allocation3], 1
    %20 = vsyncpa %s19, 0
    %21 = vsyncpa [#allocation6], 0
    %s22 = scalar_lea.sflag [#allocation6], 1
    %23 = vsyncpa %s22, 0
    %24 = vsyncpa [#allocation9], 0
    %s25 = scalar_lea.sflag [#allocation9], 1
    %26 = vsyncpa %s25, 0
    %27 = vsyncpa [#allocation12], 0
    %28 = vsyncpa [#allocation15], 0
    %29 = vsyncpa [#allocation4], 0
    %s30 = scalar_lea.sflag [#allocation4], 1
    %31 = vsyncpa %s30, 0
    loop: start=0, step=1, limit=4
    $region2: #{tpu_custom_call.1} parent=1 // loop_pre_header
      _
    $region3: #{tpu_custom_call.1} parent=1 // loop_header
      %s33 = sphi 0, %s37
      %p34 = scmp.ge.s32.totalorder %s33, 4
      %s43 = sphi 0, %s45
      %s46 = sphi 0, %s43
      %s47 = sphi 0, %s46
      %s63 = sphi 0, %s47
      %s69 = sphi 0, %s71
      %s72 = sphi 0, %s69
      %s73 = sphi 0, %s72
      %s89 = sphi 0, %s73
      %s95 = sphi 0, %s97
      %s98 = sphi 0, %s95
      %s99 = sphi 0, %s98
      %s115 = sphi 0, %s99
      %s121 = sphi 0, %s123
      %s124 = sphi 0, %s121
      %s125 = sphi 0, %s124
      %s141 = sphi 0, %s125
      %s147 = sphi 0, %s149
      %s150 = sphi 0, %s147
      %s151 = sphi 0, %s150
      %s167 = sphi 0, %s151
      %s171 = sphi 0, %s171
      %s173 = sphi 0, %s171
      %s174 = sphi 0, %s173
      %s188 = sphi 0, %s174
      %s192 = sphi 0, %s192
      %s194 = sphi 0, %s192
      %s195 = sphi 0, %s194
      %s209 = sphi 0, %s195
      %s213 = sphi 0, %s213
      %s215 = sphi 0, %s213
      %s216 = sphi 0, %s215
      %s230 = sphi 0, %s216
      %s234 = sphi 0, %s234
      %s236 = sphi 0, %s234
      %s237 = sphi 0, %s236
      %s251 = sphi 0, %s237
      %s255 = sphi 0, %s255
      %s257 = sphi 0, %s255
      %s258 = sphi 0, %s257
      %s272 = sphi 0, %s258
      %s276 = sphi 0, %s276
      %s278 = sphi 0, %s276
      %s279 = sphi 0, %s278
      %s293 = sphi 0, %s279
      %s297 = sphi 0, %s297
      %s299 = sphi 0, %s297
      %s300 = sphi 0, %s299
      %s314 = sphi 0, %s300
      %s318 = sphi 0, %s318
      %s320 = sphi 0, %s318
      %s321 = sphi 0, %s320
      %s335 = sphi 0, %s321
      %s341 = sphi 0, %s343
      %s344 = sphi 0, %s341
      %s345 = sphi 0, %s344
      %s361 = sphi 0, %s345
    $region4: #{tpu_custom_call.1} parent=1 // loop_header_branch
      %36 = sbr.rel (%p34) target = $region8
    $region5: #{tpu_custom_call.1} parent=1 // loop_body
      %s38 = ssub.s32 %s33, 1
      %s39 = ssub.s32 %s33, 2
      %s40 = sadd.s32 %s33, 1
      %s41 = ssub.s32 %s33, %s40
      %p42 = scmp.eq.s32.totalorder %s41, 0
      %s44 = sadd.s32 %s43, 1
      %s45 = scalar_select %p42, %s43, %s44
      %p48 = pneg %p42
      %p49 = scmp.eq.s32.totalorder %s33, 1
      %p50 = por %p48, %p49
      %p51 = scmp.ne.s32.totalorder %s43, %s46
      %p52 = scmp.eq.s32.totalorder %s33, 0
      %p53 = por %p51, %p52
      %p54 = scmp.ne.s32.totalorder %s43, %s46
      %p55 = scmp.eq.s32.totalorder %s38, 1
      %p56 = por %p54, %p55
      %p57 = scmp.ne.s32.totalorder %s46, %s47
      %p58 = scmp.eq.s32.totalorder %s38, 0
      %p59 = por %p57, %p58
      %p60 = scmp.ne.s32.totalorder %s46, %s47
      %p61 = scmp.eq.s32.totalorder %s39, 1
      %p62 = por %p60, %p61
      %p64 = scmp.ne.s32.totalorder %s47, %s63
      %p65 = scmp.eq.s32.totalorder %s39, 0
      %p66 = por %p64, %p65
      %s67 = ssub.s32 %s33, %s40
      %p68 = scmp.eq.s32.totalorder %s67, 0
      %s70 = sadd.s32 %s69, 1
      %s71 = scalar_select %p68, %s69, %s70
      %p74 = pneg %p68
      %p75 = scmp.eq.s32.totalorder %s33, 1
      %p76 = por %p74, %p75
      %p77 = scmp.ne.s32.totalorder %s69, %s72
      %p78 = scmp.eq.s32.totalorder %s33, 0
      %p79 = por %p77, %p78
      %p80 = scmp.ne.s32.totalorder %s69, %s72
      %p81 = scmp.eq.s32.totalorder %s38, 1
      %p82 = por %p80, %p81
      %p83 = scmp.ne.s32.totalorder %s72, %s73
      %p84 = scmp.eq.s32.totalorder %s38, 0
      %p85 = por %p83, %p84
      %p86 = scmp.ne.s32.totalorder %s72, %s73
      %p87 = scmp.eq.s32.totalorder %s39, 1
      %p88 = por %p86, %p87
      %p90 = scmp.ne.s32.totalorder %s73, %s89
      %p91 = scmp.eq.s32.totalorder %s39, 0
      %p92 = por %p90, %p91
      %s93 = ssub.s32 %s33, %s40
      %p94 = scmp.eq.s32.totalorder %s93, 0
      %s96 = sadd.s32 %s95, 1
      %s97 = scalar_select %p94, %s95, %s96
      %p100 = pneg %p94
      %p101 = scmp.eq.s32.totalorder %s33, 1
      %p102 = por %p100, %p101
      %p103 = scmp.ne.s32.totalorder %s95, %s98
      %p104 = scmp.eq.s32.totalorder %s33, 0
      %p105 = por %p103, %p104
      %p106 = scmp.ne.s32.totalorder %s95, %s98
      %p107 = scmp.eq.s32.totalorder %s38, 1
      %p108 = por %p106, %p107
      %p109 = scmp.ne.s32.totalorder %s98, %s99
      %p110 = scmp.eq.s32.totalorder %s38, 0
      %p111 = por %p109, %p110
      %p112 = scmp.ne.s32.totalorder %s98, %s99
      %p113 = scmp.eq.s32.totalorder %s39, 1
      %p114 = por %p112, %p113
      %p116 = scmp.ne.s32.totalorder %s99, %s115
      %p117 = scmp.eq.s32.totalorder %s39, 0
      %p118 = por %p116, %p117
      %s119 = ssub.s32 %s33, %s40
      %p120 = scmp.eq.s32.totalorder %s119, 0
      %s122 = sadd.s32 %s121, 1
      %s123 = scalar_select %p120, %s121, %s122
      %p126 = pneg %p120
      %p127 = scmp.eq.s32.totalorder %s33, 1
      %p128 = por %p126, %p127
      %p129 = scmp.ne.s32.totalorder %s121, %s124
      %p130 = scmp.eq.s32.totalorder %s33, 0
      %p131 = por %p129, %p130
      %p132 = scmp.ne.s32.totalorder %s121, %s124
      %p133 = scmp.eq.s32.totalorder %s38, 1
      %p134 = por %p132, %p133
      %p135 = scmp.ne.s32.totalorder %s124, %s125
      %p136 = scmp.eq.s32.totalorder %s38, 0
      %p137 = por %p135, %p136
      %p138 = scmp.ne.s32.totalorder %s124, %s125
      %p139 = scmp.eq.s32.totalorder %s39, 1
      %p140 = por %p138, %p139
      %p142 = scmp.ne.s32.totalorder %s125, %s141
      %p143 = scmp.eq.s32.totalorder %s39, 0
      %p144 = por %p142, %p143
      %s145 = ssub.s32 %s33, %s40
      %p146 = scmp.eq.s32.totalorder %s145, 0
      %s148 = sadd.s32 %s147, 1
      %s149 = scalar_select %p146, %s147, %s148
      %p152 = pneg %p146
      %p153 = scmp.eq.s32.totalorder %s33, 1
      %p154 = por %p152, %p153
      %p155 = scmp.ne.s32.totalorder %s147, %s150
      %p156 = scmp.eq.s32.totalorder %s33, 0
      %p157 = por %p155, %p156
      %p158 = scmp.ne.s32.totalorder %s147, %s150
      %p159 = scmp.eq.s32.totalorder %s38, 1
      %p160 = por %p158, %p159
      %p161 = scmp.ne.s32.totalorder %s150, %s151
      %p162 = scmp.eq.s32.totalorder %s38, 0
      %p163 = por %p161, %p162
      %p164 = scmp.ne.s32.totalorder %s150, %s151
      %p165 = scmp.eq.s32.totalorder %s39, 1
      %p166 = por %p164, %p165
      %p168 = scmp.ne.s32.totalorder %s151, %s167
      %p169 = scmp.eq.s32.totalorder %s39, 0
      %p170 = por %p168, %p169
      %s172 = sadd.s32 %s171, 1
      %p175 = scmp.eq.s32.totalorder %s33, 1
      %p176 = scmp.ne.s32.totalorder %s171, %s173
      %p177 = scmp.eq.s32.totalorder %s33, 0
      %p178 = por %p176, %p177
      %p179 = scmp.ne.s32.totalorder %s171, %s173
      %p180 = scmp.eq.s32.totalorder %s38, 1
      %p181 = por %p179, %p180
      %p182 = scmp.ne.s32.totalorder %s173, %s174
      %p183 = scmp.eq.s32.totalorder %s38, 0
      %p184 = por %p182, %p183
      %p185 = scmp.ne.s32.totalorder %s173, %s174
      %p186 = scmp.eq.s32.totalorder %s39, 1
      %p187 = por %p185, %p186
      %p189 = scmp.ne.s32.totalorder %s174, %s188
      %p190 = scmp.eq.s32.totalorder %s39, 0
      %p191 = por %p189, %p190
      %s193 = sadd.s32 %s192, 1
      %p196 = scmp.eq.s32.totalorder %s33, 1
      %p197 = scmp.ne.s32.totalorder %s192, %s194
      %p198 = scmp.eq.s32.totalorder %s33, 0
      %p199 = por %p197, %p198
      %p200 = scmp.ne.s32.totalorder %s192, %s194
      %p201 = scmp.eq.s32.totalorder %s38, 1
      %p202 = por %p200, %p201
      %p203 = scmp.ne.s32.totalorder %s194, %s195
      %p204 = scmp.eq.s32.totalorder %s38, 0
      %p205 = por %p203, %p204
      %p206 = scmp.ne.s32.totalorder %s194, %s195
      %p207 = scmp.eq.s32.totalorder %s39, 1
      %p208 = por %p206, %p207
      %p210 = scmp.ne.s32.totalorder %s195, %s209
      %p211 = scmp.eq.s32.totalorder %s39, 0
      %p212 = por %p210, %p211
      %s214 = sadd.s32 %s213, 1
      %p217 = scmp.eq.s32.totalorder %s33, 1
      %p218 = scmp.ne.s32.totalorder %s213, %s215
      %p219 = scmp.eq.s32.totalorder %s33, 0
      %p220 = por %p218, %p219
      %p221 = scmp.ne.s32.totalorder %s213, %s215
      %p222 = scmp.eq.s32.totalorder %s38, 1
      %p223 = por %p221, %p222
      %p224 = scmp.ne.s32.totalorder %s215, %s216
      %p225 = scmp.eq.s32.totalorder %s38, 0
      %p226 = por %p224, %p225
      %p227 = scmp.ne.s32.totalorder %s215, %s216
      %p228 = scmp.eq.s32.totalorder %s39, 1
      %p229 = por %p227, %p228
      %p231 = scmp.ne.s32.totalorder %s216, %s230
      %p232 = scmp.eq.s32.totalorder %s39, 0
      %p233 = por %p231, %p232
      %s235 = sadd.s32 %s234, 1
      %p238 = scmp.eq.s32.totalorder %s33, 1
      %p239 = scmp.ne.s32.totalorder %s234, %s236
      %p240 = scmp.eq.s32.totalorder %s33, 0
      %p241 = por %p239, %p240
      %p242 = scmp.ne.s32.totalorder %s234, %s236
      %p243 = scmp.eq.s32.totalorder %s38, 1
      %p244 = por %p242, %p243
      %p245 = scmp.ne.s32.totalorder %s236, %s237
      %p246 = scmp.eq.s32.totalorder %s38, 0
      %p247 = por %p245, %p246
      %p248 = scmp.ne.s32.totalorder %s236, %s237
      %p249 = scmp.eq.s32.totalorder %s39, 1
      %p250 = por %p248, %p249
      %p252 = scmp.ne.s32.totalorder %s237, %s251
      %p253 = scmp.eq.s32.totalorder %s39, 0
      %p254 = por %p252, %p253
      %s256 = sadd.s32 %s255, 1
      %p259 = scmp.eq.s32.totalorder %s33, 1
      %p260 = scmp.ne.s32.totalorder %s255, %s257
      %p261 = scmp.eq.s32.totalorder %s33, 0
      %p262 = por %p260, %p261
      %p263 = scmp.ne.s32.totalorder %s255, %s257
      %p264 = scmp.eq.s32.totalorder %s38, 1
      %p265 = por %p263, %p264
      %p266 = scmp.ne.s32.totalorder %s257, %s258
      %p267 = scmp.eq.s32.totalorder %s38, 0
      %p268 = por %p266, %p267
      %p269 = scmp.ne.s32.totalorder %s257, %s258
      %p270 = scmp.eq.s32.totalorder %s39, 1
      %p271 = por %p269, %p270
      %p273 = scmp.ne.s32.totalorder %s258, %s272
      %p274 = scmp.eq.s32.totalorder %s39, 0
      %p275 = por %p273, %p274
      %s277 = sadd.s32 %s276, 1
      %p280 = scmp.eq.s32.totalorder %s33, 1
      %p281 = scmp.ne.s32.totalorder %s276, %s278
      %p282 = scmp.eq.s32.totalorder %s33, 0
      %p283 = por %p281, %p282
      %p284 = scmp.ne.s32.totalorder %s276, %s278
      %p285 = scmp.eq.s32.totalorder %s38, 1
      %p286 = por %p284, %p285
      %p287 = scmp.ne.s32.totalorder %s278, %s279
      %p288 = scmp.eq.s32.totalorder %s38, 0
      %p289 = por %p287, %p288
      %p290 = scmp.ne.s32.totalorder %s278, %s279
      %p291 = scmp.eq.s32.totalorder %s39, 1
      %p292 = por %p290, %p291
      %p294 = scmp.ne.s32.totalorder %s279, %s293
      %p295 = scmp.eq.s32.totalorder %s39, 0
      %p296 = por %p294, %p295
      %s298 = sadd.s32 %s297, 1
      %p301 = scmp.eq.s32.totalorder %s33, 1
      %p302 = scmp.ne.s32.totalorder %s297, %s299
      %p303 = scmp.eq.s32.totalorder %s33, 0
      %p304 = por %p302, %p303
      %p305 = scmp.ne.s32.totalorder %s297, %s299
      %p306 = scmp.eq.s32.totalorder %s38, 1
      %p307 = por %p305, %p306
      %p308 = scmp.ne.s32.totalorder %s299, %s300
      %p309 = scmp.eq.s32.totalorder %s38, 0
      %p310 = por %p308, %p309
      %p311 = scmp.ne.s32.totalorder %s299, %s300
      %p312 = scmp.eq.s32.totalorder %s39, 1
      %p313 = por %p311, %p312
      %p315 = scmp.ne.s32.totalorder %s300, %s314
      %p316 = scmp.eq.s32.totalorder %s39, 0
      %p317 = por %p315, %p316
      %s319 = sadd.s32 %s318, 1
      %p322 = scmp.eq.s32.totalorder %s33, 1
      %p323 = scmp.ne.s32.totalorder %s318, %s320
      %p324 = scmp.eq.s32.totalorder %s33, 0
      %p325 = por %p323, %p324
      %p326 = scmp.ne.s32.totalorder %s318, %s320
      %p327 = scmp.eq.s32.totalorder %s38, 1
      %p328 = por %p326, %p327
      %p329 = scmp.ne.s32.totalorder %s320, %s321
      %p330 = scmp.eq.s32.totalorder %s38, 0
      %p331 = por %p329, %p330
      %p332 = scmp.ne.s32.totalorder %s320, %s321
      %p333 = scmp.eq.s32.totalorder %s39, 1
      %p334 = por %p332, %p333
      %p336 = scmp.ne.s32.totalorder %s321, %s335
      %p337 = scmp.eq.s32.totalorder %s39, 0
      %p338 = por %p336, %p337
      %s339 = ssub.s32 %s33, %s40
      %p340 = scmp.eq.s32.totalorder %s339, 0
      %s342 = sadd.s32 %s341, 1
      %s343 = scalar_select %p340, %s341, %s342
      %p346 = pneg %p340
      %p347 = scmp.eq.s32.totalorder %s33, 1
      %p348 = por %p346, %p347
      %p349 = scmp.ne.s32.totalorder %s341, %s344
      %p350 = scmp.eq.s32.totalorder %s33, 0
      %p351 = por %p349, %p350
      %p352 = scmp.ne.s32.totalorder %s341, %s344
      %p353 = scmp.eq.s32.totalorder %s38, 1
      %p354 = por %p352, %p353
      %p355 = scmp.ne.s32.totalorder %s344, %s345
      %p356 = scmp.eq.s32.totalorder %s38, 0
      %p357 = por %p355, %p356
      %p358 = scmp.ne.s32.totalorder %s344, %s345
      %p359 = scmp.eq.s32.totalorder %s39, 1
      %p360 = por %p358, %p359
      %p362 = scmp.ne.s32.totalorder %s345, %s361
      %p363 = scmp.eq.s32.totalorder %s39, 0
      %p364 = por %p362, %p363
      %p365 = scmp.le.s32.totalorder 1, %s33
      %p366 = scmp.lt.s32.totalorder %s33, 3
      %p367 = pnand %p365, %p366
      %p368 = pneg %p367
      // Predicated region
      $region9: #{tpu_custom_call.1} parent=5 // pred_check
        _
      $region10: #{tpu_custom_call.1} parent=5 // pred_check_branch
        %370 = sbr.rel (%p367) target = $region12
      $region11: #{tpu_custom_call.1} parent=5 // pred_region
        %s371 = ssub.s32 %s33, 1
        // Predicated region
        $region13: #{tpu_custom_call.1} parent=11 // pred_check
          %p372 = pneg %p184
        $region14: #{tpu_custom_call.1} parent=11 // pred_check_branch
          %374 = sbr.rel (%p372) target = $region16
        $region15: #{tpu_custom_call.1} parent=11 // pred_region
          %s376 = ssub.s32 512, 512
          %377 = vsyncadd [#allocation9], %s376
          %s378 = sshll.u32 [#allocation10], 4
          %s379 = int_to_ptr.vmem [resolvable:$true] %s378
          %384 = dma.hbm_to_vmem [thread:$0]  %s5, 512, %s379, [#allocation9], 64, 64, 4
        $region16: #{tpu_custom_call.1} parent=11 // pred_fallthru
          _
        // Predicated region
        $region17: #{tpu_custom_call.1} parent=11 // pred_check
          %p385 = pneg %p205
        $region18: #{tpu_custom_call.1} parent=11 // pred_check_branch
          %387 = sbr.rel (%p385) target = $region20
        $region19: #{tpu_custom_call.1} parent=11 // pred_region
          %s389 = ssub.s32 32, 32
          %390 = vsyncadd [#allocation12], %s389
          %s391 = sshll.u32 [#allocation11], 4
          %s392 = int_to_ptr.vmem [resolvable:$true] %s391
          %397 = dma.hbm_to_vmem [thread:$0]  %s6, 32, %s392, [#allocation12], 16, 16, 1
        $region20: #{tpu_custom_call.1} parent=11 // pred_fallthru
          _
        // Predicated region
        $region21: #{tpu_custom_call.1} parent=11 // pred_check
          %p398 = pneg %p226
        $region22: #{tpu_custom_call.1} parent=11 // pred_check_branch
          %400 = sbr.rel (%p398) target = $region24
        $region23: #{tpu_custom_call.1} parent=11 // pred_region
          %s402 = ssub.s32 512, 512
          %403 = vsyncadd [#allocation12], %s402
          %s404 = sshll.u32 [#allocation13], 4
          %s405 = int_to_ptr.vmem [resolvable:$true] %s404
          %410 = dma.hbm_to_vmem [thread:$0]  %s7, 512, %s405, [#allocation12], 64, 64, 4
        $region24: #{tpu_custom_call.1} parent=11 // pred_fallthru
          _
        // Predicated region
        $region25: #{tpu_custom_call.1} parent=11 // pred_check
          %p411 = pneg %p247
        $region26: #{tpu_custom_call.1} parent=11 // pred_check_branch
          %413 = sbr.rel (%p411) target = $region28
        $region27: #{tpu_custom_call.1} parent=11 // pred_region
          %s415 = ssub.s32 32, 32
          %416 = vsyncadd [#allocation15], %s415
          %s417 = sshll.u32 [#allocation14], 4
          %s418 = int_to_ptr.vmem [resolvable:$true] %s417
          %423 = dma.hbm_to_vmem [thread:$0]  %s8, 32, %s418, [#allocation15], 16, 16, 1
        $region28: #{tpu_custom_call.1} parent=11 // pred_fallthru
          _
        // Predicated region
        $region29: #{tpu_custom_call.1} parent=11 // pred_check
          %p424 = pneg %p268
        $region30: #{tpu_custom_call.1} parent=11 // pred_check_branch
          %426 = sbr.rel (%p424) target = $region32
        $region31: #{tpu_custom_call.1} parent=11 // pred_region
          _
        $region32: #{tpu_custom_call.1} parent=11 // pred_fallthru
          _
        // Predicated region
        $region33: #{tpu_custom_call.1} parent=11 // pred_check
          %p427 = pneg %p289
        $region34: #{tpu_custom_call.1} parent=11 // pred_check_branch
          %429 = sbr.rel (%p427) target = $region36
        $region35: #{tpu_custom_call.1} parent=11 // pred_region
          _
        $region36: #{tpu_custom_call.1} parent=11 // pred_fallthru
          _
        // Predicated region
        $region37: #{tpu_custom_call.1} parent=11 // pred_check
          %p430 = pneg %p310
        $region38: #{tpu_custom_call.1} parent=11 // pred_check_branch
          %432 = sbr.rel (%p430) target = $region40
        $region39: #{tpu_custom_call.1} parent=11 // pred_region
          %s434 = ssub.s32 512, 512
          %435 = vsyncadd [#allocation15], %s434
          %s436 = sshll.u32 [#allocation16], 4
          %s437 = int_to_ptr.vmem [resolvable:$true] %s436
          %442 = dma.hbm_to_vmem [thread:$0]  %s11, 512, %s437, [#allocation15], 64, 64, 4
        $region40: #{tpu_custom_call.1} parent=11 // pred_fallthru
          _
        // Predicated region
        $region41: #{tpu_custom_call.1} parent=11 // pred_check
          %p443 = pneg %p331
        $region42: #{tpu_custom_call.1} parent=11 // pred_check_branch
          %445 = sbr.rel (%p443) target = $region44
        $region43: #{tpu_custom_call.1} parent=11 // pred_region
          _
        $region44: #{tpu_custom_call.1} parent=11 // pred_fallthru
          _
      $region12: #{tpu_custom_call.1} parent=5 // pred_fallthru
        _
      %p446 = scmp.lt.s32.totalorder %s33, 2
      // Predicated region
      $region45: #{tpu_custom_call.1} parent=5 // pred_check
        %p447 = pneg %p446
      $region46: #{tpu_custom_call.1} parent=5 // pred_check_branch
        %449 = sbr.rel (%p447) target = $region48
      $region47: #{tpu_custom_call.1} parent=5 // pred_region
        // Predicated region
        $region49: #{tpu_custom_call.1} parent=47 // pred_check
          %p450 = pneg %p53
        $region50: #{tpu_custom_call.1} parent=47 // pred_check_branch
          %452 = sbr.rel (%p450) target = $region52
        $region51: #{tpu_custom_call.1} parent=47 // pred_region
          %s453 = sand.u32 %s43, 1
          %s454 = scalar_lea.sflag [#allocation3], %s453
          %s455 = sand.u32 %s43, 1
          %s456 = smul.addr %s455, 8
          %s457 = scalar_lea.vmem [#allocation2], %s456
          %s459 = ssub.s32 128, 128
          %460 = vsyncadd %s454, %s459
          %s461 = smul.addr %s33, 128
          %s462 = scalar_lea.hbm %s0, %s461
          %s464 = sshll.u32 %s457, 4
          %s465 = int_to_ptr.vmem [resolvable:$true] %s464
          %467 = dma.hbm_to_vmem [thread:$0]  %s462, 128, %s465, %s454
        $region52: #{tpu_custom_call.1} parent=47 // pred_fallthru
          _
        // Predicated region
        $region53: #{tpu_custom_call.1} parent=47 // pred_check
          %p468 = pneg %p79
        $region54: #{tpu_custom_call.1} parent=47 // pred_check_branch
          %470 = sbr.rel (%p468) target = $region56
        $region55: #{tpu_custom_call.1} parent=47 // pred_region
          %s471 = sand.u32 %s33, 1
          %s472 = scalar_lea.sflag [#allocation6], %s471
          %s473 = sand.u32 %s69, 1
          %s474 = smul.addr %s473, 8
          %s475 = scalar_lea.vmem [#allocation5], %s474
          %s477 = ssub.s32 128, 128
          %478 = vsyncadd %s472, %s477
          %s479 = smul.addr %s33, 128
          %s480 = scalar_lea.hbm %s1, %s479
          %s482 = sshll.u32 %s475, 4
          %s483 = int_to_ptr.vmem [resolvable:$true] %s482
          %485 = dma.hbm_to_vmem [thread:$0]  %s480, 128, %s483, %s472
        $region56: #{tpu_custom_call.1} parent=47 // pred_fallthru
          _
        // Predicated region
        $region57: #{tpu_custom_call.1} parent=47 // pred_check
          %p486 = pneg %p105
        $region58: #{tpu_custom_call.1} parent=47 // pred_check_branch
          %488 = sbr.rel (%p486) target = $region60
        $region59: #{tpu_custom_call.1} parent=47 // pred_region
          %s489 = sand.u32 %s33, 1
          %s490 = scalar_lea.sflag [#allocation6], %s489
          %s491 = sand.u32 %s95, 1
          %s492 = smul.addr %s491, 16
          %s493 = scalar_lea.vmem [#allocation7], %s492
          %s495 = ssub.s32 256, 256
          %496 = vsyncadd %s490, %s495
          %s497 = smul.addr %s33, 2
          %s498 = smul.addr %s497, 128
          %s499 = scalar_lea.hbm %s2, %s498
          %s500 = sshll.u32 %s493, 4
          %s501 = int_to_ptr.vmem [resolvable:$true] %s500
          %506 = dma.hbm_to_vmem [thread:$0]  %s499, 256, %s501, %s490, 128, 128, 8
        $region60: #{tpu_custom_call.1} parent=47 // pred_fallthru
          _
        // Predicated region
        $region61: #{tpu_custom_call.1} parent=47 // pred_check
          %p507 = pneg %p131
        $region62: #{tpu_custom_call.1} parent=47 // pred_check_branch
          %509 = sbr.rel (%p507) target = $region64
        $region63: #{tpu_custom_call.1} parent=47 // pred_region
          %s510 = sand.u32 %s33, 1
          %s511 = scalar_lea.sflag [#allocation9], %s510
          %s512 = sand.u32 %s121, 1
          %s513 = smul.addr %s512, 16
          %s514 = scalar_lea.vmem [#allocation8], %s513
          %s516 = ssub.s32 256, 256
          %517 = vsyncadd %s511, %s516
          %s518 = smul.addr %s33, 2
          %s519 = smul.addr %s518, 128
          %s520 = scalar_lea.hbm %s3, %s519
          %s521 = sshll.u32 %s514, 4
          %s522 = int_to_ptr.vmem [resolvable:$true] %s521
          %527 = dma.hbm_to_vmem [thread:$0]  %s520, 256, %s522, %s511, 128, 128, 8
        $region64: #{tpu_custom_call.1} parent=47 // pred_fallthru
          _
        // Predicated region
        $region65: #{tpu_custom_call.1} parent=47 // pred_check
          %p528 = pneg %p157
        $region66: #{tpu_custom_call.1} parent=47 // pred_check_branch
          %530 = sbr.rel (%p528) target = $region68
        $region67: #{tpu_custom_call.1} parent=47 // pred_region
          %p531 = scmp.lt.s32.totalorder %s33, 1
          %s532 = scalar_select %p531, %s33, 1
          %s533 = scalar_lea.vmem %s4, %s532
        $region68: #{tpu_custom_call.1} parent=47 // pred_fallthru
          _
      $region48: #{tpu_custom_call.1} parent=5 // pred_fallthru
        _
      %p534 = scmp.le.s32.totalorder 1, %s33
      %p535 = scmp.lt.s32.totalorder %s33, 3
      %p536 = pnand %p534, %p535
      %p537 = pneg %p536
      // Predicated region
      $region69: #{tpu_custom_call.1} parent=5 // pred_check
        _
      $region70: #{tpu_custom_call.1} parent=5 // pred_check_branch
        %539 = sbr.rel (%p536) target = $region72
      $region71: #{tpu_custom_call.1} parent=5 // pred_region
        %s540 = ssub.s32 %s33, 1
        %s541 = sand.u32 %s46, 1
        %s542 = scalar_lea.sflag [#allocation3], %s541
        %s543 = sand.u32 %s46, 1
        %s544 = smul.addr %s543, 8
        %s545 = scalar_lea.vmem [#allocation2], %s544
        // Predicated region
        $region73: #{tpu_custom_call.1} parent=71 // pred_check
          %p546 = pneg %p59
        $region74: #{tpu_custom_call.1} parent=71 // pred_check_branch
          %548 = sbr.rel (%p546) target = $region76
        $region75: #{tpu_custom_call.1} parent=71 // pred_region
          %549 = dma.done %s542, 128
        $region76: #{tpu_custom_call.1} parent=71 // pred_fallthru
          _
        %s550 = sand.u32 %s38, 1
        %s551 = scalar_lea.sflag [#allocation6], %s550
        %s552 = sand.u32 %s72, 1
        %s553 = smul.addr %s552, 8
        %s554 = scalar_lea.vmem [#allocation5], %s553
        // Predicated region
        $region77: #{tpu_custom_call.1} parent=71 // pred_check
          %p555 = pneg %p85
        $region78: #{tpu_custom_call.1} parent=71 // pred_check_branch
          %557 = sbr.rel (%p555) target = $region80
        $region79: #{tpu_custom_call.1} parent=71 // pred_region
          %558 = dma.done %s551, 128
        $region80: #{tpu_custom_call.1} parent=71 // pred_fallthru
          _
        %s559 = sand.u32 %s38, 1
        %s560 = scalar_lea.sflag [#allocation6], %s559
        %s561 = sand.u32 %s98, 1
        %s562 = smul.addr %s561, 16
        %s563 = scalar_lea.vmem [#allocation7], %s562
        // Predicated region
        $region81: #{tpu_custom_call.1} parent=71 // pred_check
          %p564 = pneg %p111
        $region82: #{tpu_custom_call.1} parent=71 // pred_check_branch
          %566 = sbr.rel (%p564) target = $region84
        $region83: #{tpu_custom_call.1} parent=71 // pred_region
          %567 = dma.done %s560, 256
        $region84: #{tpu_custom_call.1} parent=71 // pred_fallthru
          _
        %s568 = sand.u32 %s38, 1
        %s569 = scalar_lea.sflag [#allocation9], %s568
        %s570 = sand.u32 %s124, 1
        %s571 = smul.addr %s570, 16
        %s572 = scalar_lea.vmem [#allocation8], %s571
        // Predicated region
        $region85: #{tpu_custom_call.1} parent=71 // pred_check
          %p573 = pneg %p137
        $region86: #{tpu_custom_call.1} parent=71 // pred_check_branch
          %575 = sbr.rel (%p573) target = $region88
        $region87: #{tpu_custom_call.1} parent=71 // pred_region
          %576 = dma.done %s569, 256
        $region88: #{tpu_custom_call.1} parent=71 // pred_fallthru
          _
        // Predicated region
        $region89: #{tpu_custom_call.1} parent=71 // pred_check
          %p577 = pneg %p184
        $region90: #{tpu_custom_call.1} parent=71 // pred_check_branch
          %579 = sbr.rel (%p577) target = $region92
        $region91: #{tpu_custom_call.1} parent=71 // pred_region
          %580 = dma.done [#allocation9], 512
        $region92: #{tpu_custom_call.1} parent=71 // pred_fallthru
          _
        // Predicated region
        $region93: #{tpu_custom_call.1} parent=71 // pred_check
          %p581 = pneg %p205
        $region94: #{tpu_custom_call.1} parent=71 // pred_check_branch
          %583 = sbr.rel (%p581) target = $region96
        $region95: #{tpu_custom_call.1} parent=71 // pred_region
          %584 = dma.done [#allocation12], 32
        $region96: #{tpu_custom_call.1} parent=71 // pred_fallthru
          _
        // Predicated region
        $region97: #{tpu_custom_call.1} parent=71 // pred_check
          %p585 = pneg %p226
        $region98: #{tpu_custom_call.1} parent=71 // pred_check_branch
          %587 = sbr.rel (%p585) target = $region100
        $region99: #{tpu_custom_call.1} parent=71 // pred_region
          %588 = dma.done [#allocation12], 512
        $region100: #{tpu_custom_call.1} parent=71 // pred_fallthru
          _
        // Predicated region
        $region101: #{tpu_custom_call.1} parent=71 // pred_check
          %p589 = pneg %p247
        $region102: #{tpu_custom_call.1} parent=71 // pred_check_branch
          %591 = sbr.rel (%p589) target = $region104
        $region103: #{tpu_custom_call.1} parent=71 // pred_region
          %592 = dma.done [#allocation15], 32
        $region104: #{tpu_custom_call.1} parent=71 // pred_fallthru
          _
        // Predicated region
        $region105: #{tpu_custom_call.1} parent=71 // pred_check
          %p593 = pneg %p310
        $region106: #{tpu_custom_call.1} parent=71 // pred_check_branch
          %595 = sbr.rel (%p593) target = $region108
        $region107: #{tpu_custom_call.1} parent=71 // pred_region
          %596 = dma.done [#allocation15], 512
        $region108: #{tpu_custom_call.1} parent=71 // pred_fallthru
          _
        %s597 = sand.u32 %s46, 1
        %s598 = scalar_lea.sflag [#allocation3], %s597
        %s599 = sand.u32 %s46, 1
        %s600 = smul.addr %s599, 8
        %s601 = scalar_lea.vmem [#allocation2], %s600
        %p602 = pneg %p59
        %p603 = pneg %p56
        %s604 = sand.u32 %s38, 1
        %s605 = scalar_lea.sflag [#allocation6], %s604
        %s606 = sand.u32 %s72, 1
        %s607 = smul.addr %s606, 8
        %s608 = scalar_lea.vmem [#allocation5], %s607
        %p609 = pneg %p85
        %p610 = pneg %p82
        %s611 = sand.u32 %s38, 1
        %s612 = scalar_lea.sflag [#allocation6], %s611
        %s613 = sand.u32 %s98, 1
        %s614 = smul.addr %s613, 16
        %s615 = scalar_lea.vmem [#allocation7], %s614
        %p616 = pneg %p111
        %p617 = pneg %p108
        %s618 = sand.u32 %s38, 1
        %s619 = scalar_lea.sflag [#allocation9], %s618
        %s620 = sand.u32 %s124, 1
        %s621 = smul.addr %s620, 16
        %s622 = scalar_lea.vmem [#allocation8], %s621
        %p623 = pneg %p137
        %p624 = pneg %p134
        %p625 = scmp.lt.s32.totalorder %s38, 1
        %s626 = scalar_select %p625, %s38, 1
        %s627 = scalar_lea.vmem %s4, %s626
        %p628 = pneg %p163
        %p629 = pneg %p160
        %p630 = pneg %p184
        %p631 = pneg %p181
        %p632 = pneg %p205
        %p633 = pneg %p202
        %p634 = pneg %p226
        %p635 = pneg %p223
        %p636 = pneg %p247
        %p637 = pneg %p244
        %p638 = pneg %p268
        %p639 = pneg %p265
        %p640 = pneg %p289
        %p641 = pneg %p286
        %p642 = pneg %p310
        %p643 = pneg %p307
        %p644 = pneg %p331
        %p645 = pneg %p328
        %p646 = pneg %p357
        %p647 = pneg %p354
        %s648 = sand.u32 %s344, 1
        %s649 = scalar_lea.sflag [#allocation4], %s648
        %s650 = sand.u32 %s344, 1
        %s651 = smul.addr %s650, 16
        %s652 = scalar_lea.vmem [#allocation17], %s651
        %p653 = scmp.lt.s32.totalorder %s38, 1
        %s654 = scalar_select %p653, %s38, 1
        %s655 = scalar_lea.vmem %s4, %s654
        %v657 = vld [vmem:[%s545] sm:$0xff]
        %v658 = vld [vmem:[%s554] sm:$0xff]
        %v659 = vld [vmem:[%s563] sm:$0xff]
        %v660 = vld [vmem:[%s563 + $0x8] sm:$0xff]
        %v661 = vld [vmem:[%s572] sm:$0xff]
        %v662 = vld [vmem:[%s572 + $0x8] sm:$0xff]
        %v663 = vadd.f32 %v659, %v661
        %v664 = vadd.f32 %v660, %v662
        %v665 = vpack.c.bf16 %v664, %v663
        %v666 = vpack.c.bf16 %v660, %v659
        %v667 = vld [vmem:[%s655] sm:$0x1]
        %v668 = vadd.f32 %v657, %v658
        %v669 = vpack.c.bf16 %v668, %v668
        %v670 = vld [vmem:[#allocation10] sm:$0xf]
        %v671 = vld [vmem:[#allocation10 + $0x4] sm:$0xf]
        %v672 = vld [vmem:[#allocation10 + $0x8] sm:$0xf]
        %v673 = vld [vmem:[#allocation10 + $0xc] sm:$0xf]
        %v674 = vld [vmem:[#allocation11] sm:$0x1]
        %v676 = vlaneseq
        %v677 = vshrl.u32 %v676, 7
        %v678 = vsub.s32 0, %v677
        %v679 = vrot.slane %v674, %v678
        %v685 = vunpack.c.l.b16 %v670
        %v686 = vunpack.c.l.b16 %v671
        %v687 = vunpack.c.l.b16 %v672
        %v688 = vunpack.c.l.b16 %v673
        %v689 = vpack.c.b16 %v686, %v685
        %v690 = vpack.c.b16 %v688, %v687
        %vm693 = vcmask 261120
        %v695 = vsel %vm693, %v669, 0
        %697 = vmatprep.subr.bf16.mxu0 0
        %698 = vmatpush1.bf16.msra.mxu0 %v689
        %699 = vmatprep.subr.bf16.mxu0 0
        %700 = vmatpush1.bf16.msra.mxu0 %v690
        %701 = vmatprep.subr.bf16.mxu0 0
        %702 = vmatpush1.bf16.msra.mxu0 0
        %703 = vmatprep.subr.bf16.mxu0 0
        %704 = vmatpush1.bf16.msra.mxu0 0
        %705 = vmatprep.subr.bf16.mxu0 0
        %706 = vmatpush1.bf16.msra.mxu0 0
        %707 = vmatprep.subr.bf16.mxu0 0
        %708 = vmatpush1.bf16.msra.mxu0 0
        %709 = vmatprep.subr.bf16.mxu0 0
        %710 = vmatpush1.bf16.msra.mxu0 0
        %711 = vmatprep.subr.bf16.mxu0 0
        %712 = vmatpush1.bf16.msra.mxu0 0
        %713 = vmatprep.subr.bf16.mxu0 0
        %714 = vmatpush1.bf16.msra.mxu0 0
        %715 = vmatprep.subr.bf16.mxu0 0
        %716 = vmatpush1.bf16.msra.mxu0 0
        %717 = vmatprep.subr.bf16.mxu0 0
        %718 = vmatpush1.bf16.msra.mxu0 0
        %719 = vmatprep.subr.bf16.mxu0 0
        %720 = vmatpush1.bf16.msra.mxu0 0
        %721 = vmatprep.subr.bf16.mxu0 0
        %722 = vmatpush1.bf16.msra.mxu0 0
        %723 = vmatprep.subr.bf16.mxu0 0
        %724 = vmatpush1.bf16.msra.mxu0 0
        %725 = vmatprep.subr.bf16.mxu0 0
        %726 = vmatpush1.bf16.msra.mxu0 0
        %727 = vmatprep.subr.bf16.mxu0 0
        %728 = vmatpush1.bf16.msra.mxu0 0
        %729 = vmatprep.mubr.bf16.mxu0 0
        %730 = vmatmul.mubr.bf16.gmra.mrb[0].mxu0 %v695
        %v731 = vpop.f32.mrb[0].mxu0
        %v732 = vadd.f32 %v679, %v731
        %v733 = vpop.f32.mrb[0].mxu0
        %v734 = vpop.f32.mrb[0].mxu0
        %v735 = vpop.f32.mrb[0].mxu0
        %736 = vdwg.mxu0
        %v737 = vld [vmem:[#allocation13] sm:$0xf]
        %v738 = vld [vmem:[#allocation13 + $0x4] sm:$0xf]
        %v739 = vld [vmem:[#allocation13 + $0x8] sm:$0xf]
        %v740 = vld [vmem:[#allocation13 + $0xc] sm:$0xf]
        %v741 = vld [vmem:[#allocation14] sm:$0x1]
        %v743 = vlaneseq
        %v744 = vshrl.u32 %v743, 7
        %v745 = vsub.s32 0, %v744
        %v746 = vrot.slane %v741, %v745
        %v752 = vunpack.c.l.b16 %v737
        %v753 = vunpack.c.l.b16 %v738
        %v754 = vunpack.c.l.b16 %v739
        %v755 = vunpack.c.l.b16 %v740
        %v756 = vpack.c.b16 %v753, %v752
        %v757 = vpack.c.b16 %v755, %v754
        %v761 = vsel %vm693, %v665, 0
        %763 = vmatprep.subr.bf16.mxu0 0
        %764 = vmatpush1.bf16.msra.mxu0 %v756
        %765 = vmatprep.subr.bf16.mxu0 0
        %766 = vmatpush1.bf16.msra.mxu0 %v757
        %767 = vmatprep.subr.bf16.mxu0 0
        %768 = vmatpush1.bf16.msra.mxu0 0
        %769 = vmatprep.subr.bf16.mxu0 0
        %770 = vmatpush1.bf16.msra.mxu0 0
        %771 = vmatprep.subr.bf16.mxu0 0
        %772 = vmatpush1.bf16.msra.mxu0 0
        %773 = vmatprep.subr.bf16.mxu0 0
        %774 = vmatpush1.bf16.msra.mxu0 0
        %775 = vmatprep.subr.bf16.mxu0 0
        %776 = vmatpush1.bf16.msra.mxu0 0
        %777 = vmatprep.subr.bf16.mxu0 0
        %778 = vmatpush1.bf16.msra.mxu0 0
        %779 = vmatprep.subr.bf16.mxu0 0
        %780 = vmatpush1.bf16.msra.mxu0 0
        %781 = vmatprep.subr.bf16.mxu0 0
        %782 = vmatpush1.bf16.msra.mxu0 0
        %783 = vmatprep.subr.bf16.mxu0 0
        %784 = vmatpush1.bf16.msra.mxu0 0
        %785 = vmatprep.subr.bf16.mxu0 0
        %786 = vmatpush1.bf16.msra.mxu0 0
        %787 = vmatprep.subr.bf16.mxu0 0
        %788 = vmatpush1.bf16.msra.mxu0 0
        %789 = vmatprep.subr.bf16.mxu0 0
        %790 = vmatpush1.bf16.msra.mxu0 0
        %791 = vmatprep.subr.bf16.mxu0 0
        %792 = vmatpush1.bf16.msra.mxu0 0
        %793 = vmatprep.subr.bf16.mxu0 0
        %794 = vmatpush1.bf16.msra.mxu0 0
        %795 = vmatprep.mubr.bf16.mxu0 0
        %796 = vmatmul.mubr.bf16.gmra.mrb[0].mxu0 %v761
        %v797 = vpop.f32.mrb[0].mxu0
        %v798 = vadd.f32 %v746, %v797
        %v799 = vpop.f32.mrb[0].mxu0
        %v800 = vpop.f32.mrb[0].mxu0
        %v801 = vadd.f32 %v746, %v800
        %v802 = vpop.f32.mrb[0].mxu0
        %803 = vdwg.mxu0
        %v804 = vld [vmem:[%s9] sm:$0xf]
        %v805 = vld [vmem:[%s9 + $0x4] sm:$0xf]
        %v806 = vld [vmem:[%s9 + $0x8] sm:$0xf]
        %v807 = vld [vmem:[%s9 + $0xc] sm:$0xf]
        %v808 = vld [vmem:[%s10] sm:$0x1]
        %v810 = vlaneseq
        %v811 = vshrl.u32 %v810, 7
        %v812 = vsub.s32 0, %v811
        %v813 = vrot.slane %v808, %v812
        %v819 = vunpack.c.l.b16 %v804
        %v820 = vunpack.c.l.b16 %v805
        %v821 = vunpack.c.l.b16 %v806
        %v822 = vunpack.c.l.b16 %v807
        %v823 = vpack.c.b16 %v820, %v819
        %v824 = vpack.c.b16 %v822, %v821
        %v828 = vsel %vm693, %v666, 0
        %830 = vmatprep.subr.bf16.mxu0 0
        %831 = vmatpush1.bf16.msra.mxu0 %v823
        %832 = vmatprep.subr.bf16.mxu0 0
        %833 = vmatpush1.bf16.msra.mxu0 %v824
        %834 = vmatprep.subr.bf16.mxu0 0
        %835 = vmatpush1.bf16.msra.mxu0 0
        %836 = vmatprep.subr.bf16.mxu0 0
        %837 = vmatpush1.bf16.msra.mxu0 0
        %838 = vmatprep.subr.bf16.mxu0 0
        %839 = vmatpush1.bf16.msra.mxu0 0
        %840 = vmatprep.subr.bf16.mxu0 0
        %841 = vmatpush1.bf16.msra.mxu0 0
        %842 = vmatprep.subr.bf16.mxu0 0
        %843 = vmatpush1.bf16.msra.mxu0 0
        %844 = vmatprep.subr.bf16.mxu0 0
        %845 = vmatpush1.bf16.msra.mxu0 0
        %846 = vmatprep.subr.bf16.mxu0 0
        %847 = vmatpush1.bf16.msra.mxu0 0
        %848 = vmatprep.subr.bf16.mxu0 0
        %849 = vmatpush1.bf16.msra.mxu0 0
        %850 = vmatprep.subr.bf16.mxu0 0
        %851 = vmatpush1.bf16.msra.mxu0 0
        %852 = vmatprep.subr.bf16.mxu0 0
        %853 = vmatpush1.bf16.msra.mxu0 0
        %854 = vmatprep.subr.bf16.mxu0 0
        %855 = vmatpush1.bf16.msra.mxu0 0
        %856 = vmatprep.subr.bf16.mxu0 0
        %857 = vmatpush1.bf16.msra.mxu0 0
        %858 = vmatprep.subr.bf16.mxu0 0
        %859 = vmatpush1.bf16.msra.mxu0 0
        %860 = vmatprep.subr.bf16.mxu0 0
        %861 = vmatpush1.bf16.msra.mxu0 0
        %862 = vmatprep.mubr.bf16.mxu0 0
        %863 = vmatmul.mubr.bf16.gmra.mrb[0].mxu0 %v828
        %v864 = vpop.f32.mrb[0].mxu0
        %v865 = vadd.f32 %v813, %v864
        %v866 = vpop.f32.mrb[0].mxu0
        %v867 = vpop.f32.mrb[0].mxu0
        %v868 = vadd.f32 %v813, %v867
        %v869 = vpop.f32.mrb[0].mxu0
        %870 = vdwg.mxu0
        %v871 = vpack.c.bf16 %v732, %v732
        %v872 = vpack.c.bf16 %v801, %v798
        %v874 = vlaneseq
        %v875 = vshrl.u32 %v874, 7
        %v876 = vsub.s32 0, %v875
        %v877 = vrot.slane %v667, %v876
        %vm879 = vcmask 64512
        %v881 = vsel %vm879, %v871, 0
        %v884 = vsel %vm879, %v872, 0
        %886 = vmatprep.subr.bf16.mxu0 0
        %887 = vmatpush1.bf16.xpose.msra.mxu0 %v884
        %888 = vmatprep.subr.bf16.mxu0 0
        %889 = vmatpush1.bf16.xpose.msra.mxu0 0
        %890 = vmatprep.subr.bf16.mxu0 0
        %891 = vmatpush1.bf16.xpose.msra.mxu0 0
        %892 = vmatprep.subr.bf16.mxu0 0
        %893 = vmatpush1.bf16.xpose.msra.mxu0 0
        %894 = vmatprep.subr.bf16.mxu0 0
        %895 = vmatpush1.bf16.xpose.msra.mxu0 0
        %896 = vmatprep.subr.bf16.mxu0 0
        %897 = vmatpush1.bf16.xpose.msra.mxu0 0
        %898 = vmatprep.subr.bf16.mxu0 0
        %899 = vmatpush1.bf16.xpose.msra.mxu0 0
        %900 = vmatprep.subr.bf16.mxu0 0
        %901 = vmatpush1.bf16.xpose.msra.mxu0 0
        %902 = vmatprep.subr.bf16.mxu0 0
        %903 = vmatpush1.bf16.xpose.msra.mxu0 0
        %904 = vmatprep.subr.bf16.mxu0 0
        %905 = vmatpush1.bf16.xpose.msra.mxu0 0
        %906 = vmatprep.subr.bf16.mxu0 0
        %907 = vmatpush1.bf16.xpose.msra.mxu0 0
        %908 = vmatprep.subr.bf16.mxu0 0
        %909 = vmatpush1.bf16.xpose.msra.mxu0 0
        %910 = vmatprep.subr.bf16.mxu0 0
        %911 = vmatpush1.bf16.xpose.msra.mxu0 0
        %912 = vmatprep.subr.bf16.mxu0 0
        %913 = vmatpush1.bf16.xpose.msra.mxu0 0
        %914 = vmatprep.subr.bf16.mxu0 0
        %915 = vmatpush1.bf16.xpose.msra.mxu0 0
        %916 = vmatprep.subr.bf16.mxu0 0
        %917 = vmatpush1.bf16.xpose.msra.mxu0 0
        %918 = vmatprep.mubr.bf16.mxu0 0
        %919 = vmatmul.mubr.bf16.gmra.mrb[0].mxu0 %v881
        %v920 = vpop.f32.mrb[0].mxu0
        %v921 = vadd.f32 %v877, %v920
        %v922 = vpop.f32.mrb[0].mxu0
        %v923 = vpop.f32.mrb[0].mxu0
        %v924 = vpop.f32.mrb[0].mxu0
        %925 = vdwg.mxu0
        %vm926 = vcmask 130048
        %v927 = vsel %vm926, %v921, -inf
        %928 = vmax.xlane.f32.xlu0 %v927
        %v929 = vpop.xlane.xlu0 %928
        %v930 = vsub.f32 %v921, %v929
        %v931 = vmul.f32 %v930, 1.442695
        %v932 = vpow.pop %v931
        %v933 = vsel %vm926, %v932, 0.0
        %934 = vadd.xlane.f32.xlu0 %v933
        %v935 = vpop.xlane.xlu0 %934
        %v936 = vrcp.pop %v935
        %v937 = vmul.f32 %v932, %v936
        %v938 = vpack.c.bf16 %v937, %v937
        %v939 = vpack.c.bf16 %v868, %v865
        %v941 = vsel %vm926, %v938, 0
        %943 = vmatprep.subr.bf16.mxu0 0
        %944 = vmatpush1.bf16.msra.mxu0 %v939
        %945 = vmatprep.subr.bf16.mxu0 0
        %946 = vmatpush1.bf16.msra.mxu0 0
        %947 = vmatprep.subr.bf16.mxu0 0
        %948 = vmatpush1.bf16.msra.mxu0 0
        %949 = vmatprep.subr.bf16.mxu0 0
        %950 = vmatpush1.bf16.msra.mxu0 0
        %951 = vmatprep.subr.bf16.mxu0 0
        %952 = vmatpush1.bf16.msra.mxu0 0
        %953 = vmatprep.subr.bf16.mxu0 0
        %954 = vmatpush1.bf16.msra.mxu0 0
        %955 = vmatprep.subr.bf16.mxu0 0
        %956 = vmatpush1.bf16.msra.mxu0 0
        %957 = vmatprep.subr.bf16.mxu0 0
        %958 = vmatpush1.bf16.msra.mxu0 0
        %959 = vmatprep.subr.bf16.mxu0 0
        %960 = vmatpush1.bf16.msra.mxu0 0
        %961 = vmatprep.subr.bf16.mxu0 0
        %962 = vmatpush1.bf16.msra.mxu0 0
        %963 = vmatprep.subr.bf16.mxu0 0
        %964 = vmatpush1.bf16.msra.mxu0 0
        %965 = vmatprep.subr.bf16.mxu0 0
        %966 = vmatpush1.bf16.msra.mxu0 0
        %967 = vmatprep.subr.bf16.mxu0 0
        %968 = vmatpush1.bf16.msra.mxu0 0
        %969 = vmatprep.subr.bf16.mxu0 0
        %970 = vmatpush1.bf16.msra.mxu0 0
        %971 = vmatprep.subr.bf16.mxu0 0
        %972 = vmatpush1.bf16.msra.mxu0 0
        %973 = vmatprep.subr.bf16.mxu0 0
        %974 = vmatpush1.bf16.msra.mxu0 0
        %975 = vmatprep.mubr.bf16.mxu0 0
        %976 = vmatmul.mubr.bf16.gmra.mrb[0].mxu0 %v941
        %v977 = vpop.f32.mrb[0].mxu0
        %v978 = vadd.f32 0.0, %v977
        %v979 = vpop.f32.mrb[0].mxu0
        %v980 = vpop.f32.mrb[0].mxu0
        %v981 = vpop.f32.mrb[0].mxu0
        %982 = vdwg.mxu0
        %v983 = vpack.c.bf16 %v978, %v978
        %v984 = vld [vmem:[#allocation16] sm:$0xf]
        %985 = vrot.lane.b32.xlu0 %v689, 120
        %v986 = vpop.permute.xlu0 %985
        %987 = vrot.lane.b32.xlu0 %v690, 120
        %v988 = vpop.permute.xlu0 %987
        %991 = vrot.lane.b32.xlu0 %v679, 120
        %v992 = vpop.permute.xlu0 %991
        %994 = vmatprep.subr.bf16.mxu0 0
        %995 = vmatpush1.bf16.msra.mxu0 %v986
        %996 = vmatprep.subr.bf16.mxu0 0
        %997 = vmatpush1.bf16.msra.mxu0 %v988
        %998 = vmatprep.subr.bf16.mxu0 0
        %999 = vmatpush1.bf16.msra.mxu0 0
        %1000 = vmatprep.subr.bf16.mxu0 0
        %1001 = vmatpush1.bf16.msra.mxu0 0
        %1002 = vmatprep.subr.bf16.mxu0 0
        %1003 = vmatpush1.bf16.msra.mxu0 0
        %1004 = vmatprep.subr.bf16.mxu0 0
        %1005 = vmatpush1.bf16.msra.mxu0 0
        %1006 = vmatprep.subr.bf16.mxu0 0
        %1007 = vmatpush1.bf16.msra.mxu0 0
        %1008 = vmatprep.subr.bf16.mxu0 0
        %1009 = vmatpush1.bf16.msra.mxu0 0
        %1010 = vmatprep.subr.bf16.mxu0 0
        %1011 = vmatpush1.bf16.msra.mxu0 0
        %1012 = vmatprep.subr.bf16.mxu0 0
        %1013 = vmatpush1.bf16.msra.mxu0 0
        %1014 = vmatprep.subr.bf16.mxu0 0
        %1015 = vmatpush1.bf16.msra.mxu0 0
        %1016 = vmatprep.subr.bf16.mxu0 0
        %1017 = vmatpush1.bf16.msra.mxu0 0
        %1018 = vmatprep.subr.bf16.mxu0 0
        %1019 = vmatpush1.bf16.msra.mxu0 0
        %1020 = vmatprep.subr.bf16.mxu0 0
        %1021 = vmatpush1.bf16.msra.mxu0 0
        %1022 = vmatprep.subr.bf16.mxu0 0
        %1023 = vmatpush1.bf16.msra.mxu0 0
        %1024 = vmatprep.subr.bf16.mxu0 0
        %1025 = vmatpush1.bf16.msra.mxu0 0
        %1026 = vmatprep.mubr.bf16.mxu0 0
        %1027 = vmatmul.mubr.bf16.gmra.mrb[0].mxu0 %v695
        %v1028 = vpop.f32.mrb[0].mxu0
        %v1029 = vadd.f32 %v992, %v1028
        %v1030 = vpop.f32.mrb[0].mxu0
        %v1031 = vpop.f32.mrb[0].mxu0
        %v1032 = vpop.f32.mrb[0].mxu0
        %1033 = vdwg.mxu0
        %1034 = vrot.lane.b32.xlu0 %v756, 120
        %v1035 = vpop.permute.xlu0 %1034
        %1036 = vrot.lane.b32.xlu0 %v757, 120
        %v1037 = vpop.permute.xlu0 %1036
        %1040 = vrot.lane.b32.xlu0 %v746, 120
        %v1041 = vpop.permute.xlu0 %1040
        %1043 = vmatprep.subr.bf16.mxu0 0
        %1044 = vmatpush1.bf16.msra.mxu0 %v1035
        %1045 = vmatprep.subr.bf16.mxu0 0
        %1046 = vmatpush1.bf16.msra.mxu0 %v1037
        %1047 = vmatprep.subr.bf16.mxu0 0
        %1048 = vmatpush1.bf16.msra.mxu0 0
        %1049 = vmatprep.subr.bf16.mxu0 0
        %1050 = vmatpush1.bf16.msra.mxu0 0
        %1051 = vmatprep.subr.bf16.mxu0 0
        %1052 = vmatpush1.bf16.msra.mxu0 0
        %1053 = vmatprep.subr.bf16.mxu0 0
        %1054 = vmatpush1.bf16.msra.mxu0 0
        %1055 = vmatprep.subr.bf16.mxu0 0
        %1056 = vmatpush1.bf16.msra.mxu0 0
        %1057 = vmatprep.subr.bf16.mxu0 0
        %1058 = vmatpush1.bf16.msra.mxu0 0
        %1059 = vmatprep.subr.bf16.mxu0 0
        %1060 = vmatpush1.bf16.msra.mxu0 0
        %1061 = vmatprep.subr.bf16.mxu0 0
        %1062 = vmatpush1.bf16.msra.mxu0 0
        %1063 = vmatprep.subr.bf16.mxu0 0
        %1064 = vmatpush1.bf16.msra.mxu0 0
        %1065 = vmatprep.subr.bf16.mxu0 0
        %1066 = vmatpush1.bf16.msra.mxu0 0
        %1067 = vmatprep.subr.bf16.mxu0 0
        %1068 = vmatpush1.bf16.msra.mxu0 0
        %1069 = vmatprep.subr.bf16.mxu0 0
        %1070 = vmatpush1.bf16.msra.mxu0 0
        %1071 = vmatprep.subr.bf16.mxu0 0
        %1072 = vmatpush1.bf16.msra.mxu0 0
        %1073 = vmatprep.subr.bf16.mxu0 0
        %1074 = vmatpush1.bf16.msra.mxu0 0
        %1075 = vmatprep.mubr.bf16.mxu0 0
        %1076 = vmatmul.mubr.bf16.gmra.mrb[0].mxu0 %v761
        %v1077 = vpop.f32.mrb[0].mxu0
        %v1078 = vadd.f32 %v1041, %v1077
        %v1079 = vpop.f32.mrb[0].mxu0
        %v1080 = vpop.f32.mrb[0].mxu0
        %v1081 = vadd.f32 %v1041, %v1080
        %v1082 = vpop.f32.mrb[0].mxu0
        %1083 = vdwg.mxu0
        %1084 = vrot.lane.b32.xlu0 %v823, 120
        %v1085 = vpop.permute.xlu0 %1084
        %1086 = vrot.lane.b32.xlu0 %v824, 120
        %v1087 = vpop.permute.xlu0 %1086
        %1090 = vrot.lane.b32.xlu0 %v813, 120
        %v1091 = vpop.permute.xlu0 %1090
        %1093 = vmatprep.subr.bf16.mxu0 0
        %1094 = vmatpush1.bf16.msra.mxu0 %v1085
        %1095 = vmatprep.subr.bf16.mxu0 0
        %1096 = vmatpush1.bf16.msra.mxu0 %v1087
        %1097 = vmatprep.subr.bf16.mxu0 0
        %1098 = vmatpush1.bf16.msra.mxu0 0
        %1099 = vmatprep.subr.bf16.mxu0 0
        %1100 = vmatpush1.bf16.msra.mxu0 0
        %1101 = vmatprep.subr.bf16.mxu0 0
        %1102 = vmatpush1.bf16.msra.mxu0 0
        %1103 = vmatprep.subr.bf16.mxu0 0
        %1104 = vmatpush1.bf16.msra.mxu0 0
        %1105 = vmatprep.subr.bf16.mxu0 0
        %1106 = vmatpush1.bf16.msra.mxu0 0
        %1107 = vmatprep.subr.bf16.mxu0 0
        %1108 = vmatpush1.bf16.msra.mxu0 0
        %1109 = vmatprep.subr.bf16.mxu0 0
        %1110 = vmatpush1.bf16.msra.mxu0 0
        %1111 = vmatprep.subr.bf16.mxu0 0
        %1112 = vmatpush1.bf16.msra.mxu0 0
        %1113 = vmatprep.subr.bf16.mxu0 0
        %1114 = vmatpush1.bf16.msra.mxu0 0
        %1115 = vmatprep.subr.bf16.mxu0 0
        %1116 = vmatpush1.bf16.msra.mxu0 0
        %1117 = vmatprep.subr.bf16.mxu0 0
        %1118 = vmatpush1.bf16.msra.mxu0 0
        %1119 = vmatprep.subr.bf16.mxu0 0
        %1120 = vmatpush1.bf16.msra.mxu0 0
        %1121 = vmatprep.subr.bf16.mxu0 0
        %1122 = vmatpush1.bf16.msra.mxu0 0
        %1123 = vmatprep.subr.bf16.mxu0 0
        %1124 = vmatpush1.bf16.msra.mxu0 0
        %1125 = vmatprep.mubr.bf16.mxu0 0
        %1126 = vmatmul.mubr.bf16.gmra.mrb[0].mxu0 %v828
        %v1127 = vpop.f32.mrb[0].mxu0
        %v1128 = vadd.f32 %v1091, %v1127
        %v1129 = vpop.f32.mrb[0].mxu0
        %v1130 = vpop.f32.mrb[0].mxu0
        %v1131 = vadd.f32 %v1091, %v1130
        %v1132 = vpop.f32.mrb[0].mxu0
        %1133 = vdwg.mxu0
        %v1134 = vpack.c.bf16 %v1029, %v1029
        %v1135 = vpack.c.bf16 %v1081, %v1078
        %v1137 = vsel %vm879, %v1134, 0
        %v1140 = vsel %vm879, %v1135, 0
        %1142 = vmatprep.subr.bf16.mxu0 0
        %1143 = vmatpush1.bf16.xpose.msra.mxu0 %v1140
        %1144 = vmatprep.subr.bf16.mxu0 0
        %1145 = vmatpush1.bf16.xpose.msra.mxu0 0
        %1146 = vmatprep.subr.bf16.mxu0 0
        %1147 = vmatpush1.bf16.xpose.msra.mxu0 0
        %1148 = vmatprep.subr.bf16.mxu0 0
        %1149 = vmatpush1.bf16.xpose.msra.mxu0 0
        %1150 = vmatprep.subr.bf16.mxu0 0
        %1151 = vmatpush1.bf16.xpose.msra.mxu0 0
        %1152 = vmatprep.subr.bf16.mxu0 0
        %1153 = vmatpush1.bf16.xpose.msra.mxu0 0
        %1154 = vmatprep.subr.bf16.mxu0 0
        %1155 = vmatpush1.bf16.xpose.msra.mxu0 0
        %1156 = vmatprep.subr.bf16.mxu0 0
        %1157 = vmatpush1.bf16.xpose.msra.mxu0 0
        %1158 = vmatprep.subr.bf16.mxu0 0
        %1159 = vmatpush1.bf16.xpose.msra.mxu0 0
        %1160 = vmatprep.subr.bf16.mxu0 0
        %1161 = vmatpush1.bf16.xpose.msra.mxu0 0
        %1162 = vmatprep.subr.bf16.mxu0 0
        %1163 = vmatpush1.bf16.xpose.msra.mxu0 0
        %1164 = vmatprep.subr.bf16.mxu0 0
        %1165 = vmatpush1.bf16.xpose.msra.mxu0 0
        %1166 = vmatprep.subr.bf16.mxu0 0
        %1167 = vmatpush1.bf16.xpose.msra.mxu0 0
        %1168 = vmatprep.subr.bf16.mxu0 0
        %1169 = vmatpush1.bf16.xpose.msra.mxu0 0
        %1170 = vmatprep.subr.bf16.mxu0 0
        %1171 = vmatpush1.bf16.xpose.msra.mxu0 0
        %1172 = vmatprep.subr.bf16.mxu0 0
        %1173 = vmatpush1.bf16.xpose.msra.mxu0 0
        %1174 = vmatprep.mubr.bf16.mxu0 0
        %1175 = vmatmul.mubr.bf16.gmra.mrb[0].mxu0 %v1137
        %v1176 = vpop.f32.mrb[0].mxu0
        %v1177 = vadd.f32 %v877, %v1176
        %v1178 = vpop.f32.mrb[0].mxu0
        %v1179 = vpop.f32.mrb[0].mxu0
        %v1180 = vpop.f32.mrb[0].mxu0
        %1181 = vdwg.mxu0
        %v1182 = vsel %vm926, %v1177, -inf
        %1183 = vmax.xlane.f32.xlu0 %v1182
        %v1184 = vpop.xlane.xlu0 %1183
        %v1185 = vsub.f32 %v1177, %v1184
        %v1186 = vmul.f32 %v1185, 1.442695
        %v1187 = vpow.pop %v1186
        %v1188 = vsel %vm926, %v1187, 0.0
        %1189 = vadd.xlane.f32.xlu0 %v1188
        %v1190 = vpop.xlane.xlu0 %1189
        %v1191 = vrcp.pop %v1190
        %v1192 = vmul.f32 %v1187, %v1191
        %v1193 = vpack.c.bf16 %v1192, %v1192
        %v1194 = vpack.c.bf16 %v1131, %v1128
        %v1196 = vsel %vm926, %v1193, 0
        %1198 = vmatprep.subr.bf16.mxu0 0
        %1199 = vmatpush1.bf16.msra.mxu0 %v1194
        %1200 = vmatprep.subr.bf16.mxu0 0
        %1201 = vmatpush1.bf16.msra.mxu0 0
        %1202 = vmatprep.subr.bf16.mxu0 0
        %1203 = vmatpush1.bf16.msra.mxu0 0
        %1204 = vmatprep.subr.bf16.mxu0 0
        %1205 = vmatpush1.bf16.msra.mxu0 0
        %1206 = vmatprep.subr.bf16.mxu0 0
        %1207 = vmatpush1.bf16.msra.mxu0 0
        %1208 = vmatprep.subr.bf16.mxu0 0
        %1209 = vmatpush1.bf16.msra.mxu0 0
        %1210 = vmatprep.subr.bf16.mxu0 0
        %1211 = vmatpush1.bf16.msra.mxu0 0
        %1212 = vmatprep.subr.bf16.mxu0 0
        %1213 = vmatpush1.bf16.msra.mxu0 0
        %1214 = vmatprep.subr.bf16.mxu0 0
        %1215 = vmatpush1.bf16.msra.mxu0 0
        %1216 = vmatprep.subr.bf16.mxu0 0
        %1217 = vmatpush1.bf16.msra.mxu0 0
        %1218 = vmatprep.subr.bf16.mxu0 0
        %1219 = vmatpush1.bf16.msra.mxu0 0
        %1220 = vmatprep.subr.bf16.mxu0 0
        %1221 = vmatpush1.bf16.msra.mxu0 0
        %1222 = vmatprep.subr.bf16.mxu0 0
        %1223 = vmatpush1.bf16.msra.mxu0 0
        %1224 = vmatprep.subr.bf16.mxu0 0
        %1225 = vmatpush1.bf16.msra.mxu0 0
        %1226 = vmatprep.subr.bf16.mxu0 0
        %1227 = vmatpush1.bf16.msra.mxu0 0
        %1228 = vmatprep.subr.bf16.mxu0 0
        %1229 = vmatpush1.bf16.msra.mxu0 0
        %1230 = vmatprep.mubr.bf16.mxu0 0
        %1231 = vmatmul.mubr.bf16.gmra.mrb[0].mxu0 %v1196
        %v1232 = vpop.f32.mrb[0].mxu0
        %v1233 = vadd.f32 0.0, %v1232
        %v1234 = vpop.f32.mrb[0].mxu0
        %v1235 = vpop.f32.mrb[0].mxu0
        %v1236 = vpop.f32.mrb[0].mxu0
        %1237 = vdwg.mxu0
        %v1238 = vpack.c.bf16 %v1233, %v1233
        %v1239 = vld [vmem:[#allocation16 + $0x4] sm:$0xf]
        %v1241 = vsel %vm879, %v1238, 0
        %vm1243 = vcmask 1043456
        %v1245 = vsel %vm1243, %v1239, 0
        %1247 = vmatprep.subr.bf16.mxu0 0
        %1248 = vmatpush1.bf16.msra.mxu0 %v1245
        %1249 = vmatprep.subr.bf16.mxu0 0
        %1250 = vmatpush1.bf16.msra.mxu0 0
        %1251 = vmatprep.subr.bf16.mxu0 0
        %1252 = vmatpush1.bf16.msra.mxu0 0
        %1253 = vmatprep.subr.bf16.mxu0 0
        %1254 = vmatpush1.bf16.msra.mxu0 0
        %1255 = vmatprep.subr.bf16.mxu0 0
        %1256 = vmatpush1.bf16.msra.mxu0 0
        %1257 = vmatprep.subr.bf16.mxu0 0
        %1258 = vmatpush1.bf16.msra.mxu0 0
        %1259 = vmatprep.subr.bf16.mxu0 0
        %1260 = vmatpush1.bf16.msra.mxu0 0
        %1261 = vmatprep.subr.bf16.mxu0 0
        %1262 = vmatpush1.bf16.msra.mxu0 0
        %1263 = vmatprep.subr.bf16.mxu0 0
        %1264 = vmatpush1.bf16.msra.mxu0 0
        %1265 = vmatprep.subr.bf16.mxu0 0
        %1266 = vmatpush1.bf16.msra.mxu0 0
        %1267 = vmatprep.subr.bf16.mxu0 0
        %1268 = vmatpush1.bf16.msra.mxu0 0
        %1269 = vmatprep.subr.bf16.mxu0 0
        %1270 = vmatpush1.bf16.msra.mxu0 0
        %1271 = vmatprep.subr.bf16.mxu0 0
        %1272 = vmatpush1.bf16.msra.mxu0 0
        %1273 = vmatprep.subr.bf16.mxu0 0
        %1274 = vmatpush1.bf16.msra.mxu0 0
        %1275 = vmatprep.subr.bf16.mxu0 0
        %1276 = vmatpush1.bf16.msra.mxu0 0
        %1277 = vmatprep.subr.bf16.mxu0 0
        %1278 = vmatpush1.bf16.msra.mxu0 0
        %1279 = vmatprep.mubr.bf16.mxu0 0
        %1280 = vmatmul.mubr.bf16.gmra.mrb[0].mxu0 %v1241
        %v1281 = vpop.f32.mrb[0].mxu0
        %v1282 = vadd.f32 0.0, %v1281
        %v1283 = vpop.f32.mrb[0].mxu0
        %v1284 = vpop.f32.mrb[0].mxu0
        %v1285 = vpop.f32.mrb[0].mxu0
        %1286 = vdwg.mxu0
        %v1288 = vsel %vm879, %v983, 0
        %v1291 = vsel %vm1243, %v984, 0
        %1293 = vmatprep.subr.bf16.mxu0 0
        %1294 = vmatpush1.bf16.msra.mxu0 %v1291
        %1295 = vmatprep.subr.bf16.mxu0 0
        %1296 = vmatpush1.bf16.msra.mxu0 0
        %1297 = vmatprep.subr.bf16.mxu0 0
        %1298 = vmatpush1.bf16.msra.mxu0 0
        %1299 = vmatprep.subr.bf16.mxu0 0
        %1300 = vmatpush1.bf16.msra.mxu0 0
        %1301 = vmatprep.subr.bf16.mxu0 0
        %1302 = vmatpush1.bf16.msra.mxu0 0
        %1303 = vmatprep.subr.bf16.mxu0 0
        %1304 = vmatpush1.bf16.msra.mxu0 0
        %1305 = vmatprep.subr.bf16.mxu0 0
        %1306 = vmatpush1.bf16.msra.mxu0 0
        %1307 = vmatprep.subr.bf16.mxu0 0
        %1308 = vmatpush1.bf16.msra.mxu0 0
        %1309 = vmatprep.subr.bf16.mxu0 0
        %1310 = vmatpush1.bf16.msra.mxu0 0
        %1311 = vmatprep.subr.bf16.mxu0 0
        %1312 = vmatpush1.bf16.msra.mxu0 0
        %1313 = vmatprep.subr.bf16.mxu0 0
        %1314 = vmatpush1.bf16.msra.mxu0 0
        %1315 = vmatprep.subr.bf16.mxu0 0
        %1316 = vmatpush1.bf16.msra.mxu0 0
        %1317 = vmatprep.subr.bf16.mxu0 0
        %1318 = vmatpush1.bf16.msra.mxu0 0
        %1319 = vmatprep.subr.bf16.mxu0 0
        %1320 = vmatpush1.bf16.msra.mxu0 0
        %1321 = vmatprep.subr.bf16.mxu0 0
        %1322 = vmatpush1.bf16.msra.mxu0 0
        %1323 = vmatprep.subr.bf16.mxu0 0
        %1324 = vmatpush1.bf16.msra.mxu0 0
        %1325 = vmatprep.mubr.bf16.mxu0 0
        %1326 = vmatmul.mubr.bf16.gmra.mrb[0].mxu0 %v1288
        %v1327 = vpop.f32.mrb[0].mxu0
        %v1328 = vadd.f32 %v1282, %v1327
        %v1329 = vpop.f32.mrb[0].mxu0
        %v1330 = vpop.f32.mrb[0].mxu0
        %v1331 = vpop.f32.mrb[0].mxu0
        %1332 = vdwg.mxu0
        %1333 = vrot.lane.b32.xlu0 %v689, 112
        %v1334 = vpop.permute.xlu0 %1333
        %1335 = vrot.lane.b32.xlu0 %v690, 112
        %v1336 = vpop.permute.xlu0 %1335
        %1339 = vrot.lane.b32.xlu0 %v679, 112
        %v1340 = vpop.permute.xlu0 %1339
        %1342 = vmatprep.subr.bf16.mxu0 0
        %1343 = vmatpush1.bf16.msra.mxu0 %v1334
        %1344 = vmatprep.subr.bf16.mxu0 0
        %1345 = vmatpush1.bf16.msra.mxu0 %v1336
        %1346 = vmatprep.subr.bf16.mxu0 0
        %1347 = vmatpush1.bf16.msra.mxu0 0
        %1348 = vmatprep.subr.bf16.mxu0 0
        %1349 = vmatpush1.bf16.msra.mxu0 0
        %1350 = vmatprep.subr.bf16.mxu0 0
        %1351 = vmatpush1.bf16.msra.mxu0 0
        %1352 = vmatprep.subr.bf16.mxu0 0
        %1353 = vmatpush1.bf16.msra.mxu0 0
        %1354 = vmatprep.subr.bf16.mxu0 0
        %1355 = vmatpush1.bf16.msra.mxu0 0
        %1356 = vmatprep.subr.bf16.mxu0 0
        %1357 = vmatpush1.bf16.msra.mxu0 0
        %1358 = vmatprep.subr.bf16.mxu0 0
        %1359 = vmatpush1.bf16.msra.mxu0 0
        %1360 = vmatprep.subr.bf16.mxu0 0
        %1361 = vmatpush1.bf16.msra.mxu0 0
        %1362 = vmatprep.subr.bf16.mxu0 0
        %1363 = vmatpush1.bf16.msra.mxu0 0
        %1364 = vmatprep.subr.bf16.mxu0 0
        %1365 = vmatpush1.bf16.msra.mxu0 0
        %1366 = vmatprep.subr.bf16.mxu0 0
        %1367 = vmatpush1.bf16.msra.mxu0 0
        %1368 = vmatprep.subr.bf16.mxu0 0
        %1369 = vmatpush1.bf16.msra.mxu0 0
        %1370 = vmatprep.subr.bf16.mxu0 0
        %1371 = vmatpush1.bf16.msra.mxu0 0
        %1372 = vmatprep.subr.bf16.mxu0 0
        %1373 = vmatpush1.bf16.msra.mxu0 0
        %1374 = vmatprep.mubr.bf16.mxu0 0
        %1375 = vmatmul.mubr.bf16.gmra.mrb[0].mxu0 %v695
        %v1376 = vpop.f32.mrb[0].mxu0
        %v1377 = vadd.f32 %v1340, %v1376
        %v1378 = vpop.f32.mrb[0].mxu0
        %v1379 = vpop.f32.mrb[0].mxu0
        %v1380 = vpop.f32.mrb[0].mxu0
        %1381 = vdwg.mxu0
        %1382 = vrot.lane.b32.xlu0 %v756, 112
        %v1383 = vpop.permute.xlu0 %1382
        %1384 = vrot.lane.b32.xlu0 %v757, 112
        %v1385 = vpop.permute.xlu0 %1384
        %1388 = vrot.lane.b32.xlu0 %v746, 112
        %v1389 = vpop.permute.xlu0 %1388
        %1391 = vmatprep.subr.bf16.mxu0 0
        %1392 = vmatpush1.bf16.msra.mxu0 %v1383
        %1393 = vmatprep.subr.bf16.mxu0 0
        %1394 = vmatpush1.bf16.msra.mxu0 %v1385
        %1395 = vmatprep.subr.bf16.mxu0 0
        %1396 = vmatpush1.bf16.msra.mxu0 0
        %1397 = vmatprep.subr.bf16.mxu0 0
        %1398 = vmatpush1.bf16.msra.mxu0 0
        %1399 = vmatprep.subr.bf16.mxu0 0
        %1400 = vmatpush1.bf16.msra.mxu0 0
        %1401 = vmatprep.subr.bf16.mxu0 0
        %1402 = vmatpush1.bf16.msra.mxu0 0
        %1403 = vmatprep.subr.bf16.mxu0 0
        %1404 = vmatpush1.bf16.msra.mxu0 0
        %1405 = vmatprep.subr.bf16.mxu0 0
        %1406 = vmatpush1.bf16.msra.mxu0 0
        %1407 = vmatprep.subr.bf16.mxu0 0
        %1408 = vmatpush1.bf16.msra.mxu0 0
        %1409 = vmatprep.subr.bf16.mxu0 0
        %1410 = vmatpush1.bf16.msra.mxu0 0
        %1411 = vmatprep.subr.bf16.mxu0 0
        %1412 = vmatpush1.bf16.msra.mxu0 0
        %1413 = vmatprep.subr.bf16.mxu0 0
        %1414 = vmatpush1.bf16.msra.mxu0 0
        %1415 = vmatprep.subr.bf16.mxu0 0
        %1416 = vmatpush1.bf16.msra.mxu0 0
        %1417 = vmatprep.subr.bf16.mxu0 0
        %1418 = vmatpush1.bf16.msra.mxu0 0
        %1419 = vmatprep.subr.bf16.mxu0 0
        %1420 = vmatpush1.bf16.msra.mxu0 0
        %1421 = vmatprep.subr.bf16.mxu0 0
        %1422 = vmatpush1.bf16.msra.mxu0 0
        %1423 = vmatprep.mubr.bf16.mxu0 0
        %1424 = vmatmul.mubr.bf16.gmra.mrb[0].mxu0 %v761
        %v1425 = vpop.f32.mrb[0].mxu0
        %v1426 = vadd.f32 %v1389, %v1425
        %v1427 = vpop.f32.mrb[0].mxu0
        %v1428 = vpop.f32.mrb[0].mxu0
        %v1429 = vadd.f32 %v1389, %v1428
        %v1430 = vpop.f32.mrb[0].mxu0
        %1431 = vdwg.mxu0
        %1432 = vrot.lane.b32.xlu0 %v823, 112
        %v1433 = vpop.permute.xlu0 %1432
        %1434 = vrot.lane.b32.xlu0 %v824, 112
        %v1435 = vpop.permute.xlu0 %1434
        %1438 = vrot.lane.b32.xlu0 %v813, 112
        %v1439 = vpop.permute.xlu0 %1438
        %1441 = vmatprep.subr.bf16.mxu0 0
        %1442 = vmatpush1.bf16.msra.mxu0 %v1433
        %1443 = vmatprep.subr.bf16.mxu0 0
        %1444 = vmatpush1.bf16.msra.mxu0 %v1435
        %1445 = vmatprep.subr.bf16.mxu0 0
        %1446 = vmatpush1.bf16.msra.mxu0 0
        %1447 = vmatprep.subr.bf16.mxu0 0
        %1448 = vmatpush1.bf16.msra.mxu0 0
        %1449 = vmatprep.subr.bf16.mxu0 0
        %1450 = vmatpush1.bf16.msra.mxu0 0
        %1451 = vmatprep.subr.bf16.mxu0 0
        %1452 = vmatpush1.bf16.msra.mxu0 0
        %1453 = vmatprep.subr.bf16.mxu0 0
        %1454 = vmatpush1.bf16.msra.mxu0 0
        %1455 = vmatprep.subr.bf16.mxu0 0
        %1456 = vmatpush1.bf16.msra.mxu0 0
        %1457 = vmatprep.subr.bf16.mxu0 0
        %1458 = vmatpush1.bf16.msra.mxu0 0
        %1459 = vmatprep.subr.bf16.mxu0 0
        %1460 = vmatpush1.bf16.msra.mxu0 0
        %1461 = vmatprep.subr.bf16.mxu0 0
        %1462 = vmatpush1.bf16.msra.mxu0 0
        %1463 = vmatprep.subr.bf16.mxu0 0
        %1464 = vmatpush1.bf16.msra.mxu0 0
        %1465 = vmatprep.subr.bf16.mxu0 0
        %1466 = vmatpush1.bf16.msra.mxu0 0
        %1467 = vmatprep.subr.bf16.mxu0 0
        %1468 = vmatpush1.bf16.msra.mxu0 0
        %1469 = vmatprep.subr.bf16.mxu0 0
        %1470 = vmatpush1.bf16.msra.mxu0 0
        %1471 = vmatprep.subr.bf16.mxu0 0
        %1472 = vmatpush1.bf16.msra.mxu0 0
        %1473 = vmatprep.mubr.bf16.mxu0 0
        %1474 = vmatmul.mubr.bf16.gmra.mrb[0].mxu0 %v828
        %v1475 = vpop.f32.mrb[0].mxu0
        %v1476 = vadd.f32 %v1439, %v1475
        %v1477 = vpop.f32.mrb[0].mxu0
        %v1478 = vpop.f32.mrb[0].mxu0
        %v1479 = vadd.f32 %v1439, %v1478
        %v1480 = vpop.f32.mrb[0].mxu0
        %1481 = vdwg.mxu0
        %v1482 = vpack.c.bf16 %v1377, %v1377
        %v1483 = vpack.c.bf16 %v1429, %v1426
        %v1485 = vsel %vm879, %v1482, 0
        %v1488 = vsel %vm879, %v1483, 0
        %1490 = vmatprep.subr.bf16.mxu0 0
        %1491 = vmatpush1.bf16.xpose.msra.mxu0 %v1488
        %1492 = vmatprep.subr.bf16.mxu0 0
        %1493 = vmatpush1.bf16.xpose.msra.mxu0 0
        %1494 = vmatprep.subr.bf16.mxu0 0
        %1495 = vmatpush1.bf16.xpose.msra.mxu0 0
        %1496 = vmatprep.subr.bf16.mxu0 0
        %1497 = vmatpush1.bf16.xpose.msra.mxu0 0
        %1498 = vmatprep.subr.bf16.mxu0 0
        %1499 = vmatpush1.bf16.xpose.msra.mxu0 0
        %1500 = vmatprep.subr.bf16.mxu0 0
        %1501 = vmatpush1.bf16.xpose.msra.mxu0 0
        %1502 = vmatprep.subr.bf16.mxu0 0
        %1503 = vmatpush1.bf16.xpose.msra.mxu0 0
        %1504 = vmatprep.subr.bf16.mxu0 0
        %1505 = vmatpush1.bf16.xpose.msra.mxu0 0
        %1506 = vmatprep.subr.bf16.mxu0 0
        %1507 = vmatpush1.bf16.xpose.msra.mxu0 0
        %1508 = vmatprep.subr.bf16.mxu0 0
        %1509 = vmatpush1.bf16.xpose.msra.mxu0 0
        %1510 = vmatprep.subr.bf16.mxu0 0
        %1511 = vmatpush1.bf16.xpose.msra.mxu0 0
        %1512 = vmatprep.subr.bf16.mxu0 0
        %1513 = vmatpush1.bf16.xpose.msra.mxu0 0
        %1514 = vmatprep.subr.bf16.mxu0 0
        %1515 = vmatpush1.bf16.xpose.msra.mxu0 0
        %1516 = vmatprep.subr.bf16.mxu0 0
        %1517 = vmatpush1.bf16.xpose.msra.mxu0 0
        %1518 = vmatprep.subr.bf16.mxu0 0
        %1519 = vmatpush1.bf16.xpose.msra.mxu0 0
        %1520 = vmatprep.subr.bf16.mxu0 0
        %1521 = vmatpush1.bf16.xpose.msra.mxu0 0
        %1522 = vmatprep.mubr.bf16.mxu0 0
        %1523 = vmatmul.mubr.bf16.gmra.mrb[0].mxu0 %v1485
        %v1524 = vpop.f32.mrb[0].mxu0
        %v1525 = vadd.f32 %v877, %v1524
        %v1526 = vpop.f32.mrb[0].mxu0
        %v1527 = vpop.f32.mrb[0].mxu0
        %v1528 = vpop.f32.mrb[0].mxu0
        %1529 = vdwg.mxu0
        %v1530 = vsel %vm926, %v1525, -inf
        %1531 = vmax.xlane.f32.xlu0 %v1530
        %v1532 = vpop.xlane.xlu0 %1531
        %v1533 = vsub.f32 %v1525, %v1532
        %v1534 = vmul.f32 %v1533, 1.442695
        %v1535 = vpow.pop %v1534
        %v1536 = vsel %vm926, %v1535, 0.0
        %1537 = vadd.xlane.f32.xlu0 %v1536
        %v1538 = vpop.xlane.xlu0 %1537
        %v1539 = vrcp.pop %v1538
        %v1540 = vmul.f32 %v1535, %v1539
        %v1541 = vpack.c.bf16 %v1540, %v1540
        %v1542 = vpack.c.bf16 %v1479, %v1476
        %v1544 = vsel %vm926, %v1541, 0
        %1546 = vmatprep.subr.bf16.mxu0 0
        %1547 = vmatpush1.bf16.msra.mxu0 %v1542
        %1548 = vmatprep.subr.bf16.mxu0 0
        %1549 = vmatpush1.bf16.msra.mxu0 0
        %1550 = vmatprep.subr.bf16.mxu0 0
        %1551 = vmatpush1.bf16.msra.mxu0 0
        %1552 = vmatprep.subr.bf16.mxu0 0
        %1553 = vmatpush1.bf16.msra.mxu0 0
        %1554 = vmatprep.subr.bf16.mxu0 0
        %1555 = vmatpush1.bf16.msra.mxu0 0
        %1556 = vmatprep.subr.bf16.mxu0 0
        %1557 = vmatpush1.bf16.msra.mxu0 0
        %1558 = vmatprep.subr.bf16.mxu0 0
        %1559 = vmatpush1.bf16.msra.mxu0 0
        %1560 = vmatprep.subr.bf16.mxu0 0
        %1561 = vmatpush1.bf16.msra.mxu0 0
        %1562 = vmatprep.subr.bf16.mxu0 0
        %1563 = vmatpush1.bf16.msra.mxu0 0
        %1564 = vmatprep.subr.bf16.mxu0 0
        %1565 = vmatpush1.bf16.msra.mxu0 0
        %1566 = vmatprep.subr.bf16.mxu0 0
        %1567 = vmatpush1.bf16.msra.mxu0 0
        %1568 = vmatprep.subr.bf16.mxu0 0
        %1569 = vmatpush1.bf16.msra.mxu0 0
        %1570 = vmatprep.subr.bf16.mxu0 0
        %1571 = vmatpush1.bf16.msra.mxu0 0
        %1572 = vmatprep.subr.bf16.mxu0 0
        %1573 = vmatpush1.bf16.msra.mxu0 0
        %1574 = vmatprep.subr.bf16.mxu0 0
        %1575 = vmatpush1.bf16.msra.mxu0 0
        %1576 = vmatprep.subr.bf16.mxu0 0
        %1577 = vmatpush1.bf16.msra.mxu0 0
        %1578 = vmatprep.mubr.bf16.mxu0 0
        %1579 = vmatmul.mubr.bf16.gmra.mrb[0].mxu0 %v1544
        %v1580 = vpop.f32.mrb[0].mxu0
        %v1581 = vadd.f32 0.0, %v1580
        %v1582 = vpop.f32.mrb[0].mxu0
        %v1583 = vpop.f32.mrb[0].mxu0
        %v1584 = vpop.f32.mrb[0].mxu0
        %1585 = vdwg.mxu0
        %v1586 = vpack.c.bf16 %v1581, %v1581
        %v1587 = vld [vmem:[#allocation16 + $0x8] sm:$0xf]
        %v1589 = vsel %vm879, %v1586, 0
        %v1592 = vsel %vm1243, %v1587, 0
        %1594 = vmatprep.subr.bf16.mxu0 0
        %1595 = vmatpush1.bf16.msra.mxu0 %v1592
        %1596 = vmatprep.subr.bf16.mxu0 0
        %1597 = vmatpush1.bf16.msra.mxu0 0
        %1598 = vmatprep.subr.bf16.mxu0 0
        %1599 = vmatpush1.bf16.msra.mxu0 0
        %1600 = vmatprep.subr.bf16.mxu0 0
        %1601 = vmatpush1.bf16.msra.mxu0 0
        %1602 = vmatprep.subr.bf16.mxu0 0
        %1603 = vmatpush1.bf16.msra.mxu0 0
        %1604 = vmatprep.subr.bf16.mxu0 0
        %1605 = vmatpush1.bf16.msra.mxu0 0
        %1606 = vmatprep.subr.bf16.mxu0 0
        %1607 = vmatpush1.bf16.msra.mxu0 0
        %1608 = vmatprep.subr.bf16.mxu0 0
        %1609 = vmatpush1.bf16.msra.mxu0 0
        %1610 = vmatprep.subr.bf16.mxu0 0
        %1611 = vmatpush1.bf16.msra.mxu0 0
        %1612 = vmatprep.subr.bf16.mxu0 0
        %1613 = vmatpush1.bf16.msra.mxu0 0
        %1614 = vmatprep.subr.bf16.mxu0 0
        %1615 = vmatpush1.bf16.msra.mxu0 0
        %1616 = vmatprep.subr.bf16.mxu0 0
        %1617 = vmatpush1.bf16.msra.mxu0 0
        %1618 = vmatprep.subr.bf16.mxu0 0
        %1619 = vmatpush1.bf16.msra.mxu0 0
        %1620 = vmatprep.subr.bf16.mxu0 0
        %1621 = vmatpush1.bf16.msra.mxu0 0
        %1622 = vmatprep.subr.bf16.mxu0 0
        %1623 = vmatpush1.bf16.msra.mxu0 0
        %1624 = vmatprep.subr.bf16.mxu0 0
        %1625 = vmatpush1.bf16.msra.mxu0 0
        %1626 = vmatprep.mubr.bf16.mxu0 0
        %1627 = vmatmul.mubr.bf16.gmra.mrb[0].mxu0 %v1589
        %v1628 = vpop.f32.mrb[0].mxu0
        %v1629 = vadd.f32 0.0, %v1628
        %v1630 = vpop.f32.mrb[0].mxu0
        %v1631 = vpop.f32.mrb[0].mxu0
        %v1632 = vpop.f32.mrb[0].mxu0
        %1633 = vdwg.mxu0
        %v1634 = vadd.f32 %v1328, %v1629
        %1635 = vrot.lane.b32.xlu0 %v689, 104
        %v1636 = vpop.permute.xlu0 %1635
        %1637 = vrot.lane.b32.xlu0 %v690, 104
        %v1638 = vpop.permute.xlu0 %1637
        %1641 = vrot.lane.b32.xlu0 %v679, 104
        %v1642 = vpop.permute.xlu0 %1641
        %1644 = vmatprep.subr.bf16.mxu0 0
        %1645 = vmatpush1.bf16.msra.mxu0 %v1636
        %1646 = vmatprep.subr.bf16.mxu0 0
        %1647 = vmatpush1.bf16.msra.mxu0 %v1638
        %1648 = vmatprep.subr.bf16.mxu0 0
        %1649 = vmatpush1.bf16.msra.mxu0 0
        %1650 = vmatprep.subr.bf16.mxu0 0
        %1651 = vmatpush1.bf16.msra.mxu0 0
        %1652 = vmatprep.subr.bf16.mxu0 0
        %1653 = vmatpush1.bf16.msra.mxu0 0
        %1654 = vmatprep.subr.bf16.mxu0 0
        %1655 = vmatpush1.bf16.msra.mxu0 0
        %1656 = vmatprep.subr.bf16.mxu0 0
        %1657 = vmatpush1.bf16.msra.mxu0 0
        %1658 = vmatprep.subr.bf16.mxu0 0
        %1659 = vmatpush1.bf16.msra.mxu0 0
        %1660 = vmatprep.subr.bf16.mxu0 0
        %1661 = vmatpush1.bf16.msra.mxu0 0
        %1662 = vmatprep.subr.bf16.mxu0 0
        %1663 = vmatpush1.bf16.msra.mxu0 0
        %1664 = vmatprep.subr.bf16.mxu0 0
        %1665 = vmatpush1.bf16.msra.mxu0 0
        %1666 = vmatprep.subr.bf16.mxu0 0
        %1667 = vmatpush1.bf16.msra.mxu0 0
        %1668 = vmatprep.subr.bf16.mxu0 0
        %1669 = vmatpush1.bf16.msra.mxu0 0
        %1670 = vmatprep.subr.bf16.mxu0 0
        %1671 = vmatpush1.bf16.msra.mxu0 0
        %1672 = vmatprep.subr.bf16.mxu0 0
        %1673 = vmatpush1.bf16.msra.mxu0 0
        %1674 = vmatprep.subr.bf16.mxu0 0
        %1675 = vmatpush1.bf16.msra.mxu0 0
        %1676 = vmatprep.mubr.bf16.mxu0 0
        %1677 = vmatmul.mubr.bf16.gmra.mrb[0].mxu0 %v695
        %v1678 = vpop.f32.mrb[0].mxu0
        %v1679 = vadd.f32 %v1642, %v1678
        %v1680 = vpop.f32.mrb[0].mxu0
        %v1681 = vpop.f32.mrb[0].mxu0
        %v1682 = vpop.f32.mrb[0].mxu0
        %1683 = vdwg.mxu0
        %1684 = vrot.lane.b32.xlu0 %v756, 104
        %v1685 = vpop.permute.xlu0 %1684
        %1686 = vrot.lane.b32.xlu0 %v757, 104
        %v1687 = vpop.permute.xlu0 %1686
        %1690 = vrot.lane.b32.xlu0 %v746, 104
        %v1691 = vpop.permute.xlu0 %1690
        %1693 = vmatprep.subr.bf16.mxu0 0
        %1694 = vmatpush1.bf16.msra.mxu0 %v1685
        %1695 = vmatprep.subr.bf16.mxu0 0
        %1696 = vmatpush1.bf16.msra.mxu0 %v1687
        %1697 = vmatprep.subr.bf16.mxu0 0
        %1698 = vmatpush1.bf16.msra.mxu0 0
        %1699 = vmatprep.subr.bf16.mxu0 0
        %1700 = vmatpush1.bf16.msra.mxu0 0
        %1701 = vmatprep.subr.bf16.mxu0 0
        %1702 = vmatpush1.bf16.msra.mxu0 0
        %1703 = vmatprep.subr.bf16.mxu0 0
        %1704 = vmatpush1.bf16.msra.mxu0 0
        %1705 = vmatprep.subr.bf16.mxu0 0
        %1706 = vmatpush1.bf16.msra.mxu0 0
        %1707 = vmatprep.subr.bf16.mxu0 0
        %1708 = vmatpush1.bf16.msra.mxu0 0
        %1709 = vmatprep.subr.bf16.mxu0 0
        %1710 = vmatpush1.bf16.msra.mxu0 0
        %1711 = vmatprep.subr.bf16.mxu0 0
        %1712 = vmatpush1.bf16.msra.mxu0 0
        %1713 = vmatprep.subr.bf16.mxu0 0
        %1714 = vmatpush1.bf16.msra.mxu0 0
        %1715 = vmatprep.subr.bf16.mxu0 0
        %1716 = vmatpush1.bf16.msra.mxu0 0
        %1717 = vmatprep.subr.bf16.mxu0 0
        %1718 = vmatpush1.bf16.msra.mxu0 0
        %1719 = vmatprep.subr.bf16.mxu0 0
        %1720 = vmatpush1.bf16.msra.mxu0 0
        %1721 = vmatprep.subr.bf16.mxu0 0
        %1722 = vmatpush1.bf16.msra.mxu0 0
        %1723 = vmatprep.subr.bf16.mxu0 0
        %1724 = vmatpush1.bf16.msra.mxu0 0
        %1725 = vmatprep.mubr.bf16.mxu0 0
        %1726 = vmatmul.mubr.bf16.gmra.mrb[0].mxu0 %v761
        %v1727 = vpop.f32.mrb[0].mxu0
        %v1728 = vadd.f32 %v1691, %v1727
        %v1729 = vpop.f32.mrb[0].mxu0
        %v1730 = vpop.f32.mrb[0].mxu0
        %v1731 = vadd.f32 %v1691, %v1730
        %v1732 = vpop.f32.mrb[0].mxu0
        %1733 = vdwg.mxu0
        %1734 = vrot.lane.b32.xlu0 %v823, 104
        %v1735 = vpop.permute.xlu0 %1734
        %1736 = vrot.lane.b32.xlu0 %v824, 104
        %v1737 = vpop.permute.xlu0 %1736
        %1740 = vrot.lane.b32.xlu0 %v813, 104
        %v1741 = vpop.permute.xlu0 %1740
        %1743 = vmatprep.subr.bf16.mxu0 0
        %1744 = vmatpush1.bf16.msra.mxu0 %v1735
        %1745 = vmatprep.subr.bf16.mxu0 0
        %1746 = vmatpush1.bf16.msra.mxu0 %v1737
        %1747 = vmatprep.subr.bf16.mxu0 0
        %1748 = vmatpush1.bf16.msra.mxu0 0
        %1749 = vmatprep.subr.bf16.mxu0 0
        %1750 = vmatpush1.bf16.msra.mxu0 0
        %1751 = vmatprep.subr.bf16.mxu0 0
        %1752 = vmatpush1.bf16.msra.mxu0 0
        %1753 = vmatprep.subr.bf16.mxu0 0
        %1754 = vmatpush1.bf16.msra.mxu0 0
        %1755 = vmatprep.subr.bf16.mxu0 0
        %1756 = vmatpush1.bf16.msra.mxu0 0
        %1757 = vmatprep.subr.bf16.mxu0 0
        %1758 = vmatpush1.bf16.msra.mxu0 0
        %1759 = vmatprep.subr.bf16.mxu0 0
        %1760 = vmatpush1.bf16.msra.mxu0 0
        %1761 = vmatprep.subr.bf16.mxu0 0
        %1762 = vmatpush1.bf16.msra.mxu0 0
        %1763 = vmatprep.subr.bf16.mxu0 0
        %1764 = vmatpush1.bf16.msra.mxu0 0
        %1765 = vmatprep.subr.bf16.mxu0 0
        %1766 = vmatpush1.bf16.msra.mxu0 0
        %1767 = vmatprep.subr.bf16.mxu0 0
        %1768 = vmatpush1.bf16.msra.mxu0 0
        %1769 = vmatprep.subr.bf16.mxu0 0
        %1770 = vmatpush1.bf16.msra.mxu0 0
        %1771 = vmatprep.subr.bf16.mxu0 0
        %1772 = vmatpush1.bf16.msra.mxu0 0
        %1773 = vmatprep.subr.bf16.mxu0 0
        %1774 = vmatpush1.bf16.msra.mxu0 0
        %1775 = vmatprep.mubr.bf16.mxu0 0
        %1776 = vmatmul.mubr.bf16.gmra.mrb[0].mxu0 %v828
        %v1777 = vpop.f32.mrb[0].mxu0
        %v1778 = vadd.f32 %v1741, %v1777
        %v1779 = vpop.f32.mrb[0].mxu0
        %v1780 = vpop.f32.mrb[0].mxu0
        %v1781 = vadd.f32 %v1741, %v1780
        %v1782 = vpop.f32.mrb[0].mxu0
        %1783 = vdwg.mxu0
        %v1784 = vpack.c.bf16 %v1679, %v1679
        %v1785 = vpack.c.bf16 %v1731, %v1728
        %v1787 = vsel %vm879, %v1784, 0
        %v1790 = vsel %vm879, %v1785, 0
        %1792 = vmatprep.subr.bf16.mxu0 0
        %1793 = vmatpush1.bf16.xpose.msra.mxu0 %v1790
        %1794 = vmatprep.subr.bf16.mxu0 0
        %1795 = vmatpush1.bf16.xpose.msra.mxu0 0
        %1796 = vmatprep.subr.bf16.mxu0 0
        %1797 = vmatpush1.bf16.xpose.msra.mxu0 0
        %1798 = vmatprep.subr.bf16.mxu0 0
        %1799 = vmatpush1.bf16.xpose.msra.mxu0 0
        %1800 = vmatprep.subr.bf16.mxu0 0
        %1801 = vmatpush1.bf16.xpose.msra.mxu0 0
        %1802 = vmatprep.subr.bf16.mxu0 0
        %1803 = vmatpush1.bf16.xpose.msra.mxu0 0
        %1804 = vmatprep.subr.bf16.mxu0 0
        %1805 = vmatpush1.bf16.xpose.msra.mxu0 0
        %1806 = vmatprep.subr.bf16.mxu0 0
        %1807 = vmatpush1.bf16.xpose.msra.mxu0 0
        %1808 = vmatprep.subr.bf16.mxu0 0
        %1809 = vmatpush1.bf16.xpose.msra.mxu0 0
        %1810 = vmatprep.subr.bf16.mxu0 0
        %1811 = vmatpush1.bf16.xpose.msra.mxu0 0
        %1812 = vmatprep.subr.bf16.mxu0 0
        %1813 = vmatpush1.bf16.xpose.msra.mxu0 0
        %1814 = vmatprep.subr.bf16.mxu0 0
        %1815 = vmatpush1.bf16.xpose.msra.mxu0 0
        %1816 = vmatprep.subr.bf16.mxu0 0
        %1817 = vmatpush1.bf16.xpose.msra.mxu0 0
        %1818 = vmatprep.subr.bf16.mxu0 0
        %1819 = vmatpush1.bf16.xpose.msra.mxu0 0
        %1820 = vmatprep.subr.bf16.mxu0 0
        %1821 = vmatpush1.bf16.xpose.msra.mxu0 0
        %1822 = vmatprep.subr.bf16.mxu0 0
        %1823 = vmatpush1.bf16.xpose.msra.mxu0 0
        %1824 = vmatprep.mubr.bf16.mxu0 0
        %1825 = vmatmul.mubr.bf16.gmra.mrb[0].mxu0 %v1787
        %v1826 = vpop.f32.mrb[0].mxu0
        %v1827 = vadd.f32 %v877, %v1826
        %v1828 = vpop.f32.mrb[0].mxu0
        %v1829 = vpop.f32.mrb[0].mxu0
        %v1830 = vpop.f32.mrb[0].mxu0
        %1831 = vdwg.mxu0
        %v1832 = vsel %vm926, %v1827, -inf
        %1833 = vmax.xlane.f32.xlu0 %v1832
        %v1834 = vpop.xlane.xlu0 %1833
        %v1835 = vsub.f32 %v1827, %v1834
        %v1836 = vmul.f32 %v1835, 1.442695
        %v1837 = vpow.pop %v1836
        %v1838 = vsel %vm926, %v1837, 0.0
        %1839 = vadd.xlane.f32.xlu0 %v1838
        %v1840 = vpop.xlane.xlu0 %1839
        %v1841 = vrcp.pop %v1840
        %v1842 = vmul.f32 %v1837, %v1841
        %v1843 = vpack.c.bf16 %v1842, %v1842
        %v1844 = vpack.c.bf16 %v1781, %v1778
        %v1846 = vsel %vm926, %v1843, 0
        %1848 = vmatprep.subr.bf16.mxu0 0
        %1849 = vmatpush1.bf16.msra.mxu0 %v1844
        %1850 = vmatprep.subr.bf16.mxu0 0
        %1851 = vmatpush1.bf16.msra.mxu0 0
        %1852 = vmatprep.subr.bf16.mxu0 0
        %1853 = vmatpush1.bf16.msra.mxu0 0
        %1854 = vmatprep.subr.bf16.mxu0 0
        %1855 = vmatpush1.bf16.msra.mxu0 0
        %1856 = vmatprep.subr.bf16.mxu0 0
        %1857 = vmatpush1.bf16.msra.mxu0 0
        %1858 = vmatprep.subr.bf16.mxu0 0
        %1859 = vmatpush1.bf16.msra.mxu0 0
        %1860 = vmatprep.subr.bf16.mxu0 0
        %1861 = vmatpush1.bf16.msra.mxu0 0
        %1862 = vmatprep.subr.bf16.mxu0 0
        %1863 = vmatpush1.bf16.msra.mxu0 0
        %1864 = vmatprep.subr.bf16.mxu0 0
        %1865 = vmatpush1.bf16.msra.mxu0 0
        %1866 = vmatprep.subr.bf16.mxu0 0
        %1867 = vmatpush1.bf16.msra.mxu0 0
        %1868 = vmatprep.subr.bf16.mxu0 0
        %1869 = vmatpush1.bf16.msra.mxu0 0
        %1870 = vmatprep.subr.bf16.mxu0 0
        %1871 = vmatpush1.bf16.msra.mxu0 0
        %1872 = vmatprep.subr.bf16.mxu0 0
        %1873 = vmatpush1.bf16.msra.mxu0 0
        %1874 = vmatprep.subr.bf16.mxu0 0
        %1875 = vmatpush1.bf16.msra.mxu0 0
        %1876 = vmatprep.subr.bf16.mxu0 0
        %1877 = vmatpush1.bf16.msra.mxu0 0
        %1878 = vmatprep.subr.bf16.mxu0 0
        %1879 = vmatpush1.bf16.msra.mxu0 0
        %1880 = vmatprep.mubr.bf16.mxu0 0
        %1881 = vmatmul.mubr.bf16.gmra.mrb[0].mxu0 %v1846
        %v1882 = vpop.f32.mrb[0].mxu0
        %v1883 = vadd.f32 0.0, %v1882
        %v1884 = vpop.f32.mrb[0].mxu0
        %v1885 = vpop.f32.mrb[0].mxu0
        %v1886 = vpop.f32.mrb[0].mxu0
        %1887 = vdwg.mxu0
        %v1888 = vpack.c.bf16 %v1883, %v1883
        %v1889 = vld [vmem:[#allocation16 + $0xc] sm:$0xf]
        %v1891 = vsel %vm879, %v1888, 0
        %v1894 = vsel %vm1243, %v1889, 0
        %1896 = vmatprep.subr.bf16.mxu0 0
        %1897 = vmatpush1.bf16.msra.mxu0 %v1894
        %1898 = vmatprep.subr.bf16.mxu0 0
        %1899 = vmatpush1.bf16.msra.mxu0 0
        %1900 = vmatprep.subr.bf16.mxu0 0
        %1901 = vmatpush1.bf16.msra.mxu0 0
        %1902 = vmatprep.subr.bf16.mxu0 0
        %1903 = vmatpush1.bf16.msra.mxu0 0
        %1904 = vmatprep.subr.bf16.mxu0 0
        %1905 = vmatpush1.bf16.msra.mxu0 0
        %1906 = vmatprep.subr.bf16.mxu0 0
        %1907 = vmatpush1.bf16.msra.mxu0 0
        %1908 = vmatprep.subr.bf16.mxu0 0
        %1909 = vmatpush1.bf16.msra.mxu0 0
        %1910 = vmatprep.subr.bf16.mxu0 0
        %1911 = vmatpush1.bf16.msra.mxu0 0
        %1912 = vmatprep.subr.bf16.mxu0 0
        %1913 = vmatpush1.bf16.msra.mxu0 0
        %1914 = vmatprep.subr.bf16.mxu0 0
        %1915 = vmatpush1.bf16.msra.mxu0 0
        %1916 = vmatprep.subr.bf16.mxu0 0
        %1917 = vmatpush1.bf16.msra.mxu0 0
        %1918 = vmatprep.subr.bf16.mxu0 0
        %1919 = vmatpush1.bf16.msra.mxu0 0
        %1920 = vmatprep.subr.bf16.mxu0 0
        %1921 = vmatpush1.bf16.msra.mxu0 0
        %1922 = vmatprep.subr.bf16.mxu0 0
        %1923 = vmatpush1.bf16.msra.mxu0 0
        %1924 = vmatprep.subr.bf16.mxu0 0
        %1925 = vmatpush1.bf16.msra.mxu0 0
        %1926 = vmatprep.subr.bf16.mxu0 0
        %1927 = vmatpush1.bf16.msra.mxu0 0
        %1928 = vmatprep.mubr.bf16.mxu0 0
        %1929 = vmatmul.mubr.bf16.gmra.mrb[0].mxu0 %v1891
        %v1930 = vpop.f32.mrb[0].mxu0
        %v1931 = vadd.f32 0.0, %v1930
        %v1932 = vpop.f32.mrb[0].mxu0
        %v1933 = vpop.f32.mrb[0].mxu0
        %v1934 = vpop.f32.mrb[0].mxu0
        %1935 = vdwg.mxu0
        %v1936 = vadd.f32 %v1634, %v1931
        %v1937 = vld [vmem:[%s12] sm:$0x1]
        %v1939 = vlaneseq
        %v1940 = vshrl.u32 %v1939, 7
        %v1941 = vsub.s32 0, %v1940
        %v1942 = vrot.slane %v1937, %v1941
        %v1944 = vadd.f32 %v1936, %v1942
        %1945 = vst.msk [vmem:[%s652] sm:$0xff] %vm693, %v1944
        %v1946 = vadd.f32 %v1944, %v658
        %v1947 = vpack.c.bf16 %v1946, %v1946
        %s1948 = scalar_lea.vmem [#allocation10], 16
        %v1949 = vld [vmem:[%s1948] sm:$0xf]
        %v1950 = vld [vmem:[%s1948 + $0x4] sm:$0xf]
        %v1951 = vld [vmem:[%s1948 + $0x8] sm:$0xf]
        %v1952 = vld [vmem:[%s1948 + $0xc] sm:$0xf]
        %s1953 = scalar_lea.vmem [#allocation11], 1
        %v1954 = vld [vmem:[%s1953] sm:$0x1]
        %v1956 = vlaneseq
        %v1957 = vshrl.u32 %v1956, 7
        %v1958 = vsub.s32 0, %v1957
        %v1959 = vrot.slane %v1954, %v1958
        %v1965 = vunpack.c.l.b16 %v1949
        %v1966 = vunpack.c.l.b16 %v1950
        %v1967 = vunpack.c.l.b16 %v1951
        %v1968 = vunpack.c.l.b16 %v1952
        %v1969 = vpack.c.b16 %v1966, %v1965
        %v1970 = vpack.c.b16 %v1968, %v1967
        %v1974 = vsel %vm693, %v1947, 0
        %1976 = vmatprep.subr.bf16.mxu0 0
        %1977 = vmatpush1.bf16.msra.mxu0 %v1969
        %1978 = vmatprep.subr.bf16.mxu0 0
        %1979 = vmatpush1.bf16.msra.mxu0 %v1970
        %1980 = vmatprep.subr.bf16.mxu0 0
        %1981 = vmatpush1.bf16.msra.mxu0 0
        %1982 = vmatprep.subr.bf16.mxu0 0
        %1983 = vmatpush1.bf16.msra.mxu0 0
        %1984 = vmatprep.subr.bf16.mxu0 0
        %1985 = vmatpush1.bf16.msra.mxu0 0
        %1986 = vmatprep.subr.bf16.mxu0 0
        %1987 = vmatpush1.bf16.msra.mxu0 0
        %1988 = vmatprep.subr.bf16.mxu0 0
        %1989 = vmatpush1.bf16.msra.mxu0 0
        %1990 = vmatprep.subr.bf16.mxu0 0
        %1991 = vmatpush1.bf16.msra.mxu0 0
        %1992 = vmatprep.subr.bf16.mxu0 0
        %1993 = vmatpush1.bf16.msra.mxu0 0
        %1994 = vmatprep.subr.bf16.mxu0 0
        %1995 = vmatpush1.bf16.msra.mxu0 0
        %1996 = vmatprep.subr.bf16.mxu0 0
        %1997 = vmatpush1.bf16.msra.mxu0 0
        %1998 = vmatprep.subr.bf16.mxu0 0
        %1999 = vmatpush1.bf16.msra.mxu0 0
        %2000 = vmatprep.subr.bf16.mxu0 0
        %2001 = vmatpush1.bf16.msra.mxu0 0
        %2002 = vmatprep.subr.bf16.mxu0 0
        %2003 = vmatpush1.bf16.msra.mxu0 0
        %2004 = vmatprep.subr.bf16.mxu0 0
        %2005 = vmatpush1.bf16.msra.mxu0 0
        %2006 = vmatprep.subr.bf16.mxu0 0
        %2007 = vmatpush1.bf16.msra.mxu0 0
        %2008 = vmatprep.mubr.bf16.mxu0 0
        %2009 = vmatmul.mubr.bf16.gmra.mrb[0].mxu0 %v1974
        %v2010 = vpop.f32.mrb[0].mxu0
        %v2011 = vadd.f32 %v1959, %v2010
        %v2012 = vpop.f32.mrb[0].mxu0
        %v2013 = vpop.f32.mrb[0].mxu0
        %v2014 = vpop.f32.mrb[0].mxu0
        %2015 = vdwg.mxu0
        %s2016 = scalar_lea.vmem [#allocation13], 16
        %v2017 = vld [vmem:[%s2016] sm:$0xf]
        %v2018 = vld [vmem:[%s2016 + $0x4] sm:$0xf]
        %v2019 = vld [vmem:[%s2016 + $0x8] sm:$0xf]
        %v2020 = vld [vmem:[%s2016 + $0xc] sm:$0xf]
        %s2021 = scalar_lea.vmem [#allocation14], 1
        %v2022 = vld [vmem:[%s2021] sm:$0x1]
        %v2024 = vlaneseq
        %v2025 = vshrl.u32 %v2024, 7
        %v2026 = vsub.s32 0, %v2025
        %v2027 = vrot.slane %v2022, %v2026
        %v2033 = vunpack.c.l.b16 %v2017
        %v2034 = vunpack.c.l.b16 %v2018
        %v2035 = vunpack.c.l.b16 %v2019
        %v2036 = vunpack.c.l.b16 %v2020
        %v2037 = vpack.c.b16 %v2034, %v2033
        %v2038 = vpack.c.b16 %v2036, %v2035
        %2041 = vmatprep.subr.bf16.mxu0 0
        %2042 = vmatpush1.bf16.msra.mxu0 %v2037
        %2043 = vmatprep.subr.bf16.mxu0 0
        %2044 = vmatpush1.bf16.msra.mxu0 %v2038
        %2045 = vmatprep.subr.bf16.mxu0 0
        %2046 = vmatpush1.bf16.msra.mxu0 0
        %2047 = vmatprep.subr.bf16.mxu0 0
        %2048 = vmatpush1.bf16.msra.mxu0 0
        %2049 = vmatprep.subr.bf16.mxu0 0
        %2050 = vmatpush1.bf16.msra.mxu0 0
        %2051 = vmatprep.subr.bf16.mxu0 0
        %2052 = vmatpush1.bf16.msra.mxu0 0
        %2053 = vmatprep.subr.bf16.mxu0 0
        %2054 = vmatpush1.bf16.msra.mxu0 0
        %2055 = vmatprep.subr.bf16.mxu0 0
        %2056 = vmatpush1.bf16.msra.mxu0 0
        %2057 = vmatprep.subr.bf16.mxu0 0
        %2058 = vmatpush1.bf16.msra.mxu0 0
        %2059 = vmatprep.subr.bf16.mxu0 0
        %2060 = vmatpush1.bf16.msra.mxu0 0
        %2061 = vmatprep.subr.bf16.mxu0 0
        %2062 = vmatpush1.bf16.msra.mxu0 0
        %2063 = vmatprep.subr.bf16.mxu0 0
        %2064 = vmatpush1.bf16.msra.mxu0 0
        %2065 = vmatprep.subr.bf16.mxu0 0
        %2066 = vmatpush1.bf16.msra.mxu0 0
        %2067 = vmatprep.subr.bf16.mxu0 0
        %2068 = vmatpush1.bf16.msra.mxu0 0
        %2069 = vmatprep.subr.bf16.mxu0 0
        %2070 = vmatpush1.bf16.msra.mxu0 0
        %2071 = vmatprep.subr.bf16.mxu0 0
        %2072 = vmatpush1.bf16.msra.mxu0 0
        %2073 = vmatprep.mubr.bf16.mxu0 0
        %2074 = vmatmul.mubr.bf16.gmra.mrb[0].mxu0 %v761
        %v2075 = vpop.f32.mrb[0].mxu0
        %v2076 = vadd.f32 %v2027, %v2075
        %v2077 = vpop.f32.mrb[0].mxu0
        %v2078 = vpop.f32.mrb[0].mxu0
        %v2079 = vadd.f32 %v2027, %v2078
        %v2080 = vpop.f32.mrb[0].mxu0
        %2081 = vdwg.mxu0
        %s2082 = scalar_lea.vmem %s9, 16
        %v2083 = vld [vmem:[%s2082] sm:$0xf]
        %v2084 = vld [vmem:[%s2082 + $0x4] sm:$0xf]
        %v2085 = vld [vmem:[%s2082 + $0x8] sm:$0xf]
        %v2086 = vld [vmem:[%s2082 + $0xc] sm:$0xf]
        %s2087 = scalar_lea.vmem %s10, 1
        %v2088 = vld [vmem:[%s2087] sm:$0x1]
        %v2090 = vlaneseq
        %v2091 = vshrl.u32 %v2090, 7
        %v2092 = vsub.s32 0, %v2091
        %v2093 = vrot.slane %v2088, %v2092
        %v2099 = vunpack.c.l.b16 %v2083
        %v2100 = vunpack.c.l.b16 %v2084
        %v2101 = vunpack.c.l.b16 %v2085
        %v2102 = vunpack.c.l.b16 %v2086
        %v2103 = vpack.c.b16 %v2100, %v2099
        %v2104 = vpack.c.b16 %v2102, %v2101
        %2107 = vmatprep.subr.bf16.mxu0 0
        %2108 = vmatpush1.bf16.msra.mxu0 %v2103
        %2109 = vmatprep.subr.bf16.mxu0 0
        %2110 = vmatpush1.bf16.msra.mxu0 %v2104
        %2111 = vmatprep.subr.bf16.mxu0 0
        %2112 = vmatpush1.bf16.msra.mxu0 0
        %2113 = vmatprep.subr.bf16.mxu0 0
        %2114 = vmatpush1.bf16.msra.mxu0 0
        %2115 = vmatprep.subr.bf16.mxu0 0
        %2116 = vmatpush1.bf16.msra.mxu0 0
        %2117 = vmatprep.subr.bf16.mxu0 0
        %2118 = vmatpush1.bf16.msra.mxu0 0
        %2119 = vmatprep.subr.bf16.mxu0 0
        %2120 = vmatpush1.bf16.msra.mxu0 0
        %2121 = vmatprep.subr.bf16.mxu0 0
        %2122 = vmatpush1.bf16.msra.mxu0 0
        %2123 = vmatprep.subr.bf16.mxu0 0
        %2124 = vmatpush1.bf16.msra.mxu0 0
        %2125 = vmatprep.subr.bf16.mxu0 0
        %2126 = vmatpush1.bf16.msra.mxu0 0
        %2127 = vmatprep.subr.bf16.mxu0 0
        %2128 = vmatpush1.bf16.msra.mxu0 0
        %2129 = vmatprep.subr.bf16.mxu0 0
        %2130 = vmatpush1.bf16.msra.mxu0 0
        %2131 = vmatprep.subr.bf16.mxu0 0
        %2132 = vmatpush1.bf16.msra.mxu0 0
        %2133 = vmatprep.subr.bf16.mxu0 0
        %2134 = vmatpush1.bf16.msra.mxu0 0
        %2135 = vmatprep.subr.bf16.mxu0 0
        %2136 = vmatpush1.bf16.msra.mxu0 0
        %2137 = vmatprep.subr.bf16.mxu0 0
        %2138 = vmatpush1.bf16.msra.mxu0 0
        %2139 = vmatprep.mubr.bf16.mxu0 0
        %2140 = vmatmul.mubr.bf16.gmra.mrb[0].mxu0 %v828
        %v2141 = vpop.f32.mrb[0].mxu0
        %v2142 = vadd.f32 %v2093, %v2141
        %v2143 = vpop.f32.mrb[0].mxu0
        %v2144 = vpop.f32.mrb[0].mxu0
        %v2145 = vadd.f32 %v2093, %v2144
        %v2146 = vpop.f32.mrb[0].mxu0
        %2147 = vdwg.mxu0
        %v2148 = vpack.c.bf16 %v2011, %v2011
        %v2149 = vpack.c.bf16 %v2079, %v2076
        %v2151 = vsel %vm879, %v2148, 0
        %v2154 = vsel %vm879, %v2149, 0
        %2156 = vmatprep.subr.bf16.mxu0 0
        %2157 = vmatpush1.bf16.xpose.msra.mxu0 %v2154
        %2158 = vmatprep.subr.bf16.mxu0 0
        %2159 = vmatpush1.bf16.xpose.msra.mxu0 0
        %2160 = vmatprep.subr.bf16.mxu0 0
        %2161 = vmatpush1.bf16.xpose.msra.mxu0 0
        %2162 = vmatprep.subr.bf16.mxu0 0
        %2163 = vmatpush1.bf16.xpose.msra.mxu0 0
        %2164 = vmatprep.subr.bf16.mxu0 0
        %2165 = vmatpush1.bf16.xpose.msra.mxu0 0
        %2166 = vmatprep.subr.bf16.mxu0 0
        %2167 = vmatpush1.bf16.xpose.msra.mxu0 0
        %2168 = vmatprep.subr.bf16.mxu0 0
        %2169 = vmatpush1.bf16.xpose.msra.mxu0 0
        %2170 = vmatprep.subr.bf16.mxu0 0
        %2171 = vmatpush1.bf16.xpose.msra.mxu0 0
        %2172 = vmatprep.subr.bf16.mxu0 0
        %2173 = vmatpush1.bf16.xpose.msra.mxu0 0
        %2174 = vmatprep.subr.bf16.mxu0 0
        %2175 = vmatpush1.bf16.xpose.msra.mxu0 0
        %2176 = vmatprep.subr.bf16.mxu0 0
        %2177 = vmatpush1.bf16.xpose.msra.mxu0 0
        %2178 = vmatprep.subr.bf16.mxu0 0
        %2179 = vmatpush1.bf16.xpose.msra.mxu0 0
        %2180 = vmatprep.subr.bf16.mxu0 0
        %2181 = vmatpush1.bf16.xpose.msra.mxu0 0
        %2182 = vmatprep.subr.bf16.mxu0 0
        %2183 = vmatpush1.bf16.xpose.msra.mxu0 0
        %2184 = vmatprep.subr.bf16.mxu0 0
        %2185 = vmatpush1.bf16.xpose.msra.mxu0 0
        %2186 = vmatprep.subr.bf16.mxu0 0
        %2187 = vmatpush1.bf16.xpose.msra.mxu0 0
        %2188 = vmatprep.mubr.bf16.mxu0 0
        %2189 = vmatmul.mubr.bf16.gmra.mrb[0].mxu0 %v2151
        %v2190 = vpop.f32.mrb[0].mxu0
        %v2191 = vadd.f32 %v877, %v2190
        %v2192 = vpop.f32.mrb[0].mxu0
        %v2193 = vpop.f32.mrb[0].mxu0
        %v2194 = vpop.f32.mrb[0].mxu0
        %2195 = vdwg.mxu0
        %v2196 = vsel %vm926, %v2191, -inf
        %2197 = vmax.xlane.f32.xlu0 %v2196
        %v2198 = vpop.xlane.xlu0 %2197
        %v2199 = vsub.f32 %v2191, %v2198
        %v2200 = vmul.f32 %v2199, 1.442695
        %v2201 = vpow.pop %v2200
        %v2202 = vsel %vm926, %v2201, 0.0
        %2203 = vadd.xlane.f32.xlu0 %v2202
        %v2204 = vpop.xlane.xlu0 %2203
        %v2205 = vrcp.pop %v2204
        %v2206 = vmul.f32 %v2201, %v2205
        %v2207 = vpack.c.bf16 %v2206, %v2206
        %v2208 = vpack.c.bf16 %v2145, %v2142
        %v2210 = vsel %vm926, %v2207, 0
        %2212 = vmatprep.subr.bf16.mxu0 0
        %2213 = vmatpush1.bf16.msra.mxu0 %v2208
        %2214 = vmatprep.subr.bf16.mxu0 0
        %2215 = vmatpush1.bf16.msra.mxu0 0
        %2216 = vmatprep.subr.bf16.mxu0 0
        %2217 = vmatpush1.bf16.msra.mxu0 0
        %2218 = vmatprep.subr.bf16.mxu0 0
        %2219 = vmatpush1.bf16.msra.mxu0 0
        %2220 = vmatprep.subr.bf16.mxu0 0
        %2221 = vmatpush1.bf16.msra.mxu0 0
        %2222 = vmatprep.subr.bf16.mxu0 0
        %2223 = vmatpush1.bf16.msra.mxu0 0
        %2224 = vmatprep.subr.bf16.mxu0 0
        %2225 = vmatpush1.bf16.msra.mxu0 0
        %2226 = vmatprep.subr.bf16.mxu0 0
        %2227 = vmatpush1.bf16.msra.mxu0 0
        %2228 = vmatprep.subr.bf16.mxu0 0
        %2229 = vmatpush1.bf16.msra.mxu0 0
        %2230 = vmatprep.subr.bf16.mxu0 0
        %2231 = vmatpush1.bf16.msra.mxu0 0
        %2232 = vmatprep.subr.bf16.mxu0 0
        %2233 = vmatpush1.bf16.msra.mxu0 0
        %2234 = vmatprep.subr.bf16.mxu0 0
        %2235 = vmatpush1.bf16.msra.mxu0 0
        %2236 = vmatprep.subr.bf16.mxu0 0
        %2237 = vmatpush1.bf16.msra.mxu0 0
        %2238 = vmatprep.subr.bf16.mxu0 0
        %2239 = vmatpush1.bf16.msra.mxu0 0
        %2240 = vmatprep.subr.bf16.mxu0 0
        %2241 = vmatpush1.bf16.msra.mxu0 0
        %2242 = vmatprep.subr.bf16.mxu0 0
        %2243 = vmatpush1.bf16.msra.mxu0 0
        %2244 = vmatprep.mubr.bf16.mxu0 0
        %2245 = vmatmul.mubr.bf16.gmra.mrb[0].mxu0 %v2210
        %v2246 = vpop.f32.mrb[0].mxu0
        %v2247 = vadd.f32 0.0, %v2246
        %v2248 = vpop.f32.mrb[0].mxu0
        %v2249 = vpop.f32.mrb[0].mxu0
        %v2250 = vpop.f32.mrb[0].mxu0
        %2251 = vdwg.mxu0
        %v2252 = vpack.c.bf16 %v2247, %v2247
        %s2253 = scalar_lea.vmem [#allocation16], 16
        %v2254 = vld [vmem:[%s2253] sm:$0xf]
        %2255 = vrot.lane.b32.xlu0 %v1969, 120
        %v2256 = vpop.permute.xlu0 %2255
        %2257 = vrot.lane.b32.xlu0 %v1970, 120
        %v2258 = vpop.permute.xlu0 %2257
        %2261 = vrot.lane.b32.xlu0 %v1959, 120
        %v2262 = vpop.permute.xlu0 %2261
        %2264 = vmatprep.subr.bf16.mxu0 0
        %2265 = vmatpush1.bf16.msra.mxu0 %v2256
        %2266 = vmatprep.subr.bf16.mxu0 0
        %2267 = vmatpush1.bf16.msra.mxu0 %v2258
        %2268 = vmatprep.subr.bf16.mxu0 0
        %2269 = vmatpush1.bf16.msra.mxu0 0
        %2270 = vmatprep.subr.bf16.mxu0 0
        %2271 = vmatpush1.bf16.msra.mxu0 0
        %2272 = vmatprep.subr.bf16.mxu0 0
        %2273 = vmatpush1.bf16.msra.mxu0 0
        %2274 = vmatprep.subr.bf16.mxu0 0
        %2275 = vmatpush1.bf16.msra.mxu0 0
        %2276 = vmatprep.subr.bf16.mxu0 0
        %2277 = vmatpush1.bf16.msra.mxu0 0
        %2278 = vmatprep.subr.bf16.mxu0 0
        %2279 = vmatpush1.bf16.msra.mxu0 0
        %2280 = vmatprep.subr.bf16.mxu0 0
        %2281 = vmatpush1.bf16.msra.mxu0 0
        %2282 = vmatprep.subr.bf16.mxu0 0
        %2283 = vmatpush1.bf16.msra.mxu0 0
        %2284 = vmatprep.subr.bf16.mxu0 0
        %2285 = vmatpush1.bf16.msra.mxu0 0
        %2286 = vmatprep.subr.bf16.mxu0 0
        %2287 = vmatpush1.bf16.msra.mxu0 0
        %2288 = vmatprep.subr.bf16.mxu0 0
        %2289 = vmatpush1.bf16.msra.mxu0 0
        %2290 = vmatprep.subr.bf16.mxu0 0
        %2291 = vmatpush1.bf16.msra.mxu0 0
        %2292 = vmatprep.subr.bf16.mxu0 0
        %2293 = vmatpush1.bf16.msra.mxu0 0
        %2294 = vmatprep.subr.bf16.mxu0 0
        %2295 = vmatpush1.bf16.msra.mxu0 0
        %2296 = vmatprep.mubr.bf16.mxu0 0
        %2297 = vmatmul.mubr.bf16.gmra.mrb[0].mxu0 %v1974
        %v2298 = vpop.f32.mrb[0].mxu0
        %v2299 = vadd.f32 %v2262, %v2298
        %v2300 = vpop.f32.mrb[0].mxu0
        %v2301 = vpop.f32.mrb[0].mxu0
        %v2302 = vpop.f32.mrb[0].mxu0
        %2303 = vdwg.mxu0
        %2304 = vrot.lane.b32.xlu0 %v2037, 120
        %v2305 = vpop.permute.xlu0 %2304
        %2306 = vrot.lane.b32.xlu0 %v2038, 120
        %v2307 = vpop.permute.xlu0 %2306
        %2310 = vrot.lane.b32.xlu0 %v2027, 120
        %v2311 = vpop.permute.xlu0 %2310
        %2313 = vmatprep.subr.bf16.mxu0 0
        %2314 = vmatpush1.bf16.msra.mxu0 %v2305
        %2315 = vmatprep.subr.bf16.mxu0 0
        %2316 = vmatpush1.bf16.msra.mxu0 %v2307
        %2317 = vmatprep.subr.bf16.mxu0 0
        %2318 = vmatpush1.bf16.msra.mxu0 0
        %2319 = vmatprep.subr.bf16.mxu0 0
        %2320 = vmatpush1.bf16.msra.mxu0 0
        %2321 = vmatprep.subr.bf16.mxu0 0
        %2322 = vmatpush1.bf16.msra.mxu0 0
        %2323 = vmatprep.subr.bf16.mxu0 0
        %2324 = vmatpush1.bf16.msra.mxu0 0
        %2325 = vmatprep.subr.bf16.mxu0 0
        %2326 = vmatpush1.bf16.msra.mxu0 0
        %2327 = vmatprep.subr.bf16.mxu0 0
        %2328 = vmatpush1.bf16.msra.mxu0 0
        %2329 = vmatprep.subr.bf16.mxu0 0
        %2330 = vmatpush1.bf16.msra.mxu0 0
        %2331 = vmatprep.subr.bf16.mxu0 0
        %2332 = vmatpush1.bf16.msra.mxu0 0
        %2333 = vmatprep.subr.bf16.mxu0 0
        %2334 = vmatpush1.bf16.msra.mxu0 0
        %2335 = vmatprep.subr.bf16.mxu0 0
        %2336 = vmatpush1.bf16.msra.mxu0 0
        %2337 = vmatprep.subr.bf16.mxu0 0
        %2338 = vmatpush1.bf16.msra.mxu0 0
        %2339 = vmatprep.subr.bf16.mxu0 0
        %2340 = vmatpush1.bf16.msra.mxu0 0
        %2341 = vmatprep.subr.bf16.mxu0 0
        %2342 = vmatpush1.bf16.msra.mxu0 0
        %2343 = vmatprep.subr.bf16.mxu0 0
        %2344 = vmatpush1.bf16.msra.mxu0 0
        %2345 = vmatprep.mubr.bf16.mxu0 0
        %2346 = vmatmul.mubr.bf16.gmra.mrb[0].mxu0 %v761
        %v2347 = vpop.f32.mrb[0].mxu0
        %v2348 = vadd.f32 %v2311, %v2347
        %v2349 = vpop.f32.mrb[0].mxu0
        %v2350 = vpop.f32.mrb[0].mxu0
        %v2351 = vadd.f32 %v2311, %v2350
        %v2352 = vpop.f32.mrb[0].mxu0
        %2353 = vdwg.mxu0
        %2354 = vrot.lane.b32.xlu0 %v2103, 120
        %v2355 = vpop.permute.xlu0 %2354
        %2356 = vrot.lane.b32.xlu0 %v2104, 120
        %v2357 = vpop.permute.xlu0 %2356
        %2360 = vrot.lane.b32.xlu0 %v2093, 120
        %v2361 = vpop.permute.xlu0 %2360
        %2363 = vmatprep.subr.bf16.mxu0 0
        %2364 = vmatpush1.bf16.msra.mxu0 %v2355
        %2365 = vmatprep.subr.bf16.mxu0 0
        %2366 = vmatpush1.bf16.msra.mxu0 %v2357
        %2367 = vmatprep.subr.bf16.mxu0 0
        %2368 = vmatpush1.bf16.msra.mxu0 0
        %2369 = vmatprep.subr.bf16.mxu0 0
        %2370 = vmatpush1.bf16.msra.mxu0 0
        %2371 = vmatprep.subr.bf16.mxu0 0
        %2372 = vmatpush1.bf16.msra.mxu0 0
        %2373 = vmatprep.subr.bf16.mxu0 0
        %2374 = vmatpush1.bf16.msra.mxu0 0
        %2375 = vmatprep.subr.bf16.mxu0 0
        %2376 = vmatpush1.bf16.msra.mxu0 0
        %2377 = vmatprep.subr.bf16.mxu0 0
        %2378 = vmatpush1.bf16.msra.mxu0 0
        %2379 = vmatprep.subr.bf16.mxu0 0
        %2380 = vmatpush1.bf16.msra.mxu0 0
        %2381 = vmatprep.subr.bf16.mxu0 0
        %2382 = vmatpush1.bf16.msra.mxu0 0
        %2383 = vmatprep.subr.bf16.mxu0 0
        %2384 = vmatpush1.bf16.msra.mxu0 0
        %2385 = vmatprep.subr.bf16.mxu0 0
        %2386 = vmatpush1.bf16.msra.mxu0 0
        %2387 = vmatprep.subr.bf16.mxu0 0
        %2388 = vmatpush1.bf16.msra.mxu0 0
        %2389 = vmatprep.subr.bf16.mxu0 0
        %2390 = vmatpush1.bf16.msra.mxu0 0
        %2391 = vmatprep.subr.bf16.mxu0 0
        %2392 = vmatpush1.bf16.msra.mxu0 0
        %2393 = vmatprep.subr.bf16.mxu0 0
        %2394 = vmatpush1.bf16.msra.mxu0 0
        %2395 = vmatprep.mubr.bf16.mxu0 0
        %2396 = vmatmul.mubr.bf16.gmra.mrb[0].mxu0 %v828
        %v2397 = vpop.f32.mrb[0].mxu0
        %v2398 = vadd.f32 %v2361, %v2397
        %v2399 = vpop.f32.mrb[0].mxu0
        %v2400 = vpop.f32.mrb[0].mxu0
        %v2401 = vadd.f32 %v2361, %v2400
        %v2402 = vpop.f32.mrb[0].mxu0
        %2403 = vdwg.mxu0
        %v2404 = vpack.c.bf16 %v2299, %v2299
        %v2405 = vpack.c.bf16 %v2351, %v2348
        %v2407 = vsel %vm879, %v2404, 0
        %v2410 = vsel %vm879, %v2405, 0
        %2412 = vmatprep.subr.bf16.mxu0 0
        %2413 = vmatpush1.bf16.xpose.msra.mxu0 %v2410
        %2414 = vmatprep.subr.bf16.mxu0 0
        %2415 = vmatpush1.bf16.xpose.msra.mxu0 0
        %2416 = vmatprep.subr.bf16.mxu0 0
        %2417 = vmatpush1.bf16.xpose.msra.mxu0 0
        %2418 = vmatprep.subr.bf16.mxu0 0
        %2419 = vmatpush1.bf16.xpose.msra.mxu0 0
        %2420 = vmatprep.subr.bf16.mxu0 0
        %2421 = vmatpush1.bf16.xpose.msra.mxu0 0
        %2422 = vmatprep.subr.bf16.mxu0 0
        %2423 = vmatpush1.bf16.xpose.msra.mxu0 0
        %2424 = vmatprep.subr.bf16.mxu0 0
        %2425 = vmatpush1.bf16.xpose.msra.mxu0 0
        %2426 = vmatprep.subr.bf16.mxu0 0
        %2427 = vmatpush1.bf16.xpose.msra.mxu0 0
        %2428 = vmatprep.subr.bf16.mxu0 0
        %2429 = vmatpush1.bf16.xpose.msra.mxu0 0
        %2430 = vmatprep.subr.bf16.mxu0 0
        %2431 = vmatpush1.bf16.xpose.msra.mxu0 0
        %2432 = vmatprep.subr.bf16.mxu0 0
        %2433 = vmatpush1.bf16.xpose.msra.mxu0 0
        %2434 = vmatprep.subr.bf16.mxu0 0
        %2435 = vmatpush1.bf16.xpose.msra.mxu0 0
        %2436 = vmatprep.subr.bf16.mxu0 0
        %2437 = vmatpush1.bf16.xpose.msra.mxu0 0
        %2438 = vmatprep.subr.bf16.mxu0 0
        %2439 = vmatpush1.bf16.xpose.msra.mxu0 0
        %2440 = vmatprep.subr.bf16.mxu0 0
        %2441 = vmatpush1.bf16.xpose.msra.mxu0 0
        %2442 = vmatprep.subr.bf16.mxu0 0
        %2443 = vmatpush1.bf16.xpose.msra.mxu0 0
        %2444 = vmatprep.mubr.bf16.mxu0 0
        %2445 = vmatmul.mubr.bf16.gmra.mrb[0].mxu0 %v2407
        %v2446 = vpop.f32.mrb[0].mxu0
        %v2447 = vadd.f32 %v877, %v2446
        %v2448 = vpop.f32.mrb[0].mxu0
        %v2449 = vpop.f32.mrb[0].mxu0
        %v2450 = vpop.f32.mrb[0].mxu0
        %2451 = vdwg.mxu0
        %v2452 = vsel %vm926, %v2447, -inf
        %2453 = vmax.xlane.f32.xlu0 %v2452
        %v2454 = vpop.xlane.xlu0 %2453
        %v2455 = vsub.f32 %v2447, %v2454
        %v2456 = vmul.f32 %v2455, 1.442695
        %v2457 = vpow.pop %v2456
        %v2458 = vsel %vm926, %v2457, 0.0
        %2459 = vadd.xlane.f32.xlu0 %v2458
        %v2460 = vpop.xlane.xlu0 %2459
        %v2461 = vrcp.pop %v2460
        %v2462 = vmul.f32 %v2457, %v2461
        %v2463 = vpack.c.bf16 %v2462, %v2462
        %v2464 = vpack.c.bf16 %v2401, %v2398
        %v2466 = vsel %vm926, %v2463, 0
        %2468 = vmatprep.subr.bf16.mxu0 0
        %2469 = vmatpush1.bf16.msra.mxu0 %v2464
        %2470 = vmatprep.subr.bf16.mxu0 0
        %2471 = vmatpush1.bf16.msra.mxu0 0
        %2472 = vmatprep.subr.bf16.mxu0 0
        %2473 = vmatpush1.bf16.msra.mxu0 0
        %2474 = vmatprep.subr.bf16.mxu0 0
        %2475 = vmatpush1.bf16.msra.mxu0 0
        %2476 = vmatprep.subr.bf16.mxu0 0
        %2477 = vmatpush1.bf16.msra.mxu0 0
        %2478 = vmatprep.subr.bf16.mxu0 0
        %2479 = vmatpush1.bf16.msra.mxu0 0
        %2480 = vmatprep.subr.bf16.mxu0 0
        %2481 = vmatpush1.bf16.msra.mxu0 0
        %2482 = vmatprep.subr.bf16.mxu0 0
        %2483 = vmatpush1.bf16.msra.mxu0 0
        %2484 = vmatprep.subr.bf16.mxu0 0
        %2485 = vmatpush1.bf16.msra.mxu0 0
        %2486 = vmatprep.subr.bf16.mxu0 0
        %2487 = vmatpush1.bf16.msra.mxu0 0
        %2488 = vmatprep.subr.bf16.mxu0 0
        %2489 = vmatpush1.bf16.msra.mxu0 0
        %2490 = vmatprep.subr.bf16.mxu0 0
        %2491 = vmatpush1.bf16.msra.mxu0 0
        %2492 = vmatprep.subr.bf16.mxu0 0
        %2493 = vmatpush1.bf16.msra.mxu0 0
        %2494 = vmatprep.subr.bf16.mxu0 0
        %2495 = vmatpush1.bf16.msra.mxu0 0
        %2496 = vmatprep.subr.bf16.mxu0 0
        %2497 = vmatpush1.bf16.msra.mxu0 0
        %2498 = vmatprep.subr.bf16.mxu0 0
        %2499 = vmatpush1.bf16.msra.mxu0 0
        %2500 = vmatprep.mubr.bf16.mxu0 0
        %2501 = vmatmul.mubr.bf16.gmra.mrb[0].mxu0 %v2466
        %v2502 = vpop.f32.mrb[0].mxu0
        %v2503 = vadd.f32 0.0, %v2502
        %v2504 = vpop.f32.mrb[0].mxu0
        %v2505 = vpop.f32.mrb[0].mxu0
        %v2506 = vpop.f32.mrb[0].mxu0
        %2507 = vdwg.mxu0
        %v2508 = vpack.c.bf16 %v2503, %v2503
        %v2509 = vld [vmem:[%s2253 + $0x4] sm:$0xf]
        %v2511 = vsel %vm879, %v2508, 0
        %v2514 = vsel %vm1243, %v2509, 0
        %2516 = vmatprep.subr.bf16.mxu0 0
        %2517 = vmatpush1.bf16.msra.mxu0 %v2514
        %2518 = vmatprep.subr.bf16.mxu0 0
        %2519 = vmatpush1.bf16.msra.mxu0 0
        %2520 = vmatprep.subr.bf16.mxu0 0
        %2521 = vmatpush1.bf16.msra.mxu0 0
        %2522 = vmatprep.subr.bf16.mxu0 0
        %2523 = vmatpush1.bf16.msra.mxu0 0
        %2524 = vmatprep.subr.bf16.mxu0 0
        %2525 = vmatpush1.bf16.msra.mxu0 0
        %2526 = vmatprep.subr.bf16.mxu0 0
        %2527 = vmatpush1.bf16.msra.mxu0 0
        %2528 = vmatprep.subr.bf16.mxu0 0
        %2529 = vmatpush1.bf16.msra.mxu0 0
        %2530 = vmatprep.subr.bf16.mxu0 0
        %2531 = vmatpush1.bf16.msra.mxu0 0
        %2532 = vmatprep.subr.bf16.mxu0 0
        %2533 = vmatpush1.bf16.msra.mxu0 0
        %2534 = vmatprep.subr.bf16.mxu0 0
        %2535 = vmatpush1.bf16.msra.mxu0 0
        %2536 = vmatprep.subr.bf16.mxu0 0
        %2537 = vmatpush1.bf16.msra.mxu0 0
        %2538 = vmatprep.subr.bf16.mxu0 0
        %2539 = vmatpush1.bf16.msra.mxu0 0
        %2540 = vmatprep.subr.bf16.mxu0 0
        %2541 = vmatpush1.bf16.msra.mxu0 0
        %2542 = vmatprep.subr.bf16.mxu0 0
        %2543 = vmatpush1.bf16.msra.mxu0 0
        %2544 = vmatprep.subr.bf16.mxu0 0
        %2545 = vmatpush1.bf16.msra.mxu0 0
        %2546 = vmatprep.subr.bf16.mxu0 0
        %2547 = vmatpush1.bf16.msra.mxu0 0
        %2548 = vmatprep.mubr.bf16.mxu0 0
        %2549 = vmatmul.mubr.bf16.gmra.mrb[0].mxu0 %v2511
        %v2550 = vpop.f32.mrb[0].mxu0
        %v2551 = vadd.f32 0.0, %v2550
        %v2552 = vpop.f32.mrb[0].mxu0
        %v2553 = vpop.f32.mrb[0].mxu0
        %v2554 = vpop.f32.mrb[0].mxu0
        %2555 = vdwg.mxu0
        %v2557 = vsel %vm879, %v2252, 0
        %v2560 = vsel %vm1243, %v2254, 0
        %2562 = vmatprep.subr.bf16.mxu0 0
        %2563 = vmatpush1.bf16.msra.mxu0 %v2560
        %2564 = vmatprep.subr.bf16.mxu0 0
        %2565 = vmatpush1.bf16.msra.mxu0 0
        %2566 = vmatprep.subr.bf16.mxu0 0
        %2567 = vmatpush1.bf16.msra.mxu0 0
        %2568 = vmatprep.subr.bf16.mxu0 0
        %2569 = vmatpush1.bf16.msra.mxu0 0
        %2570 = vmatprep.subr.bf16.mxu0 0
        %2571 = vmatpush1.bf16.msra.mxu0 0
        %2572 = vmatprep.subr.bf16.mxu0 0
        %2573 = vmatpush1.bf16.msra.mxu0 0
        %2574 = vmatprep.subr.bf16.mxu0 0
        %2575 = vmatpush1.bf16.msra.mxu0 0
        %2576 = vmatprep.subr.bf16.mxu0 0
        %2577 = vmatpush1.bf16.msra.mxu0 0
        %2578 = vmatprep.subr.bf16.mxu0 0
        %2579 = vmatpush1.bf16.msra.mxu0 0
        %2580 = vmatprep.subr.bf16.mxu0 0
        %2581 = vmatpush1.bf16.msra.mxu0 0
        %2582 = vmatprep.subr.bf16.mxu0 0
        %2583 = vmatpush1.bf16.msra.mxu0 0
        %2584 = vmatprep.subr.bf16.mxu0 0
        %2585 = vmatpush1.bf16.msra.mxu0 0
        %2586 = vmatprep.subr.bf16.mxu0 0
        %2587 = vmatpush1.bf16.msra.mxu0 0
        %2588 = vmatprep.subr.bf16.mxu0 0
        %2589 = vmatpush1.bf16.msra.mxu0 0
        %2590 = vmatprep.subr.bf16.mxu0 0
        %2591 = vmatpush1.bf16.msra.mxu0 0
        %2592 = vmatprep.subr.bf16.mxu0 0
        %2593 = vmatpush1.bf16.msra.mxu0 0
        %2594 = vmatprep.mubr.bf16.mxu0 0
        %2595 = vmatmul.mubr.bf16.gmra.mrb[0].mxu0 %v2557
        %v2596 = vpop.f32.mrb[0].mxu0
        %v2597 = vadd.f32 %v2551, %v2596
        %v2598 = vpop.f32.mrb[0].mxu0
        %v2599 = vpop.f32.mrb[0].mxu0
        %v2600 = vpop.f32.mrb[0].mxu0
        %2601 = vdwg.mxu0
        %2602 = vrot.lane.b32.xlu0 %v1969, 112
        %v2603 = vpop.permute.xlu0 %2602
        %2604 = vrot.lane.b32.xlu0 %v1970, 112
        %v2605 = vpop.permute.xlu0 %2604
        %2608 = vrot.lane.b32.xlu0 %v1959, 112
        %v2609 = vpop.permute.xlu0 %2608
        %2611 = vmatprep.subr.bf16.mxu0 0
        %2612 = vmatpush1.bf16.msra.mxu0 %v2603
        %2613 = vmatprep.subr.bf16.mxu0 0
        %2614 = vmatpush1.bf16.msra.mxu0 %v2605
        %2615 = vmatprep.subr.bf16.mxu0 0
        %2616 = vmatpush1.bf16.msra.mxu0 0
        %2617 = vmatprep.subr.bf16.mxu0 0
        %2618 = vmatpush1.bf16.msra.mxu0 0
        %2619 = vmatprep.subr.bf16.mxu0 0
        %2620 = vmatpush1.bf16.msra.mxu0 0
        %2621 = vmatprep.subr.bf16.mxu0 0
        %2622 = vmatpush1.bf16.msra.mxu0 0
        %2623 = vmatprep.subr.bf16.mxu0 0
        %2624 = vmatpush1.bf16.msra.mxu0 0
        %2625 = vmatprep.subr.bf16.mxu0 0
        %2626 = vmatpush1.bf16.msra.mxu0 0
        %2627 = vmatprep.subr.bf16.mxu0 0
        %2628 = vmatpush1.bf16.msra.mxu0 0
        %2629 = vmatprep.subr.bf16.mxu0 0
        %2630 = vmatpush1.bf16.msra.mxu0 0
        %2631 = vmatprep.subr.bf16.mxu0 0
        %2632 = vmatpush1.bf16.msra.mxu0 0
        %2633 = vmatprep.subr.bf16.mxu0 0
        %2634 = vmatpush1.bf16.msra.mxu0 0
        %2635 = vmatprep.subr.bf16.mxu0 0
        %2636 = vmatpush1.bf16.msra.mxu0 0
        %2637 = vmatprep.subr.bf16.mxu0 0
        %2638 = vmatpush1.bf16.msra.mxu0 0
        %2639 = vmatprep.subr.bf16.mxu0 0
        %2640 = vmatpush1.bf16.msra.mxu0 0
        %2641 = vmatprep.subr.bf16.mxu0 0
        %2642 = vmatpush1.bf16.msra.mxu0 0
        %2643 = vmatprep.mubr.bf16.mxu0 0
        %2644 = vmatmul.mubr.bf16.gmra.mrb[0].mxu0 %v1974
        %v2645 = vpop.f32.mrb[0].mxu0
        %v2646 = vadd.f32 %v2609, %v2645
        %v2647 = vpop.f32.mrb[0].mxu0
        %v2648 = vpop.f32.mrb[0].mxu0
        %v2649 = vpop.f32.mrb[0].mxu0
        %2650 = vdwg.mxu0
        %2651 = vrot.lane.b32.xlu0 %v2037, 112
        %v2652 = vpop.permute.xlu0 %2651
        %2653 = vrot.lane.b32.xlu0 %v2038, 112
        %v2654 = vpop.permute.xlu0 %2653
        %2657 = vrot.lane.b32.xlu0 %v2027, 112
        %v2658 = vpop.permute.xlu0 %2657
        %2660 = vmatprep.subr.bf16.mxu0 0
        %2661 = vmatpush1.bf16.msra.mxu0 %v2652
        %2662 = vmatprep.subr.bf16.mxu0 0
        %2663 = vmatpush1.bf16.msra.mxu0 %v2654
        %2664 = vmatprep.subr.bf16.mxu0 0
        %2665 = vmatpush1.bf16.msra.mxu0 0
        %2666 = vmatprep.subr.bf16.mxu0 0
        %2667 = vmatpush1.bf16.msra.mxu0 0
        %2668 = vmatprep.subr.bf16.mxu0 0
        %2669 = vmatpush1.bf16.msra.mxu0 0
        %2670 = vmatprep.subr.bf16.mxu0 0
        %2671 = vmatpush1.bf16.msra.mxu0 0
        %2672 = vmatprep.subr.bf16.mxu0 0
        %2673 = vmatpush1.bf16.msra.mxu0 0
        %2674 = vmatprep.subr.bf16.mxu0 0
        %2675 = vmatpush1.bf16.msra.mxu0 0
        %2676 = vmatprep.subr.bf16.mxu0 0
        %2677 = vmatpush1.bf16.msra.mxu0 0
        %2678 = vmatprep.subr.bf16.mxu0 0
        %2679 = vmatpush1.bf16.msra.mxu0 0
        %2680 = vmatprep.subr.bf16.mxu0 0
        %2681 = vmatpush1.bf16.msra.mxu0 0
        %2682 = vmatprep.subr.bf16.mxu0 0
        %2683 = vmatpush1.bf16.msra.mxu0 0
        %2684 = vmatprep.subr.bf16.mxu0 0
        %2685 = vmatpush1.bf16.msra.mxu0 0
        %2686 = vmatprep.subr.bf16.mxu0 0
        %2687 = vmatpush1.bf16.msra.mxu0 0
        %2688 = vmatprep.subr.bf16.mxu0 0
        %2689 = vmatpush1.bf16.msra.mxu0 0
        %2690 = vmatprep.subr.bf16.mxu0 0
        %2691 = vmatpush1.bf16.msra.mxu0 0
        %2692 = vmatprep.mubr.bf16.mxu0 0
        %2693 = vmatmul.mubr.bf16.gmra.mrb[0].mxu0 %v761
        %v2694 = vpop.f32.mrb[0].mxu0
        %v2695 = vadd.f32 %v2658, %v2694
        %v2696 = vpop.f32.mrb[0].mxu0
        %v2697 = vpop.f32.mrb[0].mxu0
        %v2698 = vadd.f32 %v2658, %v2697
        %v2699 = vpop.f32.mrb[0].mxu0
        %2700 = vdwg.mxu0
        %2701 = vrot.lane.b32.xlu0 %v2103, 112
        %v2702 = vpop.permute.xlu0 %2701
        %2703 = vrot.lane.b32.xlu0 %v2104, 112
        %v2704 = vpop.permute.xlu0 %2703
        %2707 = vrot.lane.b32.xlu0 %v2093, 112
        %v2708 = vpop.permute.xlu0 %2707
        %2710 = vmatprep.subr.bf16.mxu0 0
        %2711 = vmatpush1.bf16.msra.mxu0 %v2702
        %2712 = vmatprep.subr.bf16.mxu0 0
        %2713 = vmatpush1.bf16.msra.mxu0 %v2704
        %2714 = vmatprep.subr.bf16.mxu0 0
        %2715 = vmatpush1.bf16.msra.mxu0 0
        %2716 = vmatprep.subr.bf16.mxu0 0
        %2717 = vmatpush1.bf16.msra.mxu0 0
        %2718 = vmatprep.subr.bf16.mxu0 0
        %2719 = vmatpush1.bf16.msra.mxu0 0
        %2720 = vmatprep.subr.bf16.mxu0 0
        %2721 = vmatpush1.bf16.msra.mxu0 0
        %2722 = vmatprep.subr.bf16.mxu0 0
        %2723 = vmatpush1.bf16.msra.mxu0 0
        %2724 = vmatprep.subr.bf16.mxu0 0
        %2725 = vmatpush1.bf16.msra.mxu0 0
        %2726 = vmatprep.subr.bf16.mxu0 0
        %2727 = vmatpush1.bf16.msra.mxu0 0
        %2728 = vmatprep.subr.bf16.mxu0 0
        %2729 = vmatpush1.bf16.msra.mxu0 0
        %2730 = vmatprep.subr.bf16.mxu0 0
        %2731 = vmatpush1.bf16.msra.mxu0 0
        %2732 = vmatprep.subr.bf16.mxu0 0
        %2733 = vmatpush1.bf16.msra.mxu0 0
        %2734 = vmatprep.subr.bf16.mxu0 0
        %2735 = vmatpush1.bf16.msra.mxu0 0
        %2736 = vmatprep.subr.bf16.mxu0 0
        %2737 = vmatpush1.bf16.msra.mxu0 0
        %2738 = vmatprep.subr.bf16.mxu0 0
        %2739 = vmatpush1.bf16.msra.mxu0 0
        %2740 = vmatprep.subr.bf16.mxu0 0
        %2741 = vmatpush1.bf16.msra.mxu0 0
        %2742 = vmatprep.mubr.bf16.mxu0 0
        %2743 = vmatmul.mubr.bf16.gmra.mrb[0].mxu0 %v828
        %v2744 = vpop.f32.mrb[0].mxu0
        %v2745 = vadd.f32 %v2708, %v2744
        %v2746 = vpop.f32.mrb[0].mxu0
        %v2747 = vpop.f32.mrb[0].mxu0
        %v2748 = vadd.f32 %v2708, %v2747
        %v2749 = vpop.f32.mrb[0].mxu0
        %2750 = vdwg.mxu0
        %v2751 = vpack.c.bf16 %v2646, %v2646
        %v2752 = vpack.c.bf16 %v2698, %v2695
        %v2754 = vsel %vm879, %v2751, 0
        %v2757 = vsel %vm879, %v2752, 0
        %2759 = vmatprep.subr.bf16.mxu0 0
        %2760 = vmatpush1.bf16.xpose.msra.mxu0 %v2757
        %2761 = vmatprep.subr.bf16.mxu0 0
        %2762 = vmatpush1.bf16.xpose.msra.mxu0 0
        %2763 = vmatprep.subr.bf16.mxu0 0
        %2764 = vmatpush1.bf16.xpose.msra.mxu0 0
        %2765 = vmatprep.subr.bf16.mxu0 0
        %2766 = vmatpush1.bf16.xpose.msra.mxu0 0
        %2767 = vmatprep.subr.bf16.mxu0 0
        %2768 = vmatpush1.bf16.xpose.msra.mxu0 0
        %2769 = vmatprep.subr.bf16.mxu0 0
        %2770 = vmatpush1.bf16.xpose.msra.mxu0 0
        %2771 = vmatprep.subr.bf16.mxu0 0
        %2772 = vmatpush1.bf16.xpose.msra.mxu0 0
        %2773 = vmatprep.subr.bf16.mxu0 0
        %2774 = vmatpush1.bf16.xpose.msra.mxu0 0
        %2775 = vmatprep.subr.bf16.mxu0 0
        %2776 = vmatpush1.bf16.xpose.msra.mxu0 0
        %2777 = vmatprep.subr.bf16.mxu0 0
        %2778 = vmatpush1.bf16.xpose.msra.mxu0 0
        %2779 = vmatprep.subr.bf16.mxu0 0
        %2780 = vmatpush1.bf16.xpose.msra.mxu0 0
        %2781 = vmatprep.subr.bf16.mxu0 0
        %2782 = vmatpush1.bf16.xpose.msra.mxu0 0
        %2783 = vmatprep.subr.bf16.mxu0 0
        %2784 = vmatpush1.bf16.xpose.msra.mxu0 0
        %2785 = vmatprep.subr.bf16.mxu0 0
        %2786 = vmatpush1.bf16.xpose.msra.mxu0 0
        %2787 = vmatprep.subr.bf16.mxu0 0
        %2788 = vmatpush1.bf16.xpose.msra.mxu0 0
        %2789 = vmatprep.subr.bf16.mxu0 0
        %2790 = vmatpush1.bf16.xpose.msra.mxu0 0
        %2791 = vmatprep.mubr.bf16.mxu0 0
        %2792 = vmatmul.mubr.bf16.gmra.mrb[0].mxu0 %v2754
        %v2793 = vpop.f32.mrb[0].mxu0
        %v2794 = vadd.f32 %v877, %v2793
        %v2795 = vpop.f32.mrb[0].mxu0
        %v2796 = vpop.f32.mrb[0].mxu0
        %v2797 = vpop.f32.mrb[0].mxu0
        %2798 = vdwg.mxu0
        %v2799 = vsel %vm926, %v2794, -inf
        %2800 = vmax.xlane.f32.xlu0 %v2799
        %v2801 = vpop.xlane.xlu0 %2800
        %v2802 = vsub.f32 %v2794, %v2801
        %v2803 = vmul.f32 %v2802, 1.442695
        %v2804 = vpow.pop %v2803
        %v2805 = vsel %vm926, %v2804, 0.0
        %2806 = vadd.xlane.f32.xlu0 %v2805
        %v2807 = vpop.xlane.xlu0 %2806
        %v2808 = vrcp.pop %v2807
        %v2809 = vmul.f32 %v2804, %v2808
        %v2810 = vpack.c.bf16 %v2809, %v2809
        %v2811 = vpack.c.bf16 %v2748, %v2745
        %v2813 = vsel %vm926, %v2810, 0
        %2815 = vmatprep.subr.bf16.mxu0 0
        %2816 = vmatpush1.bf16.msra.mxu0 %v2811
        %2817 = vmatprep.subr.bf16.mxu0 0
        %2818 = vmatpush1.bf16.msra.mxu0 0
        %2819 = vmatprep.subr.bf16.mxu0 0
        %2820 = vmatpush1.bf16.msra.mxu0 0
        %2821 = vmatprep.subr.bf16.mxu0 0
        %2822 = vmatpush1.bf16.msra.mxu0 0
        %2823 = vmatprep.subr.bf16.mxu0 0
        %2824 = vmatpush1.bf16.msra.mxu0 0
        %2825 = vmatprep.subr.bf16.mxu0 0
        %2826 = vmatpush1.bf16.msra.mxu0 0
        %2827 = vmatprep.subr.bf16.mxu0 0
        %2828 = vmatpush1.bf16.msra.mxu0 0
        %2829 = vmatprep.subr.bf16.mxu0 0
        %2830 = vmatpush1.bf16.msra.mxu0 0
        %2831 = vmatprep.subr.bf16.mxu0 0
        %2832 = vmatpush1.bf16.msra.mxu0 0
        %2833 = vmatprep.subr.bf16.mxu0 0
        %2834 = vmatpush1.bf16.msra.mxu0 0
        %2835 = vmatprep.subr.bf16.mxu0 0
        %2836 = vmatpush1.bf16.msra.mxu0 0
        %2837 = vmatprep.subr.bf16.mxu0 0
        %2838 = vmatpush1.bf16.msra.mxu0 0
        %2839 = vmatprep.subr.bf16.mxu0 0
        %2840 = vmatpush1.bf16.msra.mxu0 0
        %2841 = vmatprep.subr.bf16.mxu0 0
        %2842 = vmatpush1.bf16.msra.mxu0 0
        %2843 = vmatprep.subr.bf16.mxu0 0
        %2844 = vmatpush1.bf16.msra.mxu0 0
        %2845 = vmatprep.subr.bf16.mxu0 0
        %2846 = vmatpush1.bf16.msra.mxu0 0
        %2847 = vmatprep.mubr.bf16.mxu0 0
        %2848 = vmatmul.mubr.bf16.gmra.mrb[0].mxu0 %v2813
        %v2849 = vpop.f32.mrb[0].mxu0
        %v2850 = vadd.f32 0.0, %v2849
        %v2851 = vpop.f32.mrb[0].mxu0
        %v2852 = vpop.f32.mrb[0].mxu0
        %v2853 = vpop.f32.mrb[0].mxu0
        %2854 = vdwg.mxu0
        %v2855 = vpack.c.bf16 %v2850, %v2850
        %v2856 = vld [vmem:[%s2253 + $0x8] sm:$0xf]
        %v2858 = vsel %vm879, %v2855, 0
        %v2861 = vsel %vm1243, %v2856, 0
        %2863 = vmatprep.subr.bf16.mxu0 0
        %2864 = vmatpush1.bf16.msra.mxu0 %v2861
        %2865 = vmatprep.subr.bf16.mxu0 0
        %2866 = vmatpush1.bf16.msra.mxu0 0
        %2867 = vmatprep.subr.bf16.mxu0 0
        %2868 = vmatpush1.bf16.msra.mxu0 0
        %2869 = vmatprep.subr.bf16.mxu0 0
        %2870 = vmatpush1.bf16.msra.mxu0 0
        %2871 = vmatprep.subr.bf16.mxu0 0
        %2872 = vmatpush1.bf16.msra.mxu0 0
        %2873 = vmatprep.subr.bf16.mxu0 0
        %2874 = vmatpush1.bf16.msra.mxu0 0
        %2875 = vmatprep.subr.bf16.mxu0 0
        %2876 = vmatpush1.bf16.msra.mxu0 0
        %2877 = vmatprep.subr.bf16.mxu0 0
        %2878 = vmatpush1.bf16.msra.mxu0 0
        %2879 = vmatprep.subr.bf16.mxu0 0
        %2880 = vmatpush1.bf16.msra.mxu0 0
        %2881 = vmatprep.subr.bf16.mxu0 0
        %2882 = vmatpush1.bf16.msra.mxu0 0
        %2883 = vmatprep.subr.bf16.mxu0 0
        %2884 = vmatpush1.bf16.msra.mxu0 0
        %2885 = vmatprep.subr.bf16.mxu0 0
        %2886 = vmatpush1.bf16.msra.mxu0 0
        %2887 = vmatprep.subr.bf16.mxu0 0
        %2888 = vmatpush1.bf16.msra.mxu0 0
        %2889 = vmatprep.subr.bf16.mxu0 0
        %2890 = vmatpush1.bf16.msra.mxu0 0
        %2891 = vmatprep.subr.bf16.mxu0 0
        %2892 = vmatpush1.bf16.msra.mxu0 0
        %2893 = vmatprep.subr.bf16.mxu0 0
        %2894 = vmatpush1.bf16.msra.mxu0 0
        %2895 = vmatprep.mubr.bf16.mxu0 0
        %2896 = vmatmul.mubr.bf16.gmra.mrb[0].mxu0 %v2858
        %v2897 = vpop.f32.mrb[0].mxu0
        %v2898 = vadd.f32 0.0, %v2897
        %v2899 = vpop.f32.mrb[0].mxu0
        %v2900 = vpop.f32.mrb[0].mxu0
        %v2901 = vpop.f32.mrb[0].mxu0
        %2902 = vdwg.mxu0
        %v2903 = vadd.f32 %v2597, %v2898
        %2904 = vrot.lane.b32.xlu0 %v1969, 104
        %v2905 = vpop.permute.xlu0 %2904
        %2906 = vrot.lane.b32.xlu0 %v1970, 104
        %v2907 = vpop.permute.xlu0 %2906
        %2910 = vrot.lane.b32.xlu0 %v1959, 104
        %v2911 = vpop.permute.xlu0 %2910
        %2913 = vmatprep.subr.bf16.mxu0 0
        %2914 = vmatpush1.bf16.msra.mxu0 %v2905
        %2915 = vmatprep.subr.bf16.mxu0 0
        %2916 = vmatpush1.bf16.msra.mxu0 %v2907
        %2917 = vmatprep.subr.bf16.mxu0 0
        %2918 = vmatpush1.bf16.msra.mxu0 0
        %2919 = vmatprep.subr.bf16.mxu0 0
        %2920 = vmatpush1.bf16.msra.mxu0 0
        %2921 = vmatprep.subr.bf16.mxu0 0
        %2922 = vmatpush1.bf16.msra.mxu0 0
        %2923 = vmatprep.subr.bf16.mxu0 0
        %2924 = vmatpush1.bf16.msra.mxu0 0
        %2925 = vmatprep.subr.bf16.mxu0 0
        %2926 = vmatpush1.bf16.msra.mxu0 0
        %2927 = vmatprep.subr.bf16.mxu0 0
        %2928 = vmatpush1.bf16.msra.mxu0 0
        %2929 = vmatprep.subr.bf16.mxu0 0
        %2930 = vmatpush1.bf16.msra.mxu0 0
        %2931 = vmatprep.subr.bf16.mxu0 0
        %2932 = vmatpush1.bf16.msra.mxu0 0
        %2933 = vmatprep.subr.bf16.mxu0 0
        %2934 = vmatpush1.bf16.msra.mxu0 0
        %2935 = vmatprep.subr.bf16.mxu0 0
        %2936 = vmatpush1.bf16.msra.mxu0 0
        %2937 = vmatprep.subr.bf16.mxu0 0
        %2938 = vmatpush1.bf16.msra.mxu0 0
        %2939 = vmatprep.subr.bf16.mxu0 0
        %2940 = vmatpush1.bf16.msra.mxu0 0
        %2941 = vmatprep.subr.bf16.mxu0 0
        %2942 = vmatpush1.bf16.msra.mxu0 0
        %2943 = vmatprep.subr.bf16.mxu0 0
        %2944 = vmatpush1.bf16.msra.mxu0 0
        %2945 = vmatprep.mubr.bf16.mxu0 0
        %2946 = vmatmul.mubr.bf16.gmra.mrb[0].mxu0 %v1974
        %v2947 = vpop.f32.mrb[0].mxu0
        %v2948 = vadd.f32 %v2911, %v2947
        %v2949 = vpop.f32.mrb[0].mxu0
        %v2950 = vpop.f32.mrb[0].mxu0
        %v2951 = vpop.f32.mrb[0].mxu0
        %2952 = vdwg.mxu0
        %2953 = vrot.lane.b32.xlu0 %v2037, 104
        %v2954 = vpop.permute.xlu0 %2953
        %2955 = vrot.lane.b32.xlu0 %v2038, 104
        %v2956 = vpop.permute.xlu0 %2955
        %2959 = vrot.lane.b32.xlu0 %v2027, 104
        %v2960 = vpop.permute.xlu0 %2959
        %2962 = vmatprep.subr.bf16.mxu0 0
        %2963 = vmatpush1.bf16.msra.mxu0 %v2954
        %2964 = vmatprep.subr.bf16.mxu0 0
        %2965 = vmatpush1.bf16.msra.mxu0 %v2956
        %2966 = vmatprep.subr.bf16.mxu0 0
        %2967 = vmatpush1.bf16.msra.mxu0 0
        %2968 = vmatprep.subr.bf16.mxu0 0
        %2969 = vmatpush1.bf16.msra.mxu0 0
        %2970 = vmatprep.subr.bf16.mxu0 0
        %2971 = vmatpush1.bf16.msra.mxu0 0
        %2972 = vmatprep.subr.bf16.mxu0 0
        %2973 = vmatpush1.bf16.msra.mxu0 0
        %2974 = vmatprep.subr.bf16.mxu0 0
        %2975 = vmatpush1.bf16.msra.mxu0 0
        %2976 = vmatprep.subr.bf16.mxu0 0
        %2977 = vmatpush1.bf16.msra.mxu0 0
        %2978 = vmatprep.subr.bf16.mxu0 0
        %2979 = vmatpush1.bf16.msra.mxu0 0
        %2980 = vmatprep.subr.bf16.mxu0 0
        %2981 = vmatpush1.bf16.msra.mxu0 0
        %2982 = vmatprep.subr.bf16.mxu0 0
        %2983 = vmatpush1.bf16.msra.mxu0 0
        %2984 = vmatprep.subr.bf16.mxu0 0
        %2985 = vmatpush1.bf16.msra.mxu0 0
        %2986 = vmatprep.subr.bf16.mxu0 0
        %2987 = vmatpush1.bf16.msra.mxu0 0
        %2988 = vmatprep.subr.bf16.mxu0 0
        %2989 = vmatpush1.bf16.msra.mxu0 0
        %2990 = vmatprep.subr.bf16.mxu0 0
        %2991 = vmatpush1.bf16.msra.mxu0 0
        %2992 = vmatprep.subr.bf16.mxu0 0
        %2993 = vmatpush1.bf16.msra.mxu0 0
        %2994 = vmatprep.mubr.bf16.mxu0 0
        %2995 = vmatmul.mubr.bf16.gmra.mrb[0].mxu0 %v761
        %v2996 = vpop.f32.mrb[0].mxu0
        %v2997 = vadd.f32 %v2960, %v2996
        %v2998 = vpop.f32.mrb[0].mxu0
        %v2999 = vpop.f32.mrb[0].mxu0
        %v3000 = vadd.f32 %v2960, %v2999
        %v3001 = vpop.f32.mrb[0].mxu0
        %3002 = vdwg.mxu0
        %3003 = vrot.lane.b32.xlu0 %v2103, 104
        %v3004 = vpop.permute.xlu0 %3003
        %3005 = vrot.lane.b32.xlu0 %v2104, 104
        %v3006 = vpop.permute.xlu0 %3005
        %3009 = vrot.lane.b32.xlu0 %v2093, 104
        %v3010 = vpop.permute.xlu0 %3009
        %3012 = vmatprep.subr.bf16.mxu0 0
        %3013 = vmatpush1.bf16.msra.mxu0 %v3004
        %3014 = vmatprep.subr.bf16.mxu0 0
        %3015 = vmatpush1.bf16.msra.mxu0 %v3006
        %3016 = vmatprep.subr.bf16.mxu0 0
        %3017 = vmatpush1.bf16.msra.mxu0 0
        %3018 = vmatprep.subr.bf16.mxu0 0
        %3019 = vmatpush1.bf16.msra.mxu0 0
        %3020 = vmatprep.subr.bf16.mxu0 0
        %3021 = vmatpush1.bf16.msra.mxu0 0
        %3022 = vmatprep.subr.bf16.mxu0 0
        %3023 = vmatpush1.bf16.msra.mxu0 0
        %3024 = vmatprep.subr.bf16.mxu0 0
        %3025 = vmatpush1.bf16.msra.mxu0 0
        %3026 = vmatprep.subr.bf16.mxu0 0
        %3027 = vmatpush1.bf16.msra.mxu0 0
        %3028 = vmatprep.subr.bf16.mxu0 0
        %3029 = vmatpush1.bf16.msra.mxu0 0
        %3030 = vmatprep.subr.bf16.mxu0 0
        %3031 = vmatpush1.bf16.msra.mxu0 0
        %3032 = vmatprep.subr.bf16.mxu0 0
        %3033 = vmatpush1.bf16.msra.mxu0 0
        %3034 = vmatprep.subr.bf16.mxu0 0
        %3035 = vmatpush1.bf16.msra.mxu0 0
        %3036 = vmatprep.subr.bf16.mxu0 0
        %3037 = vmatpush1.bf16.msra.mxu0 0
        %3038 = vmatprep.subr.bf16.mxu0 0
        %3039 = vmatpush1.bf16.msra.mxu0 0
        %3040 = vmatprep.subr.bf16.mxu0 0
        %3041 = vmatpush1.bf16.msra.mxu0 0
        %3042 = vmatprep.subr.bf16.mxu0 0
        %3043 = vmatpush1.bf16.msra.mxu0 0
        %3044 = vmatprep.mubr.bf16.mxu0 0
        %3045 = vmatmul.mubr.bf16.gmra.mrb[0].mxu0 %v828
        %v3046 = vpop.f32.mrb[0].mxu0
        %v3047 = vadd.f32 %v3010, %v3046
        %v3048 = vpop.f32.mrb[0].mxu0
        %v3049 = vpop.f32.mrb[0].mxu0
        %v3050 = vadd.f32 %v3010, %v3049
        %v3051 = vpop.f32.mrb[0].mxu0
        %3052 = vdwg.mxu0
        %v3053 = vpack.c.bf16 %v2948, %v2948
        %v3054 = vpack.c.bf16 %v3000, %v2997
        %v3056 = vsel %vm879, %v3053, 0
        %v3059 = vsel %vm879, %v3054, 0
        %3061 = vmatprep.subr.bf16.mxu0 0
        %3062 = vmatpush1.bf16.xpose.msra.mxu0 %v3059
        %3063 = vmatprep.subr.bf16.mxu0 0
        %3064 = vmatpush1.bf16.xpose.msra.mxu0 0
        %3065 = vmatprep.subr.bf16.mxu0 0
        %3066 = vmatpush1.bf16.xpose.msra.mxu0 0
        %3067 = vmatprep.subr.bf16.mxu0 0
        %3068 = vmatpush1.bf16.xpose.msra.mxu0 0
        %3069 = vmatprep.subr.bf16.mxu0 0
        %3070 = vmatpush1.bf16.xpose.msra.mxu0 0
        %3071 = vmatprep.subr.bf16.mxu0 0
        %3072 = vmatpush1.bf16.xpose.msra.mxu0 0
        %3073 = vmatprep.subr.bf16.mxu0 0
        %3074 = vmatpush1.bf16.xpose.msra.mxu0 0
        %3075 = vmatprep.subr.bf16.mxu0 0
        %3076 = vmatpush1.bf16.xpose.msra.mxu0 0
        %3077 = vmatprep.subr.bf16.mxu0 0
        %3078 = vmatpush1.bf16.xpose.msra.mxu0 0
        %3079 = vmatprep.subr.bf16.mxu0 0
        %3080 = vmatpush1.bf16.xpose.msra.mxu0 0
        %3081 = vmatprep.subr.bf16.mxu0 0
        %3082 = vmatpush1.bf16.xpose.msra.mxu0 0
        %3083 = vmatprep.subr.bf16.mxu0 0
        %3084 = vmatpush1.bf16.xpose.msra.mxu0 0
        %3085 = vmatprep.subr.bf16.mxu0 0
        %3086 = vmatpush1.bf16.xpose.msra.mxu0 0
        %3087 = vmatprep.subr.bf16.mxu0 0
        %3088 = vmatpush1.bf16.xpose.msra.mxu0 0
        %3089 = vmatprep.subr.bf16.mxu0 0
        %3090 = vmatpush1.bf16.xpose.msra.mxu0 0
        %3091 = vmatprep.subr.bf16.mxu0 0
        %3092 = vmatpush1.bf16.xpose.msra.mxu0 0
        %3093 = vmatprep.mubr.bf16.mxu0 0
        %3094 = vmatmul.mubr.bf16.gmra.mrb[0].mxu0 %v3056
        %v3095 = vpop.f32.mrb[0].mxu0
        %v3096 = vadd.f32 %v877, %v3095
        %v3097 = vpop.f32.mrb[0].mxu0
        %v3098 = vpop.f32.mrb[0].mxu0
        %v3099 = vpop.f32.mrb[0].mxu0
        %3100 = vdwg.mxu0
        %v3101 = vsel %vm926, %v3096, -inf
        %3102 = vmax.xlane.f32.xlu0 %v3101
        %v3103 = vpop.xlane.xlu0 %3102
        %v3104 = vsub.f32 %v3096, %v3103
        %v3105 = vmul.f32 %v3104, 1.442695
        %v3106 = vpow.pop %v3105
        %v3107 = vsel %vm926, %v3106, 0.0
        %3108 = vadd.xlane.f32.xlu0 %v3107
        %v3109 = vpop.xlane.xlu0 %3108
        %v3110 = vrcp.pop %v3109
        %v3111 = vmul.f32 %v3106, %v3110
        %v3112 = vpack.c.bf16 %v3111, %v3111
        %v3113 = vpack.c.bf16 %v3050, %v3047
        %v3115 = vsel %vm926, %v3112, 0
        %3117 = vmatprep.subr.bf16.mxu0 0
        %3118 = vmatpush1.bf16.msra.mxu0 %v3113
        %3119 = vmatprep.subr.bf16.mxu0 0
        %3120 = vmatpush1.bf16.msra.mxu0 0
        %3121 = vmatprep.subr.bf16.mxu0 0
        %3122 = vmatpush1.bf16.msra.mxu0 0
        %3123 = vmatprep.subr.bf16.mxu0 0
        %3124 = vmatpush1.bf16.msra.mxu0 0
        %3125 = vmatprep.subr.bf16.mxu0 0
        %3126 = vmatpush1.bf16.msra.mxu0 0
        %3127 = vmatprep.subr.bf16.mxu0 0
        %3128 = vmatpush1.bf16.msra.mxu0 0
        %3129 = vmatprep.subr.bf16.mxu0 0
        %3130 = vmatpush1.bf16.msra.mxu0 0
        %3131 = vmatprep.subr.bf16.mxu0 0
        %3132 = vmatpush1.bf16.msra.mxu0 0
        %3133 = vmatprep.subr.bf16.mxu0 0
        %3134 = vmatpush1.bf16.msra.mxu0 0
        %3135 = vmatprep.subr.bf16.mxu0 0
        %3136 = vmatpush1.bf16.msra.mxu0 0
        %3137 = vmatprep.subr.bf16.mxu0 0
        %3138 = vmatpush1.bf16.msra.mxu0 0
        %3139 = vmatprep.subr.bf16.mxu0 0
        %3140 = vmatpush1.bf16.msra.mxu0 0
        %3141 = vmatprep.subr.bf16.mxu0 0
        %3142 = vmatpush1.bf16.msra.mxu0 0
        %3143 = vmatprep.subr.bf16.mxu0 0
        %3144 = vmatpush1.bf16.msra.mxu0 0
        %3145 = vmatprep.subr.bf16.mxu0 0
        %3146 = vmatpush1.bf16.msra.mxu0 0
        %3147 = vmatprep.subr.bf16.mxu0 0
        %3148 = vmatpush1.bf16.msra.mxu0 0
        %3149 = vmatprep.mubr.bf16.mxu0 0
        %3150 = vmatmul.mubr.bf16.gmra.mrb[0].mxu0 %v3115
        %v3151 = vpop.f32.mrb[0].mxu0
        %v3152 = vadd.f32 0.0, %v3151
        %v3153 = vpop.f32.mrb[0].mxu0
        %v3154 = vpop.f32.mrb[0].mxu0
        %v3155 = vpop.f32.mrb[0].mxu0
        %3156 = vdwg.mxu0
        %v3157 = vpack.c.bf16 %v3152, %v3152
        %v3158 = vld [vmem:[%s2253 + $0xc] sm:$0xf]
        %v3160 = vsel %vm879, %v3157, 0
        %v3163 = vsel %vm1243, %v3158, 0
        %3165 = vmatprep.subr.bf16.mxu0 0
        %3166 = vmatpush1.bf16.msra.mxu0 %v3163
        %3167 = vmatprep.subr.bf16.mxu0 0
        %3168 = vmatpush1.bf16.msra.mxu0 0
        %3169 = vmatprep.subr.bf16.mxu0 0
        %3170 = vmatpush1.bf16.msra.mxu0 0
        %3171 = vmatprep.subr.bf16.mxu0 0
        %3172 = vmatpush1.bf16.msra.mxu0 0
        %3173 = vmatprep.subr.bf16.mxu0 0
        %3174 = vmatpush1.bf16.msra.mxu0 0
        %3175 = vmatprep.subr.bf16.mxu0 0
        %3176 = vmatpush1.bf16.msra.mxu0 0
        %3177 = vmatprep.subr.bf16.mxu0 0
        %3178 = vmatpush1.bf16.msra.mxu0 0
        %3179 = vmatprep.subr.bf16.mxu0 0
        %3180 = vmatpush1.bf16.msra.mxu0 0
        %3181 = vmatprep.subr.bf16.mxu0 0
        %3182 = vmatpush1.bf16.msra.mxu0 0
        %3183 = vmatprep.subr.bf16.mxu0 0
        %3184 = vmatpush1.bf16.msra.mxu0 0
        %3185 = vmatprep.subr.bf16.mxu0 0
        %3186 = vmatpush1.bf16.msra.mxu0 0
        %3187 = vmatprep.subr.bf16.mxu0 0
        %3188 = vmatpush1.bf16.msra.mxu0 0
        %3189 = vmatprep.subr.bf16.mxu0 0
        %3190 = vmatpush1.bf16.msra.mxu0 0
        %3191 = vmatprep.subr.bf16.mxu0 0
        %3192 = vmatpush1.bf16.msra.mxu0 0
        %3193 = vmatprep.subr.bf16.mxu0 0
        %3194 = vmatpush1.bf16.msra.mxu0 0
        %3195 = vmatprep.subr.bf16.mxu0 0
        %3196 = vmatpush1.bf16.msra.mxu0 0
        %3197 = vmatprep.mubr.bf16.mxu0 0
        %3198 = vmatmul.mubr.bf16.gmra.mrb[0].mxu0 %v3160
        %v3199 = vpop.f32.mrb[0].mxu0
        %v3200 = vadd.f32 0.0, %v3199
        %v3201 = vpop.f32.mrb[0].mxu0
        %v3202 = vpop.f32.mrb[0].mxu0
        %v3203 = vpop.f32.mrb[0].mxu0
        %3204 = vdwg.mxu0
        %v3205 = vadd.f32 %v2903, %v3200
        %s3206 = scalar_lea.vmem %s12, 1
        %v3207 = vld [vmem:[%s3206] sm:$0x1]
        %v3209 = vlaneseq
        %v3210 = vshrl.u32 %v3209, 7
        %v3211 = vsub.s32 0, %v3210
        %v3212 = vrot.slane %v3207, %v3211
        %v3214 = vadd.f32 %v3205, %v3212
        %s3215 = scalar_lea.vmem %s652, 8 [#allocation17]
        %3216 = vst.msk [vmem:[%s3215] sm:$0xff] %vm693, %v3214
        %s3217 = sand.u32 %s344, 1
        %s3218 = scalar_lea.sflag [#allocation4], %s3217
        %s3219 = sand.u32 %s344, 1
        %s3220 = smul.addr %s3219, 16
        %s3221 = scalar_lea.vmem [#allocation17], %s3220
        // Predicated region
        $region109: #{tpu_custom_call.1} parent=71 // pred_check
          %p3222 = pneg %p354
        $region110: #{tpu_custom_call.1} parent=71 // pred_check_branch
          %3224 = sbr.rel (%p3222) target = $region112
        $region111: #{tpu_custom_call.1} parent=71 // pred_region
          %s3226 = ssub.s32 256, 256
          %3227 = vsyncadd %s3218, %s3226
          %s3228 = smul.addr %s38, 2
          %s3229 = smul.addr %s3228, 128
          %s3230 = scalar_lea.hbm %s13, %s3229
          %s3231 = sshll.u32 %s3221, 4
          %s3232 = int_to_ptr.vmem [resolvable:$true] %s3231
          %3237 = dma.vmem_to_hbm [thread:$0]  %s3232, 256, %s3230, %s3218, 128, 128, 8
        $region112: #{tpu_custom_call.1} parent=71 // pred_fallthru
          _
      $region72: #{tpu_custom_call.1} parent=5 // pred_fallthru
        _
      %p3238 = scmp.le.s32.totalorder 2, %s33
      // Predicated region
      $region113: #{tpu_custom_call.1} parent=5 // pred_check
        %p3239 = pneg %p3238
      $region114: #{tpu_custom_call.1} parent=5 // pred_check_branch
        %3241 = sbr.rel (%p3239) target = $region116
      $region115: #{tpu_custom_call.1} parent=5 // pred_region
        %s3242 = ssub.s32 %s33, 2
        // Predicated region
        $region117: #{tpu_custom_call.1} parent=115 // pred_check
          %p3243 = pneg %p360
        $region118: #{tpu_custom_call.1} parent=115 // pred_check_branch
          %3245 = sbr.rel (%p3243) target = $region120
        $region119: #{tpu_custom_call.1} parent=115 // pred_region
          %s3246 = sand.u32 %s345, 1
          %s3247 = scalar_lea.sflag [#allocation4], %s3246
          %s3248 = sand.u32 %s345, 1
          %s3249 = smul.addr %s3248, 16
          %s3250 = scalar_lea.vmem [#allocation17], %s3249
          %3251 = dma.done %s3247, 256
        $region120: #{tpu_custom_call.1} parent=115 // pred_fallthru
          _
      $region116: #{tpu_custom_call.1} parent=5 // pred_fallthru
        _
    $region6: #{tpu_custom_call.1} parent=1 // loop_footer
      %s37 = sadd.s32 1, %s33
    $region7: #{tpu_custom_call.1} parent=1 // loop_footer_branch
      %32 = sbr.rel target = $region3
    $region8: #{tpu_custom_call.1} parent=1 // loop_exit
      _
    %3252 = vsyncpa [#allocation3], 1
    %s3253 = scalar_lea.sflag [#allocation3], 1
    %3254 = vsyncpa %s3253, 1
    %3255 = vsyncpa [#allocation6], 1
    %s3256 = scalar_lea.sflag [#allocation6], 1
    %3257 = vsyncpa %s3256, 1
    %3258 = vsyncpa [#allocation9], 1
    %s3259 = scalar_lea.sflag [#allocation9], 1
    %3260 = vsyncpa %s3259, 1
    %3261 = vsyncpa [#allocation12], 1
    %3262 = vsyncpa [#allocation15], 1
    %3263 = vsyncpa [#allocation4], 1
    %s3264 = scalar_lea.sflag [#allocation4], 1
    %3265 = vsyncpa %s3264, 1

</llo_original>
